<compile_context>
chip_gen: v7x
topology: tpu7x:2x2x1
jax: 0.10.0
libtpu: 0.0.40
codegen_flags: <defaults>
</compile_context>

<pallas_src>
import functools

import jax
import jax.numpy as jnp
from jax import lax
from jax.experimental import pallas as pl
from jax.experimental.pallas import tpu as pltpu


# ---------------------------------------------------------------------------
# Generation-aware sizing helpers
# ---------------------------------------------------------------------------
@functools.lru_cache(maxsize=None)
def _chip_vmem_bytes():
    """Physical VMEM of the local chip (fallback: 64 MiB == v7x, conservative)."""
    try:
        return int(pltpu.get_tpu_info().vmem_capacity_bytes)
    except Exception:
        return 64 * 1024 * 1024


def _compiler_params():
    # v5e/v6e (128 MiB VMEM) -> 96 MiB scoped limit; v7x (64 MiB) -> 48 MiB.
    limit = min(_chip_vmem_bytes() * 3 // 4, 96 * 1024 * 1024)
    return pltpu.CompilerParams(
        dimension_semantics=("parallel",),     # batch-block axis -> 2 TCs on v7x
        vmem_limit_bytes=int(limit))


def _pick_batch_block(n):
    """Batch block: keep the grid at >= 4 (ideally) / >= 2 steps so the
    'parallel' axis can feed both v7x TensorCores and pipelining overlaps."""
    max_b = 8 if _chip_vmem_bytes() >= (100 << 20) else 4
    for min_steps in (4, 2, 1):
        cands = [b for b in range(1, min(n, max_b) + 1)
                 if n % b == 0 and n // b >= min_steps]
        if cands:
            return max(cands)
    return 1


# ---------------------------------------------------------------------------
# Shared in-kernel math
# ---------------------------------------------------------------------------
def _relu_matmul(x2d, w_ref, b_ref):
    acc = jnp.dot(x2d, w_ref[...], preferred_element_type=jnp.float32)
    return jnp.maximum(acc + b_ref[...], 0.0)


def _conv7_math(x, w_flat, bias, mode):
    """7-tap conv + bias + ReLU as ONE matmul.

    Builds (M, 7*Cin) by concatenating the 7 shifted tap windows along lanes
    and multiplies by the flattened (7*Cin, Cout) weight (f32 accumulation).
    mode 'h': taps slide along axis 1 (7x1 conv); 'w': along axis 2 (1x7).
    Zero padding is applied in-register (matches PyTorch padding=3).
    """
    B, H, W, Cin = x.shape
    K = 7
    pad = 3
    if mode == "h":
        z = jnp.zeros((B, pad, W, Cin), x.dtype)
        xp = jnp.concatenate([z, x, z], axis=1)            # (B, H+6, W, Cin)
        taps = [xp[:, k:k + H] for k in range(K)]          # cheap: non-minor axis
    else:
        z = jnp.zeros((B, H, pad, Cin), x.dtype)
        xp = jnp.concatenate([z, x, z], axis=2)            # (B, H, W+6, Cin)
        taps = [xp[:, :, k:k + W] for k in range(K)]       # sublane-offset windows
    xcat = jnp.concatenate(taps, axis=-1).reshape(B * H * W, K * Cin)
    acc = jnp.dot(xcat, w_flat, preferred_element_type=jnp.float32)
    return jnp.maximum(acc + bias, 0.0)


# ---------------------------------------------------------------------------
# Pallas kernels
# ---------------------------------------------------------------------------
def _stems_pool_kernel(x_ref, w1_ref, w2_ref, w3_ref, wp_ref,
                       b1_ref, b2_ref, b3_ref, bp_ref,
                       o1_ref, o2_ref, o3_ref, op_ref):
    """Fused: branch1x1, branch7x7_1, branch7x7dbl_1 (1x1 conv+BN+ReLU) and the
    3x3/s1/p1 avg-pool (count_include_pad -> /9) + branch_pool 1x1 conv+BN+ReLU.

    The block input is read from HBM once; four separate matmuls share the
    resident LHS so every output store is a full, unsliced block."""
    B, H, W, Cin = x_ref.shape
    M = B * H * W
    x = x_ref[...]                                         # bf16
    xf = x.reshape(M, Cin)

    o1_ref[...] = _relu_matmul(xf, w1_ref, b1_ref).reshape(o1_ref.shape).astype(o1_ref.dtype)
    o2_ref[...] = _relu_matmul(xf, w2_ref, b2_ref).reshape(o2_ref.shape).astype(o2_ref.dtype)
    o3_ref[...] = _relu_matmul(xf, w3_ref, b3_ref).reshape(o3_ref.shape).astype(o3_ref.dtype)

    # Separable 3x3 average pool: 3 row-shifted sums then 3 column-shifted sums.
    xf32 = x.astype(jnp.float32)
    zr = jnp.zeros((B, 1, W, Cin), jnp.float32)
    xh = jnp.concatenate([zr, xf32, zr], axis=1)           # (B, H+2, W, Cin)
    v = xh[:, 0:H] + xh[:, 1:H + 1] + xh[:, 2:H + 2]
    zc = jnp.zeros((B, H, 1, Cin), jnp.float32)
    vw = jnp.concatenate([zc, v, zc], axis=2)              # (B, H, W+2, Cin)
    s = vw[:, :, 0:W] + vw[:, :, 1:W + 1] + vw[:, :, 2:W + 2]
    pooled = (s * (1.0 / 9.0)).astype(jnp.bfloat16).reshape(M, Cin)
    op_ref[...] = _relu_matmul(pooled, wp_ref, bp_ref).reshape(op_ref.shape).astype(op_ref.dtype)


def _conv7_kernel(x_ref, w_ref, b_ref, o_ref, *, mode):
    """Intermediate fused 1x7 / 7x1 conv + BN + ReLU (single K=7*Cin matmul)."""
    y = _conv7_math(x_ref[...], w_ref[...], b_ref[...], mode)
    o_ref[...] = y.reshape(o_ref.shape).astype(o_ref.dtype)


def _tail_kernel(a7_ref, ad_ref, b1_ref, bp_ref,
                 w7_ref, wd_ref, bias7_ref, biasd_ref, o_ref):
    """Terminal kernel: branch7x7_3 (7x1) and branch7x7dbl_5 (1x7) plus the
    channel concat of all four branches, written as one lane-dense 768-wide
    f32 block (no XLA-side concatenate over the full output)."""
    B, H, W, _ = a7_ref.shape
    M = B * H * W
    y7 = _conv7_math(a7_ref[...], w7_ref[...], bias7_ref[...], "h")   # (M, 192)
    yd = _conv7_math(ad_ref[...], wd_ref[...], biasd_ref[...], "w")   # (M, 192)
    b1 = b1_ref[...].astype(jnp.float32).reshape(M, b1_ref.shape[-1])
    bp = bp_ref[...].astype(jnp.float32).reshape(M, bp_ref.shape[-1])
    ycat = jnp.concatenate([b1, y7, yd, bp], axis=-1)                 # (M, 768)
    o_ref[...] = ycat.reshape(o_ref.shape)


# ---------------------------------------------------------------------------
# Wrappers (weight folding, BlockSpecs, pallas_call plumbing)
# ---------------------------------------------------------------------------
def _prep_conv(p, kh, kw):
    """Fold BN scale into conv weights; flatten taps to one (k*Cin, Cout) bf16
    matrix (tap-major, matching the in-kernel lane concat order) + f32 bias."""
    w, scale, shift = p["w"], p["scale"], p["shift"]
    cout, cin = w.shape[0], w.shape[1]
    w_eff = w * scale[:, None, None, None]                       # (Cout,Cin,kh,kw)
    w_flat = jnp.transpose(w_eff, (2, 3, 1, 0)).reshape(kh * kw * cin, cout)
    return w_flat.astype(jnp.bfloat16), shift.reshape(1, cout).astype(jnp.float32)


def fused_stems_pool(x, p_1x1, p_7x7_1, p_dbl_1, p_pool):
    """One kernel for all four consumers of the block input (x read once)."""
    N, H, W, Cin = x.shape
    B = _pick_batch_block(N)
    w1, b1 = _prep_conv(p_1x1, 1, 1)
    w2, b2 = _prep_conv(p_7x7_1, 1, 1)
    w3, b3 = _prep_conv(p_dbl_1, 1, 1)
    wp, bp = _prep_conv(p_pool, 1, 1)
    c1, c2, c3, cp = w1.shape[-1], w2.shape[-1], w3.shape[-1], wp.shape[-1]

    def full2d(a):
        return pl.BlockSpec(a.shape, lambda n: (0, 0))

    return pl.pallas_call(
        _stems_pool_kernel,
        grid=(N // B,),
        out_shape=(
            jax.ShapeDtypeStruct((N, H, W, c1), jnp.bfloat16),    # branch1x1
            jax.ShapeDtypeStruct((N, H, W, c2), jnp.bfloat16),    # 7x7 stem
            jax.ShapeDtypeStruct((N, H, W, c3), jnp.bfloat16),    # 7x7dbl stem
            jax.ShapeDtypeStruct((N, H, W, cp), jnp.bfloat16),    # branch_pool
        ),
        in_specs=[
            pl.BlockSpec((B, H, W, Cin), lambda n: (n, 0, 0, 0)),
            full2d(w1), full2d(w2), full2d(w3), full2d(wp),
            full2d(b1), full2d(b2), full2d(b3), full2d(bp),
        ],
        out_specs=(
            pl.BlockSpec((B, H, W, c1), lambda n: (n, 0, 0, 0)),
            pl.BlockSpec((B, H, W, c2), lambda n: (n, 0, 0, 0)),
            pl.BlockSpec((B, H, W, c3), lambda n: (n, 0, 0, 0)),
            pl.BlockSpec((B, H, W, cp), lambda n: (n, 0, 0, 0)),
        ),
        compiler_params=_compiler_params(),
    )(x, w1, w2, w3, wp, b1, b2, b3, bp)


def conv7_bn_relu(x, p, kh, kw):
    """Intermediate fused 1x7 or 7x1 conv + BN + ReLU (kh, kw are static ints)."""
    N, H, W, Cin = x.shape
    B = _pick_batch_block(N)
    w_flat, bias = _prep_conv(p, kh, kw)                         # (7*Cin, Cout)
    Cout = w_flat.shape[-1]
    mode = "h" if kh > 1 else "w"
    kern = functools.partial(_conv7_kernel, mode=mode)
    return pl.pallas_call(
        kern,
        grid=(N // B,),
        out_shape=jax.ShapeDtypeStruct((N, H, W, Cout), jnp.bfloat16),
        in_specs=[
            pl.BlockSpec((B, H, W, Cin), lambda n: (n, 0, 0, 0)),
            pl.BlockSpec(w_flat.shape, lambda n: (0, 0)),
            pl.BlockSpec(bias.shape, lambda n: (0, 0)),
        ],
        out_specs=pl.BlockSpec((B, H, W, Cout), lambda n: (n, 0, 0, 0)),
        compiler_params=_compiler_params(),
    )(x, w_flat, bias)


def fused_tail(a7, ad, b1, bp, p_7x7_3, p_dbl_5):
    """Last conv of each 7x7 branch + 4-way channel concat, one pallas_call."""
    N, H, W, c7 = a7.shape
    B = _pick_batch_block(N)
    w7, bias7 = _prep_conv(p_7x7_3, 7, 1)
    wd, biasd = _prep_conv(p_dbl_5, 1, 7)
    c_out = b1.shape[-1] + w7.shape[-1] + wd.shape[-1] + bp.shape[-1]
    return pl.pallas_call(
        _tail_kernel,
        grid=(N // B,),
        out_shape=jax.ShapeDtypeStruct((N, H, W, c_out), jnp.float32),
        in_specs=[
            pl.BlockSpec((B, H, W, c7), lambda n: (n, 0, 0, 0)),
            pl.BlockSpec((B, H, W, ad.shape[-1]), lambda n: (n, 0, 0, 0)),
            pl.BlockSpec((B, H, W, b1.shape[-1]), lambda n: (n, 0, 0, 0)),
            pl.BlockSpec((B, H, W, bp.shape[-1]), lambda n: (n, 0, 0, 0)),
            pl.BlockSpec(w7.shape, lambda n: (0, 0)),
            pl.BlockSpec(wd.shape, lambda n: (0, 0)),
            pl.BlockSpec(bias7.shape, lambda n: (0, 0)),
            pl.BlockSpec(biasd.shape, lambda n: (0, 0)),
        ],
        out_specs=pl.BlockSpec((B, H, W, c_out), lambda n: (n, 0, 0, 0)),
        compiler_params=_compiler_params(),
    )(a7, ad, b1, bp, w7, wd, bias7, biasd)


# ---------------------------------------------------------------------------
# InceptionC module
# ---------------------------------------------------------------------------
def init_basic_conv(key, cin, cout, kh, kw, eps=1e-3):
    k1, k2, k3, k4, k5 = jax.random.split(key, 5)
    w = jax.random.normal(k1, (cout, cin, kh, kw), jnp.float32) * 0.1
    gamma = jax.random.uniform(k2, (cout,), jnp.float32, 0.5, 1.5)
    beta = jax.random.normal(k3, (cout,), jnp.float32) * 0.1
    mean = jax.random.normal(k4, (cout,), jnp.float32) * 0.1
    var = jax.random.uniform(k5, (cout,), jnp.float32, 0.5, 1.5)
    scale = gamma / jnp.sqrt(var + eps)
    shift = beta - mean * scale
    # Kernel sizes are NOT stored here (they must stay static under jit).
    return dict(w=w, scale=scale, shift=shift)


# Static layer table: (name, cin, cout, kh, kw) — kernel sizes are Python ints.
def _layer_table(in_channels, c7):
    return [
        ("branch1x1",      in_channels, 192, 1, 1),
        ("branch7x7_1",    in_channels, c7,  1, 1),
        ("branch7x7_2",    c7,          c7,  1, 7),
        ("branch7x7_3",    c7,          192, 7, 1),
        ("branch7x7dbl_1", in_channels, c7,  1, 1),
        ("branch7x7dbl_2", c7,          c7,  7, 1),
        ("branch7x7dbl_3", c7,          c7,  1, 7),
        ("branch7x7dbl_4", c7,          c7,  7, 1),
        ("branch7x7dbl_5", c7,          192, 1, 7),
        ("branch_pool",    in_channels, 192, 1, 1),
    ]


def init_inception_c(key, in_channels, channels_7x7):
    table = _layer_table(in_channels, channels_7x7)
    keys = jax.random.split(key, len(table))
    return {name: init_basic_conv(k, ci, co, kh, kw)
            for k, (name, ci, co, kh, kw) in zip(keys, table)}


def inception_c_forward(x_nchw, params):
    # NCHW -> NHWC and cast to bf16 once (halves HBM traffic of all readers).
    x = jnp.transpose(x_nchw, (0, 2, 3, 1)).astype(jnp.bfloat16)

    # Fused stems + branch_pool: the 768-wide input is read from HBM once.
    b1, s7, sd, bp = fused_stems_pool(
        x, params["branch1x1"], params["branch7x7_1"],
        params["branch7x7dbl_1"], params["branch_pool"])

    # Intermediate 7-tap convs (each a single K=7*Cin matmul).
    a7 = conv7_bn_relu(s7, params["branch7x7_2"], 1, 7)
    ad = conv7_bn_relu(sd, params["branch7x7dbl_2"], 7, 1)
    ad = conv7_bn_relu(ad, params["branch7x7dbl_3"], 1, 7)
    ad = conv7_bn_relu(ad, params["branch7x7dbl_4"], 7, 1)

    # Terminal kernel: branch7x7_3 + branch7x7dbl_5 + 4-way channel concat.
    slab = fused_tail(a7, ad, b1, bp,
                      params["branch7x7_3"], params["branch7x7dbl_5"])
    return jnp.transpose(slab, (0, 3, 1, 2))           # NHWC -> NCHW


# ---------------------------------------------------------------------------
# Pure-JAX reference (mirrors the kernel's bf16-operand / f32-accum policy)
# ---------------------------------------------------------------------------
def _ref_conv(x_bf, p, kh, kw, out_bf16):
    w, scale, shift = p["w"], p["scale"], p["shift"]
    w_eff = (w * scale[:, None, None, None]).astype(jnp.bfloat16)
    w_hwio = jnp.transpose(w_eff, (2, 3, 1, 0))
    y = lax.conv_general_dilated(
        x_bf, w_hwio, window_strides=(1, 1),
        padding=[((kh - 1) // 2,) * 2, ((kw - 1) // 2,) * 2],
        dimension_numbers=("NHWC", "HWIO", "NHWC"),
        preferred_element_type=jnp.float32)
    y = jnp.maximum(y + shift.astype(jnp.float32), 0.0)
    return y.astype(jnp.bfloat16) if out_bf16 else y


def _ref_pool(x_bf):
    s = lax.reduce_window(x_bf.astype(jnp.float32), 0.0, lax.add,
                          (1, 3, 3, 1), (1, 1, 1, 1),
                          [(0, 0), (1, 1), (1, 1), (0, 0)])
    return (s / 9.0).astype(jnp.bfloat16)


def inception_c_reference(x_nchw, params):
    x = jnp.transpose(x_nchw, (0, 2, 3, 1)).astype(jnp.bfloat16)
    b1 = _ref_conv(x, params["branch1x1"], 1, 1, True).astype(jnp.float32)
    b7 = _ref_conv(x, params["branch7x7_1"], 1, 1, True)
    b7 = _ref_conv(b7, params["branch7x7_2"], 1, 7, True)
    b7 = _ref_conv(b7, params["branch7x7_3"], 7, 1, False)
    bd = _ref_conv(x, params["branch7x7dbl_1"], 1, 1, True)
    bd = _ref_conv(bd, params["branch7x7dbl_2"], 7, 1, True)
    bd = _ref_conv(bd, params["branch7x7dbl_3"], 1, 7, True)
    bd = _ref_conv(bd, params["branch7x7dbl_4"], 7, 1, True)
    bd = _ref_conv(bd, params["branch7x7dbl_5"], 1, 7, False)
    bp = _ref_conv(_ref_pool(x), params["branch_pool"], 1, 1, True).astype(jnp.float32)
    out = jnp.concatenate([b1, b7, bd, bp], axis=-1)
    return jnp.transpose(out, (0, 3, 1, 2))


# ---------------------------------------------------------------------------
if __name__ == "__main__":
    key = jax.random.PRNGKey(0)
    k_x, k_p = jax.random.split(key)

    N, Cin, H, W = 2, 32, 8, 8          # small NCHW input
    channels_7x7 = 16

    x = jax.random.normal(k_x, (N, Cin, H, W), jnp.float32)
    params = init_inception_c(k_p, Cin, channels_7x7)

    out = jax.block_until_ready(jax.jit(inception_c_forward)(x, params))

    assert out.shape == (N, 192 * 4, H, W), out.shape
    assert out.dtype == jnp.float32

    ref = jax.block_until_ready(jax.jit(inception_c_reference)(x, params))
    max_err = float(jnp.max(jnp.abs(out - ref)))
    assert jnp.allclose(out, ref, atol=1e-2, rtol=1e-2), max_err

    print("KERNEL_OK")
</pallas_src>

<mosaic_0001>
module attributes {stable_mosaic.version = 11 : i64} {
  func.func @_stems_pool_kernel(%arg0: i32, %arg1: memref<1x8x8x32xbf16, #tpu.memory_space<vmem>>, %arg2: memref<32x192xbf16, #tpu.memory_space<vmem>>, %arg3: memref<32x16xbf16, #tpu.memory_space<vmem>>, %arg4: memref<32x16xbf16, #tpu.memory_space<vmem>>, %arg5: memref<32x192xbf16, #tpu.memory_space<vmem>>, %arg6: memref<1x192xf32, #tpu.memory_space<vmem>>, %arg7: memref<1x16xf32, #tpu.memory_space<vmem>>, %arg8: memref<1x16xf32, #tpu.memory_space<vmem>>, %arg9: memref<1x192xf32, #tpu.memory_space<vmem>>, %arg10: memref<1x8x8x192xbf16, #tpu.memory_space<vmem>>, %arg11: memref<1x8x8x16xbf16, #tpu.memory_space<vmem>>, %arg12: memref<1x8x8x16xbf16, #tpu.memory_space<vmem>>, %arg13: memref<1x8x8x192xbf16, #tpu.memory_space<vmem>>) attributes {dimension_semantics = [#tpu.dimension_semantics<parallel>], iteration_bounds = array<i64: 2>, scalar_prefetch = 0 : i64, scratch_operands = 0 : i64, tpu.core_type = #tpu.core_type<tc>, window_params = [{transform_indices = @transform_0, window_bounds = array<i64: 1, 8, 8, 32>}, {pipeline_mode = #tpu.pipeline_mode<synchronous>, transform_indices = @transform_1, window_bounds = array<i64: 32, 192>}, {pipeline_mode = #tpu.pipeline_mode<synchronous>, transform_indices = @transform_2, window_bounds = array<i64: 32, 16>}, {pipeline_mode = #tpu.pipeline_mode<synchronous>, transform_indices = @transform_3, window_bounds = array<i64: 32, 16>}, {pipeline_mode = #tpu.pipeline_mode<synchronous>, transform_indices = @transform_4, window_bounds = array<i64: 32, 192>}, {pipeline_mode = #tpu.pipeline_mode<synchronous>, transform_indices = @transform_5, window_bounds = array<i64: 1, 192>}, {pipeline_mode = #tpu.pipeline_mode<synchronous>, transform_indices = @transform_6, window_bounds = array<i64: 1, 16>}, {pipeline_mode = #tpu.pipeline_mode<synchronous>, transform_indices = @transform_7, window_bounds = array<i64: 1, 16>}, {pipeline_mode = #tpu.pipeline_mode<synchronous>, transform_indices = @transform_8, window_bounds = array<i64: 1, 192>}, {transform_indices = @transform_9, window_bounds = array<i64: 1, 8, 8, 192>}, {transform_indices = @transform_10, window_bounds = array<i64: 1, 8, 8, 16>}, {transform_indices = @transform_11, window_bounds = array<i64: 1, 8, 8, 16>}, {transform_indices = @transform_12, window_bounds = array<i64: 1, 8, 8, 192>}]} {
    %c0 = arith.constant 0 : index
    %c0_0 = arith.constant 0 : index
    %c0_1 = arith.constant 0 : index
    %c0_2 = arith.constant 0 : index
    %0 = vector.load %arg1[%c0, %c0_0, %c0_1, %c0_2] : memref<1x8x8x32xbf16, #tpu.memory_space<vmem>>, vector<1x8x8x32xbf16>
    %1 = vector.shape_cast %0 : vector<1x8x8x32xbf16> to vector<64x32xbf16>
    %c0_3 = arith.constant 0 : index
    %c0_4 = arith.constant 0 : index
    %2 = vector.load %arg2[%c0_3, %c0_4] : memref<32x192xbf16, #tpu.memory_space<vmem>>, vector<32x192xbf16>
    %cst = arith.constant dense<0.000000e+00> : vector<64x192xf32>
    %3 = tpu.matmul %1, %2, %cst {dimension_numbers = #tpu.dot_dimension_numbers<[1], [0], [0], [1], [0, 0, 1, 1], [], []>} : vector<64x32xbf16>, vector<32x192xbf16>, vector<64x192xf32> -> vector<64x192xf32>
    %c0_5 = arith.constant 0 : index
    %c0_6 = arith.constant 0 : index
    %4 = vector.load %arg6[%c0_5, %c0_6] : memref<1x192xf32, #tpu.memory_space<vmem>>, vector<1x192xf32>
    %5 = vector.broadcast %4 : vector<1x192xf32> to vector<64x192xf32>
    %6 = arith.addf %3, %5 : vector<64x192xf32>
    %cst_7 = arith.constant 0.000000e+00 : f32
    %7 = vector.broadcast %cst_7 : f32 to vector<64x192xf32>
    %8 = arith.maximumf %6, %7 : vector<64x192xf32>
    %9 = vector.shape_cast %8 : vector<64x192xf32> to vector<1x8x8x192xf32>
    %10 = arith.truncf %9 : vector<1x8x8x192xf32> to vector<1x8x8x192xbf16>
    %c0_8 = arith.constant 0 : index
    %c0_9 = arith.constant 0 : index
    %c0_10 = arith.constant 0 : index
    %c0_11 = arith.constant 0 : index
    %11 = vector.load %arg10[%c0_8, %c0_9, %c0_10, %c0_11] : memref<1x8x8x192xbf16, #tpu.memory_space<vmem>>, vector<1x8x8x192xbf16>
    tpu.vector_store %arg10[%c0_8, %c0_9, %c0_10, %c0_11], %10 {strides = array<i32>} : memref<1x8x8x192xbf16, #tpu.memory_space<vmem>>, vector<1x8x8x192xbf16>,
    %c0_12 = arith.constant 0 : index
    %c0_13 = arith.constant 0 : index
    %12 = vector.load %arg3[%c0_12, %c0_13] : memref<32x16xbf16, #tpu.memory_space<vmem>>, vector<32x16xbf16>
    %cst_14 = arith.constant dense<0.000000e+00> : vector<64x16xf32>
    %13 = tpu.matmul %1, %12, %cst_14 {dimension_numbers = #tpu.dot_dimension_numbers<[1], [0], [0], [1], [0, 0, 1, 1], [], []>} : vector<64x32xbf16>, vector<32x16xbf16>, vector<64x16xf32> -> vector<64x16xf32>
    %c0_15 = arith.constant 0 : index
    %c0_16 = arith.constant 0 : index
    %14 = vector.load %arg7[%c0_15, %c0_16] : memref<1x16xf32, #tpu.memory_space<vmem>>, vector<1x16xf32>
    %15 = vector.broadcast %14 : vector<1x16xf32> to vector<64x16xf32>
    %16 = arith.addf %13, %15 : vector<64x16xf32>
    %cst_17 = arith.constant 0.000000e+00 : f32
    %17 = vector.broadcast %cst_17 : f32 to vector<64x16xf32>
    %18 = arith.maximumf %16, %17 : vector<64x16xf32>
    %19 = vector.shape_cast %18 : vector<64x16xf32> to vector<1x8x8x16xf32>
    %20 = arith.truncf %19 : vector<1x8x8x16xf32> to vector<1x8x8x16xbf16>
    %c0_18 = arith.constant 0 : index
    %c0_19 = arith.constant 0 : index
    %c0_20 = arith.constant 0 : index
    %c0_21 = arith.constant 0 : index
    %21 = vector.load %arg11[%c0_18, %c0_19, %c0_20, %c0_21] : memref<1x8x8x16xbf16, #tpu.memory_space<vmem>>, vector<1x8x8x16xbf16>
    tpu.vector_store %arg11[%c0_18, %c0_19, %c0_20, %c0_21], %20 {strides = array<i32>} : memref<1x8x8x16xbf16, #tpu.memory_space<vmem>>, vector<1x8x8x16xbf16>,
    %c0_22 = arith.constant 0 : index
    %c0_23 = arith.constant 0 : index
    %22 = vector.load %arg4[%c0_22, %c0_23] : memref<32x16xbf16, #tpu.memory_space<vmem>>, vector<32x16xbf16>
    %cst_24 = arith.constant dense<0.000000e+00> : vector<64x16xf32>
    %23 = tpu.matmul %1, %22, %cst_24 {dimension_numbers = #tpu.dot_dimension_numbers<[1], [0], [0], [1], [0, 0, 1, 1], [], []>} : vector<64x32xbf16>, vector<32x16xbf16>, vector<64x16xf32> -> vector<64x16xf32>
    %c0_25 = arith.constant 0 : index
    %c0_26 = arith.constant 0 : index
    %24 = vector.load %arg8[%c0_25, %c0_26] : memref<1x16xf32, #tpu.memory_space<vmem>>, vector<1x16xf32>
    %25 = vector.broadcast %24 : vector<1x16xf32> to vector<64x16xf32>
    %26 = arith.addf %23, %25 : vector<64x16xf32>
    %cst_27 = arith.constant 0.000000e+00 : f32
    %27 = vector.broadcast %cst_27 : f32 to vector<64x16xf32>
    %28 = arith.maximumf %26, %27 : vector<64x16xf32>
    %29 = vector.shape_cast %28 : vector<64x16xf32> to vector<1x8x8x16xf32>
    %30 = arith.truncf %29 : vector<1x8x8x16xf32> to vector<1x8x8x16xbf16>
    %c0_28 = arith.constant 0 : index
    %c0_29 = arith.constant 0 : index
    %c0_30 = arith.constant 0 : index
    %c0_31 = arith.constant 0 : index
    %31 = vector.load %arg12[%c0_28, %c0_29, %c0_30, %c0_31] : memref<1x8x8x16xbf16, #tpu.memory_space<vmem>>, vector<1x8x8x16xbf16>
    tpu.vector_store %arg12[%c0_28, %c0_29, %c0_30, %c0_31], %30 {strides = array<i32>} : memref<1x8x8x16xbf16, #tpu.memory_space<vmem>>, vector<1x8x8x16xbf16>,
    %32 = arith.extf %0 : vector<1x8x8x32xbf16> to vector<1x8x8x32xf32>
    %cst_32 = arith.constant 0.000000e+00 : f32
    %33 = vector.broadcast %cst_32 : f32 to vector<1x1x8x32xf32>
    %34 = tpu.concatenate %33, %32, %33 in 1 : vector<1x1x8x32xf32>, vector<1x8x8x32xf32>, vector<1x1x8x32xf32> -> vector<1x10x8x32xf32>
    %35 = vector.extract_strided_slice %34 {offsets = [0, 0, 0, 0], sizes = [1, 8, 8, 32], strides = [1, 1, 1, 1]} : vector<1x10x8x32xf32> to vector<1x8x8x32xf32>
    %36 = vector.extract_strided_slice %34 {offsets = [0, 1, 0, 0], sizes = [1, 8, 8, 32], strides = [1, 1, 1, 1]} : vector<1x10x8x32xf32> to vector<1x8x8x32xf32>
    %37 = arith.addf %35, %36 : vector<1x8x8x32xf32>
    %38 = vector.extract_strided_slice %34 {offsets = [0, 2, 0, 0], sizes = [1, 8, 8, 32], strides = [1, 1, 1, 1]} : vector<1x10x8x32xf32> to vector<1x8x8x32xf32>
    %39 = arith.addf %37, %38 : vector<1x8x8x32xf32>
    %cst_33 = arith.constant 0.000000e+00 : f32
    %40 = vector.broadcast %cst_33 : f32 to vector<1x8x1x32xf32>
    %41 = tpu.concatenate %40, %39, %40 in 2 : vector<1x8x1x32xf32>, vector<1x8x8x32xf32>, vector<1x8x1x32xf32> -> vector<1x8x10x32xf32>
    %42 = vector.extract_strided_slice %41 {offsets = [0, 0, 0, 0], sizes = [1, 8, 8, 32], strides = [1, 1, 1, 1]} : vector<1x8x10x32xf32> to vector<1x8x8x32xf32>
    %43 = vector.extract_strided_slice %41 {offsets = [0, 0, 1, 0], sizes = [1, 8, 8, 32], strides = [1, 1, 1, 1]} : vector<1x8x10x32xf32> to vector<1x8x8x32xf32>
    %44 = arith.addf %42, %43 : vector<1x8x8x32xf32>
    %45 = vector.extract_strided_slice %41 {offsets = [0, 0, 2, 0], sizes = [1, 8, 8, 32], strides = [1, 1, 1, 1]} : vector<1x8x10x32xf32> to vector<1x8x8x32xf32>
    %46 = arith.addf %44, %45 : vector<1x8x8x32xf32>
    %cst_34 = arith.constant 0.111111112 : f32
    %47 = vector.broadcast %cst_34 : f32 to vector<1x8x8x32xf32>
    %48 = arith.mulf %46, %47 : vector<1x8x8x32xf32>
    %49 = arith.truncf %48 : vector<1x8x8x32xf32> to vector<1x8x8x32xbf16>
    %50 = vector.shape_cast %49 : vector<1x8x8x32xbf16> to vector<64x32xbf16>
    %c0_35 = arith.constant 0 : index
    %c0_36 = arith.constant 0 : index
    %51 = vector.load %arg5[%c0_35, %c0_36] : memref<32x192xbf16, #tpu.memory_space<vmem>>, vector<32x192xbf16>
    %cst_37 = arith.constant dense<0.000000e+00> : vector<64x192xf32>
    %52 = tpu.matmul %50, %51, %cst_37 {dimension_numbers = #tpu.dot_dimension_numbers<[1], [0], [0], [1], [0, 0, 1, 1], [], []>} : vector<64x32xbf16>, vector<32x192xbf16>, vector<64x192xf32> -> vector<64x192xf32>
    %c0_38 = arith.constant 0 : index
    %c0_39 = arith.constant 0 : index
    %53 = vector.load %arg9[%c0_38, %c0_39] : memref<1x192xf32, #tpu.memory_space<vmem>>, vector<1x192xf32>
    %54 = vector.broadcast %53 : vector<1x192xf32> to vector<64x192xf32>
    %55 = arith.addf %52, %54 : vector<64x192xf32>
    %cst_40 = arith.constant 0.000000e+00 : f32
    %56 = vector.broadcast %cst_40 : f32 to vector<64x192xf32>
    %57 = arith.maximumf %55, %56 : vector<64x192xf32>
    %58 = vector.shape_cast %57 : vector<64x192xf32> to vector<1x8x8x192xf32>
    %59 = arith.truncf %58 : vector<1x8x8x192xf32> to vector<1x8x8x192xbf16>
    %c0_41 = arith.constant 0 : index
    %c0_42 = arith.constant 0 : index
    %c0_43 = arith.constant 0 : index
    %c0_44 = arith.constant 0 : index
    %60 = vector.load %arg13[%c0_41, %c0_42, %c0_43, %c0_44] : memref<1x8x8x192xbf16, #tpu.memory_space<vmem>>, vector<1x8x8x192xbf16>
    tpu.vector_store %arg13[%c0_41, %c0_42, %c0_43, %c0_44], %59 {strides = array<i32>} : memref<1x8x8x192xbf16, #tpu.memory_space<vmem>>, vector<1x8x8x192xbf16>,
    return
  }
  func.func @transform_0(%arg0: i32) -> (i32, i32, i32, i32) {
    %c0_i32 = arith.constant 0 : i32
    %c0_i32_0 = arith.constant 0 : i32
    %c0_i32_1 = arith.constant 0 : i32
    %c0_i32_2 = arith.constant 0 : i32
    return %arg0, %c0_i32, %c0_i32_0, %c0_i32_1 : i32, i32, i32, i32
  }
  func.func @transform_1(%arg0: i32) -> (i32, i32) {
    %c0_i32 = arith.constant 0 : i32
    %c0_i32_0 = arith.constant 0 : i32
    %c0_i32_1 = arith.constant 0 : i32
    return %c0_i32, %c0_i32_0 : i32, i32
  }
  func.func @transform_2(%arg0: i32) -> (i32, i32) {
    %c0_i32 = arith.constant 0 : i32
    %c0_i32_0 = arith.constant 0 : i32
    %c0_i32_1 = arith.constant 0 : i32
    return %c0_i32, %c0_i32_0 : i32, i32
  }
  func.func @transform_3(%arg0: i32) -> (i32, i32) {
    %c0_i32 = arith.constant 0 : i32
    %c0_i32_0 = arith.constant 0 : i32
    %c0_i32_1 = arith.constant 0 : i32
    return %c0_i32, %c0_i32_0 : i32, i32
  }
  func.func @transform_4(%arg0: i32) -> (i32, i32) {
    %c0_i32 = arith.constant 0 : i32
    %c0_i32_0 = arith.constant 0 : i32
    %c0_i32_1 = arith.constant 0 : i32
    return %c0_i32, %c0_i32_0 : i32, i32
  }
  func.func @transform_5(%arg0: i32) -> (i32, i32) {
    %c0_i32 = arith.constant 0 : i32
    %c0_i32_0 = arith.constant 0 : i32
    %c0_i32_1 = arith.constant 0 : i32
    return %c0_i32, %c0_i32_0 : i32, i32
  }
  func.func @transform_6(%arg0: i32) -> (i32, i32) {
    %c0_i32 = arith.constant 0 : i32
    %c0_i32_0 = arith.constant 0 : i32
    %c0_i32_1 = arith.constant 0 : i32
    return %c0_i32, %c0_i32_0 : i32, i32
  }
  func.func @transform_7(%arg0: i32) -> (i32, i32) {
    %c0_i32 = arith.constant 0 : i32
    %c0_i32_0 = arith.constant 0 : i32
    %c0_i32_1 = arith.constant 0 : i32
    return %c0_i32, %c0_i32_0 : i32, i32
  }
  func.func @transform_8(%arg0: i32) -> (i32, i32) {
    %c0_i32 = arith.constant 0 : i32
    %c0_i32_0 = arith.constant 0 : i32
    %c0_i32_1 = arith.constant 0 : i32
    return %c0_i32, %c0_i32_0 : i32, i32
  }
  func.func @transform_9(%arg0: i32) -> (i32, i32, i32, i32) {
    %c0_i32 = arith.constant 0 : i32
    %c0_i32_0 = arith.constant 0 : i32
    %c0_i32_1 = arith.constant 0 : i32
    %c0_i32_2 = arith.constant 0 : i32
    return %arg0, %c0_i32, %c0_i32_0, %c0_i32_1 : i32, i32, i32, i32
  }
  func.func @transform_10(%arg0: i32) -> (i32, i32, i32, i32) {
    %c0_i32 = arith.constant 0 : i32
    %c0_i32_0 = arith.constant 0 : i32
    %c0_i32_1 = arith.constant 0 : i32
    %c0_i32_2 = arith.constant 0 : i32
    return %arg0, %c0_i32, %c0_i32_0, %c0_i32_1 : i32, i32, i32, i32
  }
  func.func @transform_11(%arg0: i32) -> (i32, i32, i32, i32) {
    %c0_i32 = arith.constant 0 : i32
    %c0_i32_0 = arith.constant 0 : i32
    %c0_i32_1 = arith.constant 0 : i32
    %c0_i32_2 = arith.constant 0 : i32
    return %arg0, %c0_i32, %c0_i32_0, %c0_i32_1 : i32, i32, i32, i32
  }
  func.func @transform_12(%arg0: i32) -> (i32, i32, i32, i32) {
    %c0_i32 = arith.constant 0 : i32
    %c0_i32_0 = arith.constant 0 : i32
    %c0_i32_1 = arith.constant 0 : i32
    %c0_i32_2 = arith.constant 0 : i32
    return %arg0, %c0_i32, %c0_i32_0, %c0_i32_1 : i32, i32, i32, i32
  }
}

module attributes {stable_mosaic.version = 11 : i64} {
  func.func @_conv7_kernel(%arg0: i32, %arg1: memref<1x8x8x16xbf16, #tpu.memory_space<vmem>>, %arg2: memref<112x16xbf16, #tpu.memory_space<vmem>>, %arg3: memref<1x16xf32, #tpu.memory_space<vmem>>, %arg4: memref<1x8x8x16xbf16, #tpu.memory_space<vmem>>) attributes {dimension_semantics = [#tpu.dimension_semantics<parallel>], iteration_bounds = array<i64: 2>, scalar_prefetch = 0 : i64, scratch_operands = 0 : i64, tpu.core_type = #tpu.core_type<tc>, window_params = [{transform_indices = @transform_0, window_bounds = array<i64: 1, 8, 8, 16>}, {pipeline_mode = #tpu.pipeline_mode<synchronous>, transform_indices = @transform_1, window_bounds = array<i64: 112, 16>}, {pipeline_mode = #tpu.pipeline_mode<synchronous>, transform_indices = @transform_2, window_bounds = array<i64: 1, 16>}, {transform_indices = @transform_3, window_bounds = array<i64: 1, 8, 8, 16>}]} {
    %c0 = arith.constant 0 : index
    %c0_0 = arith.constant 0 : index
    %c0_1 = arith.constant 0 : index
    %c0_2 = arith.constant 0 : index
    %0 = vector.load %arg1[%c0, %c0_0, %c0_1, %c0_2] : memref<1x8x8x16xbf16, #tpu.memory_space<vmem>>, vector<1x8x8x16xbf16>
    %c0_3 = arith.constant 0 : index
    %c0_4 = arith.constant 0 : index
    %1 = vector.load %arg2[%c0_3, %c0_4] : memref<112x16xbf16, #tpu.memory_space<vmem>>, vector<112x16xbf16>
    %c0_5 = arith.constant 0 : index
    %c0_6 = arith.constant 0 : index
    %2 = vector.load %arg3[%c0_5, %c0_6] : memref<1x16xf32, #tpu.memory_space<vmem>>, vector<1x16xf32>
    %cst = arith.constant 0.000000e+00 : bf16
    %3 = vector.broadcast %cst : bf16 to vector<1x8x3x16xbf16>
    %4 = tpu.concatenate %3, %0, %3 in 2 : vector<1x8x3x16xbf16>, vector<1x8x8x16xbf16>, vector<1x8x3x16xbf16> -> vector<1x8x14x16xbf16>
    %5 = vector.extract_strided_slice %4 {offsets = [0, 0, 0, 0], sizes = [1, 8, 8, 16], strides = [1, 1, 1, 1]} : vector<1x8x14x16xbf16> to vector<1x8x8x16xbf16>
    %6 = vector.extract_strided_slice %4 {offsets = [0, 0, 1, 0], sizes = [1, 8, 8, 16], strides = [1, 1, 1, 1]} : vector<1x8x14x16xbf16> to vector<1x8x8x16xbf16>
    %7 = vector.extract_strided_slice %4 {offsets = [0, 0, 2, 0], sizes = [1, 8, 8, 16], strides = [1, 1, 1, 1]} : vector<1x8x14x16xbf16> to vector<1x8x8x16xbf16>
    %8 = vector.extract_strided_slice %4 {offsets = [0, 0, 3, 0], sizes = [1, 8, 8, 16], strides = [1, 1, 1, 1]} : vector<1x8x14x16xbf16> to vector<1x8x8x16xbf16>
    %9 = vector.extract_strided_slice %4 {offsets = [0, 0, 4, 0], sizes = [1, 8, 8, 16], strides = [1, 1, 1, 1]} : vector<1x8x14x16xbf16> to vector<1x8x8x16xbf16>
    %10 = vector.extract_strided_slice %4 {offsets = [0, 0, 5, 0], sizes = [1, 8, 8, 16], strides = [1, 1, 1, 1]} : vector<1x8x14x16xbf16> to vector<1x8x8x16xbf16>
    %11 = vector.extract_strided_slice %4 {offsets = [0, 0, 6, 0], sizes = [1, 8, 8, 16], strides = [1, 1, 1, 1]} : vector<1x8x14x16xbf16> to vector<1x8x8x16xbf16>
    %12 = tpu.concatenate %5, %6, %7, %8, %9, %10, %11 in 3 : vector<1x8x8x16xbf16>, vector<1x8x8x16xbf16>, vector<1x8x8x16xbf16>, vector<1x8x8x16xbf16>, vector<1x8x8x16xbf16>, vector<1x8x8x16xbf16>, vector<1x8x8x16xbf16> -> vector<1x8x8x112xbf16>
    %13 = vector.shape_cast %12 : vector<1x8x8x112xbf16> to vector<64x112xbf16>
    %cst_7 = arith.constant dense<0.000000e+00> : vector<64x16xf32>
    %14 = tpu.matmul %13, %1, %cst_7 {dimension_numbers = #tpu.dot_dimension_numbers<[1], [0], [0], [1], [0, 0, 1, 1], [], []>} : vector<64x112xbf16>, vector<112x16xbf16>, vector<64x16xf32> -> vector<64x16xf32>
    %15 = vector.broadcast %2 : vector<1x16xf32> to vector<64x16xf32>
    %16 = arith.addf %14, %15 : vector<64x16xf32>
    %cst_8 = arith.constant 0.000000e+00 : f32
    %17 = vector.broadcast %cst_8 : f32 to vector<64x16xf32>
    %18 = arith.maximumf %16, %17 : vector<64x16xf32>
    %19 = vector.shape_cast %18 : vector<64x16xf32> to vector<1x8x8x16xf32>
    %20 = arith.truncf %19 : vector<1x8x8x16xf32> to vector<1x8x8x16xbf16>
    %c0_9 = arith.constant 0 : index
    %c0_10 = arith.constant 0 : index
    %c0_11 = arith.constant 0 : index
    %c0_12 = arith.constant 0 : index
    %21 = vector.load %arg4[%c0_9, %c0_10, %c0_11, %c0_12] : memref<1x8x8x16xbf16, #tpu.memory_space<vmem>>, vector<1x8x8x16xbf16>
    tpu.vector_store %arg4[%c0_9, %c0_10, %c0_11, %c0_12], %20 {strides = array<i32>} : memref<1x8x8x16xbf16, #tpu.memory_space<vmem>>, vector<1x8x8x16xbf16>,
    return
  }
  func.func @transform_0(%arg0: i32) -> (i32, i32, i32, i32) {
    %c0_i32 = arith.constant 0 : i32
    %c0_i32_0 = arith.constant 0 : i32
    %c0_i32_1 = arith.constant 0 : i32
    %c0_i32_2 = arith.constant 0 : i32
    return %arg0, %c0_i32, %c0_i32_0, %c0_i32_1 : i32, i32, i32, i32
  }
  func.func @transform_1(%arg0: i32) -> (i32, i32) {
    %c0_i32 = arith.constant 0 : i32
    %c0_i32_0 = arith.constant 0 : i32
    %c0_i32_1 = arith.constant 0 : i32
    return %c0_i32, %c0_i32_0 : i32, i32
  }
  func.func @transform_2(%arg0: i32) -> (i32, i32) {
    %c0_i32 = arith.constant 0 : i32
    %c0_i32_0 = arith.constant 0 : i32
    %c0_i32_1 = arith.constant 0 : i32
    return %c0_i32, %c0_i32_0 : i32, i32
  }
  func.func @transform_3(%arg0: i32) -> (i32, i32, i32, i32) {
    %c0_i32 = arith.constant 0 : i32
    %c0_i32_0 = arith.constant 0 : i32
    %c0_i32_1 = arith.constant 0 : i32
    %c0_i32_2 = arith.constant 0 : i32
    return %arg0, %c0_i32, %c0_i32_0, %c0_i32_1 : i32, i32, i32, i32
  }
}

module attributes {stable_mosaic.version = 11 : i64} {
  func.func @_conv7_kernel(%arg0: i32, %arg1: memref<1x8x8x16xbf16, #tpu.memory_space<vmem>>, %arg2: memref<112x16xbf16, #tpu.memory_space<vmem>>, %arg3: memref<1x16xf32, #tpu.memory_space<vmem>>, %arg4: memref<1x8x8x16xbf16, #tpu.memory_space<vmem>>) attributes {dimension_semantics = [#tpu.dimension_semantics<parallel>], iteration_bounds = array<i64: 2>, scalar_prefetch = 0 : i64, scratch_operands = 0 : i64, tpu.core_type = #tpu.core_type<tc>, window_params = [{transform_indices = @transform_0, window_bounds = array<i64: 1, 8, 8, 16>}, {pipeline_mode = #tpu.pipeline_mode<synchronous>, transform_indices = @transform_1, window_bounds = array<i64: 112, 16>}, {pipeline_mode = #tpu.pipeline_mode<synchronous>, transform_indices = @transform_2, window_bounds = array<i64: 1, 16>}, {transform_indices = @transform_3, window_bounds = array<i64: 1, 8, 8, 16>}]} {
    %c0 = arith.constant 0 : index
    %c0_0 = arith.constant 0 : index
    %c0_1 = arith.constant 0 : index
    %c0_2 = arith.constant 0 : index
    %0 = vector.load %arg1[%c0, %c0_0, %c0_1, %c0_2] : memref<1x8x8x16xbf16, #tpu.memory_space<vmem>>, vector<1x8x8x16xbf16>
    %c0_3 = arith.constant 0 : index
    %c0_4 = arith.constant 0 : index
    %1 = vector.load %arg2[%c0_3, %c0_4] : memref<112x16xbf16, #tpu.memory_space<vmem>>, vector<112x16xbf16>
    %c0_5 = arith.constant 0 : index
    %c0_6 = arith.constant 0 : index
    %2 = vector.load %arg3[%c0_5, %c0_6] : memref<1x16xf32, #tpu.memory_space<vmem>>, vector<1x16xf32>
    %cst = arith.constant 0.000000e+00 : bf16
    %3 = vector.broadcast %cst : bf16 to vector<1x3x8x16xbf16>
    %4 = tpu.concatenate %3, %0, %3 in 1 : vector<1x3x8x16xbf16>, vector<1x8x8x16xbf16>, vector<1x3x8x16xbf16> -> vector<1x14x8x16xbf16>
    %5 = vector.extract_strided_slice %4 {offsets = [0, 0, 0, 0], sizes = [1, 8, 8, 16], strides = [1, 1, 1, 1]} : vector<1x14x8x16xbf16> to vector<1x8x8x16xbf16>
    %6 = vector.extract_strided_slice %4 {offsets = [0, 1, 0, 0], sizes = [1, 8, 8, 16], strides = [1, 1, 1, 1]} : vector<1x14x8x16xbf16> to vector<1x8x8x16xbf16>
    %7 = vector.extract_strided_slice %4 {offsets = [0, 2, 0, 0], sizes = [1, 8, 8, 16], strides = [1, 1, 1, 1]} : vector<1x14x8x16xbf16> to vector<1x8x8x16xbf16>
    %8 = vector.extract_strided_slice %4 {offsets = [0, 3, 0, 0], sizes = [1, 8, 8, 16], strides = [1, 1, 1, 1]} : vector<1x14x8x16xbf16> to vector<1x8x8x16xbf16>
    %9 = vector.extract_strided_slice %4 {offsets = [0, 4, 0, 0], sizes = [1, 8, 8, 16], strides = [1, 1, 1, 1]} : vector<1x14x8x16xbf16> to vector<1x8x8x16xbf16>
    %10 = vector.extract_strided_slice %4 {offsets = [0, 5, 0, 0], sizes = [1, 8, 8, 16], strides = [1, 1, 1, 1]} : vector<1x14x8x16xbf16> to vector<1x8x8x16xbf16>
    %11 = vector.extract_strided_slice %4 {offsets = [0, 6, 0, 0], sizes = [1, 8, 8, 16], strides = [1, 1, 1, 1]} : vector<1x14x8x16xbf16> to vector<1x8x8x16xbf16>
    %12 = tpu.concatenate %5, %6, %7, %8, %9, %10, %11 in 3 : vector<1x8x8x16xbf16>, vector<1x8x8x16xbf16>, vector<1x8x8x16xbf16>, vector<1x8x8x16xbf16>, vector<1x8x8x16xbf16>, vector<1x8x8x16xbf16>, vector<1x8x8x16xbf16> -> vector<1x8x8x112xbf16>
    %13 = vector.shape_cast %12 : vector<1x8x8x112xbf16> to vector<64x112xbf16>
    %cst_7 = arith.constant dense<0.000000e+00> : vector<64x16xf32>
    %14 = tpu.matmul %13, %1, %cst_7 {dimension_numbers = #tpu.dot_dimension_numbers<[1], [0], [0], [1], [0, 0, 1, 1], [], []>} : vector<64x112xbf16>, vector<112x16xbf16>, vector<64x16xf32> -> vector<64x16xf32>
    %15 = vector.broadcast %2 : vector<1x16xf32> to vector<64x16xf32>
    %16 = arith.addf %14, %15 : vector<64x16xf32>
    %cst_8 = arith.constant 0.000000e+00 : f32
    %17 = vector.broadcast %cst_8 : f32 to vector<64x16xf32>
    %18 = arith.maximumf %16, %17 : vector<64x16xf32>
    %19 = vector.shape_cast %18 : vector<64x16xf32> to vector<1x8x8x16xf32>
    %20 = arith.truncf %19 : vector<1x8x8x16xf32> to vector<1x8x8x16xbf16>
    %c0_9 = arith.constant 0 : index
    %c0_10 = arith.constant 0 : index
    %c0_11 = arith.constant 0 : index
    %c0_12 = arith.constant 0 : index
    %21 = vector.load %arg4[%c0_9, %c0_10, %c0_11, %c0_12] : memref<1x8x8x16xbf16, #tpu.memory_space<vmem>>, vector<1x8x8x16xbf16>
    tpu.vector_store %arg4[%c0_9, %c0_10, %c0_11, %c0_12], %20 {strides = array<i32>} : memref<1x8x8x16xbf16, #tpu.memory_space<vmem>>, vector<1x8x8x16xbf16>,
    return
  }
  func.func @transform_0(%arg0: i32) -> (i32, i32, i32, i32) {
    %c0_i32 = arith.constant 0 : i32
    %c0_i32_0 = arith.constant 0 : i32
    %c0_i32_1 = arith.constant 0 : i32
    %c0_i32_2 = arith.constant 0 : i32
    return %arg0, %c0_i32, %c0_i32_0, %c0_i32_1 : i32, i32, i32, i32
  }
  func.func @transform_1(%arg0: i32) -> (i32, i32) {
    %c0_i32 = arith.constant 0 : i32
    %c0_i32_0 = arith.constant 0 : i32
    %c0_i32_1 = arith.constant 0 : i32
    return %c0_i32, %c0_i32_0 : i32, i32
  }
  func.func @transform_2(%arg0: i32) -> (i32, i32) {
    %c0_i32 = arith.constant 0 : i32
    %c0_i32_0 = arith.constant 0 : i32
    %c0_i32_1 = arith.constant 0 : i32
    return %c0_i32, %c0_i32_0 : i32, i32
  }
  func.func @transform_3(%arg0: i32) -> (i32, i32, i32, i32) {
    %c0_i32 = arith.constant 0 : i32
    %c0_i32_0 = arith.constant 0 : i32
    %c0_i32_1 = arith.constant 0 : i32
    %c0_i32_2 = arith.constant 0 : i32
    return %arg0, %c0_i32, %c0_i32_0, %c0_i32_1 : i32, i32, i32, i32
  }
}

module attributes {stable_mosaic.version = 11 : i64} {
  func.func @_tail_kernel(%arg0: i32, %arg1: memref<1x8x8x16xbf16, #tpu.memory_space<vmem>>, %arg2: memref<1x8x8x16xbf16, #tpu.memory_space<vmem>>, %arg3: memref<1x8x8x192xbf16, #tpu.memory_space<vmem>>, %arg4: memref<1x8x8x192xbf16, #tpu.memory_space<vmem>>, %arg5: memref<112x192xbf16, #tpu.memory_space<vmem>>, %arg6: memref<112x192xbf16, #tpu.memory_space<vmem>>, %arg7: memref<1x192xf32, #tpu.memory_space<vmem>>, %arg8: memref<1x192xf32, #tpu.memory_space<vmem>>, %arg9: memref<1x8x8x768xf32, #tpu.memory_space<vmem>>) attributes {dimension_semantics = [#tpu.dimension_semantics<parallel>], iteration_bounds = array<i64: 2>, scalar_prefetch = 0 : i64, scratch_operands = 0 : i64, tpu.core_type = #tpu.core_type<tc>, window_params = [{transform_indices = @transform_0, window_bounds = array<i64: 1, 8, 8, 16>}, {transform_indices = @transform_1, window_bounds = array<i64: 1, 8, 8, 16>}, {transform_indices = @transform_2, window_bounds = array<i64: 1, 8, 8, 192>}, {transform_indices = @transform_3, window_bounds = array<i64: 1, 8, 8, 192>}, {pipeline_mode = #tpu.pipeline_mode<synchronous>, transform_indices = @transform_4, window_bounds = array<i64: 112, 192>}, {pipeline_mode = #tpu.pipeline_mode<synchronous>, transform_indices = @transform_5, window_bounds = array<i64: 112, 192>}, {pipeline_mode = #tpu.pipeline_mode<synchronous>, transform_indices = @transform_6, window_bounds = array<i64: 1, 192>}, {pipeline_mode = #tpu.pipeline_mode<synchronous>, transform_indices = @transform_7, window_bounds = array<i64: 1, 192>}, {transform_indices = @transform_8, window_bounds = array<i64: 1, 8, 8, 768>}]} {
    %c0 = arith.constant 0 : index
    %c0_0 = arith.constant 0 : index
    %c0_1 = arith.constant 0 : index
    %c0_2 = arith.constant 0 : index
    %0 = vector.load %arg1[%c0, %c0_0, %c0_1, %c0_2] : memref<1x8x8x16xbf16, #tpu.memory_space<vmem>>, vector<1x8x8x16xbf16>
    %c0_3 = arith.constant 0 : index
    %c0_4 = arith.constant 0 : index
    %1 = vector.load %arg5[%c0_3, %c0_4] : memref<112x192xbf16, #tpu.memory_space<vmem>>, vector<112x192xbf16>
    %c0_5 = arith.constant 0 : index
    %c0_6 = arith.constant 0 : index
    %2 = vector.load %arg7[%c0_5, %c0_6] : memref<1x192xf32, #tpu.memory_space<vmem>>, vector<1x192xf32>
    %cst = arith.constant 0.000000e+00 : bf16
    %3 = vector.broadcast %cst : bf16 to vector<1x3x8x16xbf16>
    %4 = tpu.concatenate %3, %0, %3 in 1 : vector<1x3x8x16xbf16>, vector<1x8x8x16xbf16>, vector<1x3x8x16xbf16> -> vector<1x14x8x16xbf16>
    %5 = vector.extract_strided_slice %4 {offsets = [0, 0, 0, 0], sizes = [1, 8, 8, 16], strides = [1, 1, 1, 1]} : vector<1x14x8x16xbf16> to vector<1x8x8x16xbf16>
    %6 = vector.extract_strided_slice %4 {offsets = [0, 1, 0, 0], sizes = [1, 8, 8, 16], strides = [1, 1, 1, 1]} : vector<1x14x8x16xbf16> to vector<1x8x8x16xbf16>
    %7 = vector.extract_strided_slice %4 {offsets = [0, 2, 0, 0], sizes = [1, 8, 8, 16], strides = [1, 1, 1, 1]} : vector<1x14x8x16xbf16> to vector<1x8x8x16xbf16>
    %8 = vector.extract_strided_slice %4 {offsets = [0, 3, 0, 0], sizes = [1, 8, 8, 16], strides = [1, 1, 1, 1]} : vector<1x14x8x16xbf16> to vector<1x8x8x16xbf16>
    %9 = vector.extract_strided_slice %4 {offsets = [0, 4, 0, 0], sizes = [1, 8, 8, 16], strides = [1, 1, 1, 1]} : vector<1x14x8x16xbf16> to vector<1x8x8x16xbf16>
    %10 = vector.extract_strided_slice %4 {offsets = [0, 5, 0, 0], sizes = [1, 8, 8, 16], strides = [1, 1, 1, 1]} : vector<1x14x8x16xbf16> to vector<1x8x8x16xbf16>
    %11 = vector.extract_strided_slice %4 {offsets = [0, 6, 0, 0], sizes = [1, 8, 8, 16], strides = [1, 1, 1, 1]} : vector<1x14x8x16xbf16> to vector<1x8x8x16xbf16>
    %12 = tpu.concatenate %5, %6, %7, %8, %9, %10, %11 in 3 : vector<1x8x8x16xbf16>, vector<1x8x8x16xbf16>, vector<1x8x8x16xbf16>, vector<1x8x8x16xbf16>, vector<1x8x8x16xbf16>, vector<1x8x8x16xbf16>, vector<1x8x8x16xbf16> -> vector<1x8x8x112xbf16>
    %13 = vector.shape_cast %12 : vector<1x8x8x112xbf16> to vector<64x112xbf16>
    %cst_7 = arith.constant dense<0.000000e+00> : vector<64x192xf32>
    %14 = tpu.matmul %13, %1, %cst_7 {dimension_numbers = #tpu.dot_dimension_numbers<[1], [0], [0], [1], [0, 0, 1, 1], [], []>} : vector<64x112xbf16>, vector<112x192xbf16>, vector<64x192xf32> -> vector<64x192xf32>
    %15 = vector.broadcast %2 : vector<1x192xf32> to vector<64x192xf32>
    %16 = arith.addf %14, %15 : vector<64x192xf32>
    %cst_8 = arith.constant 0.000000e+00 : f32
    %17 = vector.broadcast %cst_8 : f32 to vector<64x192xf32>
    %18 = arith.maximumf %16, %17 : vector<64x192xf32>
    %c0_9 = arith.constant 0 : index
    %c0_10 = arith.constant 0 : index
    %c0_11 = arith.constant 0 : index
    %c0_12 = arith.constant 0 : index
    %19 = vector.load %arg2[%c0_9, %c0_10, %c0_11, %c0_12] : memref<1x8x8x16xbf16, #tpu.memory_space<vmem>>, vector<1x8x8x16xbf16>
    %c0_13 = arith.constant 0 : index
    %c0_14 = arith.constant 0 : index
    %20 = vector.load %arg6[%c0_13, %c0_14] : memref<112x192xbf16, #tpu.memory_space<vmem>>, vector<112x192xbf16>
    %c0_15 = arith.constant 0 : index
    %c0_16 = arith.constant 0 : index
    %21 = vector.load %arg8[%c0_15, %c0_16] : memref<1x192xf32, #tpu.memory_space<vmem>>, vector<1x192xf32>
    %cst_17 = arith.constant 0.000000e+00 : bf16
    %22 = vector.broadcast %cst_17 : bf16 to vector<1x8x3x16xbf16>
    %23 = tpu.concatenate %22, %19, %22 in 2 : vector<1x8x3x16xbf16>, vector<1x8x8x16xbf16>, vector<1x8x3x16xbf16> -> vector<1x8x14x16xbf16>
    %24 = vector.extract_strided_slice %23 {offsets = [0, 0, 0, 0], sizes = [1, 8, 8, 16], strides = [1, 1, 1, 1]} : vector<1x8x14x16xbf16> to vector<1x8x8x16xbf16>
    %25 = vector.extract_strided_slice %23 {offsets = [0, 0, 1, 0], sizes = [1, 8, 8, 16], strides = [1, 1, 1, 1]} : vector<1x8x14x16xbf16> to vector<1x8x8x16xbf16>
    %26 = vector.extract_strided_slice %23 {offsets = [0, 0, 2, 0], sizes = [1, 8, 8, 16], strides = [1, 1, 1, 1]} : vector<1x8x14x16xbf16> to vector<1x8x8x16xbf16>
    %27 = vector.extract_strided_slice %23 {offsets = [0, 0, 3, 0], sizes = [1, 8, 8, 16], strides = [1, 1, 1, 1]} : vector<1x8x14x16xbf16> to vector<1x8x8x16xbf16>
    %28 = vector.extract_strided_slice %23 {offsets = [0, 0, 4, 0], sizes = [1, 8, 8, 16], strides = [1, 1, 1, 1]} : vector<1x8x14x16xbf16> to vector<1x8x8x16xbf16>
    %29 = vector.extract_strided_slice %23 {offsets = [0, 0, 5, 0], sizes = [1, 8, 8, 16], strides = [1, 1, 1, 1]} : vector<1x8x14x16xbf16> to vector<1x8x8x16xbf16>
    %30 = vector.extract_strided_slice %23 {offsets = [0, 0, 6, 0], sizes = [1, 8, 8, 16], strides = [1, 1, 1, 1]} : vector<1x8x14x16xbf16> to vector<1x8x8x16xbf16>
    %31 = tpu.concatenate %24, %25, %26, %27, %28, %29, %30 in 3 : vector<1x8x8x16xbf16>, vector<1x8x8x16xbf16>, vector<1x8x8x16xbf16>, vector<1x8x8x16xbf16>, vector<1x8x8x16xbf16>, vector<1x8x8x16xbf16>, vector<1x8x8x16xbf16> -> vector<1x8x8x112xbf16>
    %32 = vector.shape_cast %31 : vector<1x8x8x112xbf16> to vector<64x112xbf16>
    %cst_18 = arith.constant dense<0.000000e+00> : vector<64x192xf32>
    %33 = tpu.matmul %32, %20, %cst_18 {dimension_numbers = #tpu.dot_dimension_numbers<[1], [0], [0], [1], [0, 0, 1, 1], [], []>} : vector<64x112xbf16>, vector<112x192xbf16>, vector<64x192xf32> -> vector<64x192xf32>
    %34 = vector.broadcast %21 : vector<1x192xf32> to vector<64x192xf32>
    %35 = arith.addf %33, %34 : vector<64x192xf32>
    %cst_19 = arith.constant 0.000000e+00 : f32
    %36 = vector.broadcast %cst_19 : f32 to vector<64x192xf32>
    %37 = arith.maximumf %35, %36 : vector<64x192xf32>
    %c0_20 = arith.constant 0 : index
    %c0_21 = arith.constant 0 : index
    %c0_22 = arith.constant 0 : index
    %c0_23 = arith.constant 0 : index
    %38 = vector.load %arg3[%c0_20, %c0_21, %c0_22, %c0_23] : memref<1x8x8x192xbf16, #tpu.memory_space<vmem>>, vector<1x8x8x192xbf16>
    %39 = arith.extf %38 : vector<1x8x8x192xbf16> to vector<1x8x8x192xf32>
    %40 = vector.shape_cast %39 : vector<1x8x8x192xf32> to vector<64x192xf32>
    %c0_24 = arith.constant 0 : index
    %c0_25 = arith.constant 0 : index
    %c0_26 = arith.constant 0 : index
    %c0_27 = arith.constant 0 : index
    %41 = vector.load %arg4[%c0_24, %c0_25, %c0_26, %c0_27] : memref<1x8x8x192xbf16, #tpu.memory_space<vmem>>, vector<1x8x8x192xbf16>
    %42 = arith.extf %41 : vector<1x8x8x192xbf16> to vector<1x8x8x192xf32>
    %43 = vector.shape_cast %42 : vector<1x8x8x192xf32> to vector<64x192xf32>
    %44 = tpu.concatenate %40, %18, %37, %43 in 1 : vector<64x192xf32>, vector<64x192xf32>, vector<64x192xf32>, vector<64x192xf32> -> vector<64x768xf32>
    %45 = vector.shape_cast %44 : vector<64x768xf32> to vector<1x8x8x768xf32>
    %c0_28 = arith.constant 0 : index
    %c0_29 = arith.constant 0 : index
    %c0_30 = arith.constant 0 : index
    %c0_31 = arith.constant 0 : index
    %46 = vector.load %arg9[%c0_28, %c0_29, %c0_30, %c0_31] : memref<1x8x8x768xf32, #tpu.memory_space<vmem>>, vector<1x8x8x768xf32>
    tpu.vector_store %arg9[%c0_28, %c0_29, %c0_30, %c0_31], %45 {strides = array<i32>} : memref<1x8x8x768xf32, #tpu.memory_space<vmem>>, vector<1x8x8x768xf32>,
    return
  }
  func.func @transform_0(%arg0: i32) -> (i32, i32, i32, i32) {
    %c0_i32 = arith.constant 0 : i32
    %c0_i32_0 = arith.constant 0 : i32
    %c0_i32_1 = arith.constant 0 : i32
    %c0_i32_2 = arith.constant 0 : i32
    return %arg0, %c0_i32, %c0_i32_0, %c0_i32_1 : i32, i32, i32, i32
  }
  func.func @transform_1(%arg0: i32) -> (i32, i32, i32, i32) {
    %c0_i32 = arith.constant 0 : i32
    %c0_i32_0 = arith.constant 0 : i32
    %c0_i32_1 = arith.constant 0 : i32
    %c0_i32_2 = arith.constant 0 : i32
    return %arg0, %c0_i32, %c0_i32_0, %c0_i32_1 : i32, i32, i32, i32
  }
  func.func @transform_2(%arg0: i32) -> (i32, i32, i32, i32) {
    %c0_i32 = arith.constant 0 : i32
    %c0_i32_0 = arith.constant 0 : i32
    %c0_i32_1 = arith.constant 0 : i32
    %c0_i32_2 = arith.constant 0 : i32
    return %arg0, %c0_i32, %c0_i32_0, %c0_i32_1 : i32, i32, i32, i32
  }
  func.func @transform_3(%arg0: i32) -> (i32, i32, i32, i32) {
    %c0_i32 = arith.constant 0 : i32
    %c0_i32_0 = arith.constant 0 : i32
    %c0_i32_1 = arith.constant 0 : i32
    %c0_i32_2 = arith.constant 0 : i32
    return %arg0, %c0_i32, %c0_i32_0, %c0_i32_1 : i32, i32, i32, i32
  }
  func.func @transform_4(%arg0: i32) -> (i32, i32) {
    %c0_i32 = arith.constant 0 : i32
    %c0_i32_0 = arith.constant 0 : i32
    %c0_i32_1 = arith.constant 0 : i32
    return %c0_i32, %c0_i32_0 : i32, i32
  }
  func.func @transform_5(%arg0: i32) -> (i32, i32) {
    %c0_i32 = arith.constant 0 : i32
    %c0_i32_0 = arith.constant 0 : i32
    %c0_i32_1 = arith.constant 0 : i32
    return %c0_i32, %c0_i32_0 : i32, i32
  }
  func.func @transform_6(%arg0: i32) -> (i32, i32) {
    %c0_i32 = arith.constant 0 : i32
    %c0_i32_0 = arith.constant 0 : i32
    %c0_i32_1 = arith.constant 0 : i32
    return %c0_i32, %c0_i32_0 : i32, i32
  }
  func.func @transform_7(%arg0: i32) -> (i32, i32) {
    %c0_i32 = arith.constant 0 : i32
    %c0_i32_0 = arith.constant 0 : i32
    %c0_i32_1 = arith.constant 0 : i32
    return %c0_i32, %c0_i32_0 : i32, i32
  }
  func.func @transform_8(%arg0: i32) -> (i32, i32, i32, i32) {
    %c0_i32 = arith.constant 0 : i32
    %c0_i32_0 = arith.constant 0 : i32
    %c0_i32_1 = arith.constant 0 : i32
    %c0_i32_2 = arith.constant 0 : i32
    return %arg0, %c0_i32, %c0_i32_0, %c0_i32_1 : i32, i32, i32, i32
  }
}

</mosaic_0001>

<llo_original>
// kernel: inception_c_forward.8
$region0: #{inception_c_forward.8}
  #allocation0 [shape = 'u32[]', space=smem, size = 0x4, offset = 0x4, fixed_abs, tag = 'smem constant byte address 0x4 - core index']
  #allocation1 [shape = 'u32[144,128]{1,0:T(1,128)}', space=vmem, size = 0x12000, scoped, tag = 'internal scratch']
  %s0 = inlined_call_operand.vmem [shape: bf16[2,8,8,16], index: 0, kind: input, shape index: {}]
  %s1 = inlined_call_operand.vmem [shape: bf16[112,16], index: 1, kind: input, shape index: {}]
  %s2 = inlined_call_operand.vmem [shape: f32[1,16], index: 2, kind: input, shape index: {}]
  %s3 = inlined_call_operand.vmem [shape: bf16[2,8,8,16], index: 3, kind: output, shape index: {}]
  %s4 = sld [smem:[#allocation0]]
  $region45: #{inception_c_forward.8} parent=0
    _
  %s6 = ssub.s32 1, %s4
  %s7 = scalar_select 0, %s6, %s4
  loop: start=0, step=1, limit=4
  $region2: #{inception_c_forward.8} parent=0 // loop_pre_header
    _
  $region3: #{inception_c_forward.8} parent=0 // loop_header
    %s9 = sphi 0, %s13
    %p10 = scmp.ge.s32.totalorder %s9, 4
    %s19 = sphi 0, %s21
    %s22 = sphi 0, %s19
    %s23 = sphi 0, %s22
    %s39 = sphi 0, %s23
    %s43 = sphi 0, %s43
    %s45 = sphi 0, %s43
    %s46 = sphi 0, %s45
    %s60 = sphi 0, %s46
    %s64 = sphi 0, %s64
    %s66 = sphi 0, %s64
    %s67 = sphi 0, %s66
    %s81 = sphi 0, %s67
    %s87 = sphi 0, %s89
    %s90 = sphi 0, %s87
    %s91 = sphi 0, %s90
    %s107 = sphi 0, %s91
  $region4: #{inception_c_forward.8} parent=0 // loop_header_branch
    %12 = sbr.rel (%p10) target = $region8
  $region5: #{inception_c_forward.8} parent=0 // loop_body
    %s14 = ssub.s32 %s9, 1
    %s15 = ssub.s32 %s9, 2
    %s16 = sadd.s32 %s9, 1
    %s17 = ssub.s32 %s9, %s16
    %p18 = scmp.eq.s32.totalorder %s17, 0
    %s20 = sadd.s32 %s19, 1
    %s21 = scalar_select %p18, %s19, %s20
    %p24 = pneg %p18
    %p25 = scmp.eq.s32.totalorder %s9, 1
    %p26 = por %p24, %p25
    %p27 = scmp.ne.s32.totalorder %s19, %s22
    %p28 = scmp.eq.s32.totalorder %s9, 0
    %p29 = por %p27, %p28
    %p30 = scmp.ne.s32.totalorder %s19, %s22
    %p31 = scmp.eq.s32.totalorder %s14, 1
    %p32 = por %p30, %p31
    %p33 = scmp.ne.s32.totalorder %s22, %s23
    %p34 = scmp.eq.s32.totalorder %s14, 0
    %p35 = por %p33, %p34
    %p36 = scmp.ne.s32.totalorder %s22, %s23
    %p37 = scmp.eq.s32.totalorder %s15, 1
    %p38 = por %p36, %p37
    %p40 = scmp.ne.s32.totalorder %s23, %s39
    %p41 = scmp.eq.s32.totalorder %s15, 0
    %p42 = por %p40, %p41
    %s44 = sadd.s32 %s43, 1
    %p47 = scmp.eq.s32.totalorder %s9, 1
    %p48 = scmp.ne.s32.totalorder %s43, %s45
    %p49 = scmp.eq.s32.totalorder %s9, 0
    %p50 = por %p48, %p49
    %p51 = scmp.ne.s32.totalorder %s43, %s45
    %p52 = scmp.eq.s32.totalorder %s14, 1
    %p53 = por %p51, %p52
    %p54 = scmp.ne.s32.totalorder %s45, %s46
    %p55 = scmp.eq.s32.totalorder %s14, 0
    %p56 = por %p54, %p55
    %p57 = scmp.ne.s32.totalorder %s45, %s46
    %p58 = scmp.eq.s32.totalorder %s15, 1
    %p59 = por %p57, %p58
    %p61 = scmp.ne.s32.totalorder %s46, %s60
    %p62 = scmp.eq.s32.totalorder %s15, 0
    %p63 = por %p61, %p62
    %s65 = sadd.s32 %s64, 1
    %p68 = scmp.eq.s32.totalorder %s9, 1
    %p69 = scmp.ne.s32.totalorder %s64, %s66
    %p70 = scmp.eq.s32.totalorder %s9, 0
    %p71 = por %p69, %p70
    %p72 = scmp.ne.s32.totalorder %s64, %s66
    %p73 = scmp.eq.s32.totalorder %s14, 1
    %p74 = por %p72, %p73
    %p75 = scmp.ne.s32.totalorder %s66, %s67
    %p76 = scmp.eq.s32.totalorder %s14, 0
    %p77 = por %p75, %p76
    %p78 = scmp.ne.s32.totalorder %s66, %s67
    %p79 = scmp.eq.s32.totalorder %s15, 1
    %p80 = por %p78, %p79
    %p82 = scmp.ne.s32.totalorder %s67, %s81
    %p83 = scmp.eq.s32.totalorder %s15, 0
    %p84 = por %p82, %p83
    %s85 = ssub.s32 %s9, %s16
    %p86 = scmp.eq.s32.totalorder %s85, 0
    %s88 = sadd.s32 %s87, 1
    %s89 = scalar_select %p86, %s87, %s88
    %p92 = pneg %p86
    %p93 = scmp.eq.s32.totalorder %s9, 1
    %p94 = por %p92, %p93
    %p95 = scmp.ne.s32.totalorder %s87, %s90
    %p96 = scmp.eq.s32.totalorder %s9, 0
    %p97 = por %p95, %p96
    %p98 = scmp.ne.s32.totalorder %s87, %s90
    %p99 = scmp.eq.s32.totalorder %s14, 1
    %p100 = por %p98, %p99
    %p101 = scmp.ne.s32.totalorder %s90, %s91
    %p102 = scmp.eq.s32.totalorder %s14, 0
    %p103 = por %p101, %p102
    %p104 = scmp.ne.s32.totalorder %s90, %s91
    %p105 = scmp.eq.s32.totalorder %s15, 1
    %p106 = por %p104, %p105
    %p108 = scmp.ne.s32.totalorder %s91, %s107
    %p109 = scmp.eq.s32.totalorder %s15, 0
    %p110 = por %p108, %p109
    %p111 = scmp.le.s32.totalorder 1, %s9
    %p112 = scmp.lt.s32.totalorder %s9, 3
    %p113 = pnand %p111, %p112
    %p114 = pneg %p113
    // Predicated region
    $region9: #{inception_c_forward.8} parent=5 // pred_check
      _
    $region10: #{inception_c_forward.8} parent=5 // pred_check_branch
      %116 = sbr.rel (%p113) target = $region12
    $region11: #{inception_c_forward.8} parent=5 // pred_region
      %s117 = ssub.s32 %s9, 1
      // Predicated region
      $region13: #{inception_c_forward.8} parent=11 // pred_check
        %p118 = pneg %p56
      $region14: #{inception_c_forward.8} parent=11 // pred_check_branch
        %120 = sbr.rel (%p118) target = $region16
      $region15: #{inception_c_forward.8} parent=11 // pred_region
        _
      $region16: #{inception_c_forward.8} parent=11 // pred_fallthru
        _
      // Predicated region
      $region17: #{inception_c_forward.8} parent=11 // pred_check
        %p121 = pneg %p77
      $region18: #{inception_c_forward.8} parent=11 // pred_check_branch
        %123 = sbr.rel (%p121) target = $region20
      $region19: #{inception_c_forward.8} parent=11 // pred_region
        _
      $region20: #{inception_c_forward.8} parent=11 // pred_fallthru
        _
    $region12: #{inception_c_forward.8} parent=5 // pred_fallthru
      _
    %p124 = scmp.lt.s32.totalorder %s9, 2
    // Predicated region
    $region21: #{inception_c_forward.8} parent=5 // pred_check
      %p125 = pneg %p124
    $region22: #{inception_c_forward.8} parent=5 // pred_check_branch
      %127 = sbr.rel (%p125) target = $region24
    $region23: #{inception_c_forward.8} parent=5 // pred_region
      // Predicated region
      $region25: #{inception_c_forward.8} parent=23 // pred_check
        %p128 = pneg %p29
      $region26: #{inception_c_forward.8} parent=23 // pred_check_branch
        %130 = sbr.rel (%p128) target = $region28
      $region27: #{inception_c_forward.8} parent=23 // pred_region
        %p131 = scmp.lt.s32.totalorder %s9, 1
        %s132 = scalar_select %p131, %s9, 1
        %s133 = smul.addr %s132, 8
        %s134 = smul.addr %s133, 4
        %s135 = scalar_lea.vmem %s0, %s134
      $region28: #{inception_c_forward.8} parent=23 // pred_fallthru
        _
    $region24: #{inception_c_forward.8} parent=5 // pred_fallthru
      _
    %p136 = scmp.le.s32.totalorder 1, %s9
    %p137 = scmp.lt.s32.totalorder %s9, 3
    %p138 = pnand %p136, %p137
    %p139 = pneg %p138
    // Predicated region
    $region29: #{inception_c_forward.8} parent=5 // pred_check
      _
    $region30: #{inception_c_forward.8} parent=5 // pred_check_branch
      %141 = sbr.rel (%p138) target = $region32
    $region31: #{inception_c_forward.8} parent=5 // pred_region
      %s142 = ssub.s32 %s9, 1
      %p143 = scmp.lt.s32.totalorder %s14, 1
      %s144 = scalar_select %p143, %s14, 1
      %s145 = smul.addr %s144, 8
      %s146 = smul.addr %s145, 4
      %s147 = scalar_lea.vmem %s0, %s146
      %p148 = pneg %p35
      %p149 = pneg %p32
      %p150 = pneg %p56
      %p151 = pneg %p53
      %p152 = pneg %p77
      %p153 = pneg %p74
      %p154 = pneg %p103
      %p155 = pneg %p100
      %p156 = scmp.lt.s32.totalorder %s14, 1
      %s157 = scalar_select %p156, %s14, 1
      %s158 = smul.addr %s157, 8
      %s159 = smul.addr %s158, 4
      %s160 = scalar_lea.vmem %s3, %s159
      %p161 = scmp.lt.s32.totalorder %s14, 1
      %s162 = scalar_select %p161, %s14, 1
      %s163 = smul.addr %s162, 8
      %s164 = smul.addr %s163, 4
      %s165 = scalar_lea.vmem %s0, %s164
      %p166 = scmp.lt.s32.totalorder %s14, 1
      %s167 = scalar_select %p166, %s14, 1
      %s168 = smul.addr %s167, 8
      %s169 = smul.addr %s168, 4
      %s170 = scalar_lea.vmem %s3, %s169
      %v172 = vld [vmem:[%s165] sm:$0xf]
      %v173 = vld [vmem:[%s165 + $0x4] sm:$0xf]
      %v174 = vld [vmem:[%s165 + $0x8] sm:$0xf]
      %v175 = vld [vmem:[%s165 + $0xc] sm:$0xf]
      %v176 = vld [vmem:[%s165 + $0x10] sm:$0xf]
      %v177 = vld [vmem:[%s165 + $0x14] sm:$0xf]
      %v178 = vld [vmem:[%s165 + $0x18] sm:$0xf]
      %v179 = vld [vmem:[%s165 + $0x1c] sm:$0xf]
      %v180 = vld [vmem:[%s1] sm:$0xf]
      %v181 = vld [vmem:[%s1 + $0x4] sm:$0xf]
      %v182 = vld [vmem:[%s1 + $0x8] sm:$0xf]
      %v183 = vld [vmem:[%s1 + $0xc] sm:$0xf]
      %v184 = vld [vmem:[%s1 + $0x10] sm:$0xf]
      %v185 = vld [vmem:[%s1 + $0x14] sm:$0xf]
      %v186 = vld [vmem:[%s1 + $0x18] sm:$0xf]
      %v187 = vld [vmem:[%s1 + $0x1c] sm:$0xf]
      %v188 = vld [vmem:[%s1 + $0x20] sm:$0xf]
      %v189 = vld [vmem:[%s1 + $0x24] sm:$0xf]
      %v190 = vld [vmem:[%s1 + $0x28] sm:$0xf]
      %v191 = vld [vmem:[%s1 + $0x2c] sm:$0xf]
      %v192 = vld [vmem:[%s1 + $0x30] sm:$0xf]
      %v193 = vld [vmem:[%s1 + $0x34] sm:$0xf]
      %v194 = vld [vmem:[%s2] sm:$0x1]
      %202 = vrot.lane.b32.xlu0 0, 16
      %v203 = vpop.permute.xlu0 %202
      %204 = vrot.lane.b32.xlu0 %v172, 16
      %v205 = vpop.permute.xlu0 %204
      %206 = vrot.lane.b32.xlu0 %v173, 16
      %v207 = vpop.permute.xlu0 %206
      %208 = vrot.lane.b32.xlu0 %v174, 16
      %v209 = vpop.permute.xlu0 %208
      %210 = vrot.lane.b32.xlu0 %v175, 16
      %v211 = vpop.permute.xlu0 %210
      %212 = vrot.lane.b32.xlu0 %v176, 16
      %v213 = vpop.permute.xlu0 %212
      %214 = vrot.lane.b32.xlu0 %v177, 16
      %v215 = vpop.permute.xlu0 %214
      %217 = vrot.lane.b32.xlu0 0, 32
      %v218 = vpop.permute.xlu0 %217
      %219 = vrot.lane.b32.xlu0 %v172, 32
      %v220 = vpop.permute.xlu0 %219
      %221 = vrot.lane.b32.xlu0 %v173, 32
      %v222 = vpop.permute.xlu0 %221
      %223 = vrot.lane.b32.xlu0 %v174, 32
      %v224 = vpop.permute.xlu0 %223
      %225 = vrot.lane.b32.xlu0 %v175, 32
      %v226 = vpop.permute.xlu0 %225
      %227 = vrot.lane.b32.xlu0 %v176, 32
      %v228 = vpop.permute.xlu0 %227
      %229 = vrot.lane.b32.xlu0 %v177, 32
      %v230 = vpop.permute.xlu0 %229
      %231 = vrot.lane.b32.xlu0 %v178, 32
      %v232 = vpop.permute.xlu0 %231
      %234 = vrot.lane.b32.xlu0 %v172, 48
      %v235 = vpop.permute.xlu0 %234
      %236 = vrot.lane.b32.xlu0 %v173, 48
      %v237 = vpop.permute.xlu0 %236
      %238 = vrot.lane.b32.xlu0 %v174, 48
      %v239 = vpop.permute.xlu0 %238
      %240 = vrot.lane.b32.xlu0 %v175, 48
      %v241 = vpop.permute.xlu0 %240
      %242 = vrot.lane.b32.xlu0 %v176, 48
      %v243 = vpop.permute.xlu0 %242
      %244 = vrot.lane.b32.xlu0 %v177, 48
      %v245 = vpop.permute.xlu0 %244
      %246 = vrot.lane.b32.xlu0 %v178, 48
      %v247 = vpop.permute.xlu0 %246
      %248 = vrot.lane.b32.xlu0 %v179, 48
      %v249 = vpop.permute.xlu0 %248
      %250 = vrot.lane.b32.xlu0 %v173, 64
      %v251 = vpop.permute.xlu0 %250
      %252 = vrot.lane.b32.xlu0 %v174, 64
      %v253 = vpop.permute.xlu0 %252
      %254 = vrot.lane.b32.xlu0 %v175, 64
      %v255 = vpop.permute.xlu0 %254
      %256 = vrot.lane.b32.xlu0 %v176, 64
      %v257 = vpop.permute.xlu0 %256
      %258 = vrot.lane.b32.xlu0 %v177, 64
      %v259 = vpop.permute.xlu0 %258
      %260 = vrot.lane.b32.xlu0 %v178, 64
      %v261 = vpop.permute.xlu0 %260
      %262 = vrot.lane.b32.xlu0 %v179, 64
      %v263 = vpop.permute.xlu0 %262
      %264 = vrot.lane.b32.xlu0 0, 64
      %v265 = vpop.permute.xlu0 %264
      %266 = vrot.lane.b32.xlu0 %v174, 80
      %v267 = vpop.permute.xlu0 %266
      %268 = vrot.lane.b32.xlu0 %v175, 80
      %v269 = vpop.permute.xlu0 %268
      %270 = vrot.lane.b32.xlu0 %v176, 80
      %v271 = vpop.permute.xlu0 %270
      %272 = vrot.lane.b32.xlu0 %v177, 80
      %v273 = vpop.permute.xlu0 %272
      %274 = vrot.lane.b32.xlu0 %v178, 80
      %v275 = vpop.permute.xlu0 %274
      %276 = vrot.lane.b32.xlu0 %v179, 80
      %v277 = vpop.permute.xlu0 %276
      %278 = vrot.lane.b32.xlu0 0, 80
      %v279 = vpop.permute.xlu0 %278
      %280 = vrot.lane.b32.xlu0 %v175, 96
      %v281 = vpop.permute.xlu0 %280
      %282 = vrot.lane.b32.xlu0 %v176, 96
      %v283 = vpop.permute.xlu0 %282
      %284 = vrot.lane.b32.xlu0 %v177, 96
      %v285 = vpop.permute.xlu0 %284
      %286 = vrot.lane.b32.xlu0 %v178, 96
      %v287 = vpop.permute.xlu0 %286
      %288 = vrot.lane.b32.xlu0 %v179, 96
      %v289 = vpop.permute.xlu0 %288
      %290 = vrot.lane.b32.xlu0 0, 96
      %v291 = vpop.permute.xlu0 %290
      %vm292 = vcmask 130048
      %v295 = vsel %vm292, 0, %v203
      %v297 = vsel %vm292, 0, %v205
      %v300 = vsel %vm292, %v172, %v207
      %v303 = vsel %vm292, %v173, %v209
      %v306 = vsel %vm292, %v174, %v211
      %v309 = vsel %vm292, %v175, %v213
      %v312 = vsel %vm292, %v176, %v215
      %vm313 = vcmask 261120
      %v315 = vsel %vm313, %v295, %v218
      %v317 = vsel %vm313, %v295, %v220
      %v319 = vsel %vm313, %v297, %v222
      %v321 = vsel %vm313, %v300, %v224
      %v323 = vsel %vm313, %v303, %v226
      %v325 = vsel %vm313, %v306, %v228
      %v327 = vsel %vm313, %v309, %v230
      %v329 = vsel %vm313, %v312, %v232
      %vm330 = vcmask 392192
      %v332 = vsel %vm330, %v315, %v235
      %v334 = vsel %vm330, %v317, %v237
      %v336 = vsel %vm330, %v319, %v239
      %v338 = vsel %vm330, %v321, %v241
      %v340 = vsel %vm330, %v323, %v243
      %v342 = vsel %vm330, %v325, %v245
      %v344 = vsel %vm330, %v327, %v247
      %v346 = vsel %vm330, %v329, %v249
      %vm347 = vcmask 523264
      %v349 = vsel %vm347, %v332, %v251
      %v351 = vsel %vm347, %v334, %v253
      %v353 = vsel %vm347, %v336, %v255
      %v355 = vsel %vm347, %v338, %v257
      %v357 = vsel %vm347, %v340, %v259
      %v359 = vsel %vm347, %v342, %v261
      %v361 = vsel %vm347, %v344, %v263
      %v363 = vsel %vm347, %v346, %v265
      %vm364 = vcmask 654336
      %v366 = vsel %vm364, %v349, %v267
      %v368 = vsel %vm364, %v351, %v269
      %v370 = vsel %vm364, %v353, %v271
      %v372 = vsel %vm364, %v355, %v273
      %v374 = vsel %vm364, %v357, %v275
      %v376 = vsel %vm364, %v359, %v277
      %v378 = vsel %vm364, %v361, %v279
      %v379 = vsel %vm364, %v363, %v279
      %vm380 = vcmask 785408
      %v382 = vsel %vm380, %v366, %v281
      %v384 = vsel %vm380, %v368, %v283
      %v386 = vsel %vm380, %v370, %v285
      %v388 = vsel %vm380, %v372, %v287
      %v390 = vsel %vm380, %v374, %v289
      %v392 = vsel %vm380, %v376, %v291
      %v393 = vsel %vm380, %v378, %v291
      %v394 = vsel %vm380, %v379, %v291
      %v396 = vlaneseq
      %v397 = vshrl.u32 %v396, 7
      %v398 = vsub.s32 0, %v397
      %v399 = vrot.slane %v194, %v398
      %v409 = vunpack.c.l.b16 %v382
      %v410 = vunpack.c.l.b16 %v384
      %v411 = vunpack.c.l.b16 %v386
      %v412 = vunpack.c.l.b16 %v388
      %v413 = vunpack.c.l.b16 %v390
      %v414 = vunpack.c.l.b16 %v392
      %v415 = vunpack.c.l.b16 %v393
      %v416 = vunpack.c.l.b16 %v394
      %v417 = vpack.c.b16 %v410, %v409
      %v418 = vpack.c.b16 %v412, %v411
      %v419 = vpack.c.b16 %v414, %v413
      %v420 = vpack.c.b16 %v416, %v415
      %v435 = vunpack.c.l.b16 %v180
      %v436 = vunpack.c.l.b16 %v181
      %v437 = vunpack.c.l.b16 %v182
      %v438 = vunpack.c.l.b16 %v183
      %v439 = vunpack.c.l.b16 %v184
      %v440 = vunpack.c.l.b16 %v185
      %v441 = vunpack.c.l.b16 %v186
      %v442 = vunpack.c.l.b16 %v187
      %v443 = vunpack.c.l.b16 %v188
      %v444 = vunpack.c.l.b16 %v189
      %v445 = vunpack.c.l.b16 %v190
      %v446 = vunpack.c.l.b16 %v191
      %v447 = vunpack.c.l.b16 %v192
      %v448 = vunpack.c.l.b16 %v193
      %v449 = vpack.c.b16 %v436, %v435
      %v450 = vpack.c.b16 %v438, %v437
      %v451 = vpack.c.b16 %v440, %v439
      %v452 = vpack.c.b16 %v442, %v441
      %v453 = vpack.c.b16 %v444, %v443
      %v454 = vpack.c.b16 %v446, %v445
      %v455 = vpack.c.b16 %v448, %v447
      %vm463 = vcmask 916480
      %v465 = vsel %vm463, %v417, 0
      %v468 = vsel %vm463, %v418, 0
      %v471 = vsel %vm463, %v419, 0
      %v474 = vsel %vm463, %v420, 0
      %476 = vmatprep.subr.bf16.mxu0 0
      %477 = vmatpush1.bf16.msra.mxu0 %v449
      %478 = vmatprep.subr.bf16.mxu0 0
      %479 = vmatpush1.bf16.msra.mxu0 %v450
      %480 = vmatprep.subr.bf16.mxu0 0
      %481 = vmatpush1.bf16.msra.mxu0 %v451
      %482 = vmatprep.subr.bf16.mxu0 0
      %483 = vmatpush1.bf16.msra.mxu0 %v452
      %484 = vmatprep.subr.bf16.mxu0 0
      %485 = vmatpush1.bf16.msra.mxu0 %v453
      %486 = vmatprep.subr.bf16.mxu0 0
      %487 = vmatpush1.bf16.msra.mxu0 %v454
      %488 = vmatprep.subr.bf16.mxu0 0
      %489 = vmatpush1.bf16.msra.mxu0 %v455
      %490 = vmatprep.subr.bf16.mxu0 0
      %491 = vmatpush1.bf16.msra.mxu0 0
      %492 = vmatprep.subr.bf16.mxu0 0
      %493 = vmatpush1.bf16.msra.mxu0 0
      %494 = vmatprep.subr.bf16.mxu0 0
      %495 = vmatpush1.bf16.msra.mxu0 0
      %496 = vmatprep.subr.bf16.mxu0 0
      %497 = vmatpush1.bf16.msra.mxu0 0
      %498 = vmatprep.subr.bf16.mxu0 0
      %499 = vmatpush1.bf16.msra.mxu0 0
      %500 = vmatprep.subr.bf16.mxu0 0
      %501 = vmatpush1.bf16.msra.mxu0 0
      %502 = vmatprep.subr.bf16.mxu0 0
      %503 = vmatpush1.bf16.msra.mxu0 0
      %504 = vmatprep.subr.bf16.mxu0 0
      %505 = vmatpush1.bf16.msra.mxu0 0
      %506 = vmatprep.subr.bf16.mxu0 0
      %507 = vmatpush1.bf16.msra.mxu0 0
      %508 = vmatprep.mubr.bf16.mxu0 0
      %509 = vmatmul.mubr.bf16.gmra.mrb[0].mxu0 %v465
      %v510 = vpop.f32.mrb[0].mxu0
      %v511 = vadd.f32 %v399, %v510
      %v512 = vpop.f32.mrb[0].mxu0
      %v513 = vpop.f32.mrb[0].mxu0
      %v514 = vadd.f32 %v399, %v513
      %v515 = vpop.f32.mrb[0].mxu0
      %516 = vmatprep.mubr.bf16.mxu0 0
      %517 = vmatmul.mubr.bf16.gmra.mrb[0].mxu0 %v468
      %v518 = vpop.f32.mrb[0].mxu0
      %v519 = vadd.f32 %v399, %v518
      %v520 = vpop.f32.mrb[0].mxu0
      %v521 = vpop.f32.mrb[0].mxu0
      %v522 = vadd.f32 %v399, %v521
      %v523 = vpop.f32.mrb[0].mxu0
      %524 = vmatprep.mubr.bf16.mxu0 0
      %525 = vmatmul.mubr.bf16.gmra.mrb[0].mxu0 %v471
      %v526 = vpop.f32.mrb[0].mxu0
      %v527 = vadd.f32 %v399, %v526
      %v528 = vpop.f32.mrb[0].mxu0
      %v529 = vpop.f32.mrb[0].mxu0
      %v530 = vadd.f32 %v399, %v529
      %v531 = vpop.f32.mrb[0].mxu0
      %532 = vmatprep.mubr.bf16.mxu0 0
      %533 = vmatmul.mubr.bf16.gmra.mrb[0].mxu0 %v474
      %v534 = vpop.f32.mrb[0].mxu0
      %v535 = vadd.f32 %v399, %v534
      %v536 = vpop.f32.mrb[0].mxu0
      %v537 = vpop.f32.mrb[0].mxu0
      %v538 = vadd.f32 %v399, %v537
      %v539 = vpop.f32.mrb[0].mxu0
      %540 = vdwg.mxu0
      %v541 = vmax.f32 %v511, 0.0
      %v542 = vmax.f32 %v514, 0.0
      %v543 = vmax.f32 %v519, 0.0
      %v544 = vmax.f32 %v522, 0.0
      %v545 = vmax.f32 %v527, 0.0
      %v546 = vmax.f32 %v530, 0.0
      %v547 = vmax.f32 %v535, 0.0
      %v548 = vmax.f32 %v538, 0.0
      %v549 = vpack.c.bf16 %v541, %v541
      %v550 = vpack.c.bf16 %v542, %v542
      %v551 = vpack.c.bf16 %v543, %v543
      %v552 = vpack.c.bf16 %v544, %v544
      %v553 = vpack.c.bf16 %v545, %v545
      %v554 = vpack.c.bf16 %v546, %v546
      %v555 = vpack.c.bf16 %v547, %v547
      %v556 = vpack.c.bf16 %v548, %v548
      %vm557 = vcmask 125952
      %558 = vst.msk [vmem:[%s170] sm:$0xf] %vm557, %v549
      %559 = vst.msk [vmem:[%s170 + $0x4] sm:$0xf] %vm557, %v550
      %560 = vst.msk [vmem:[%s170 + $0x8] sm:$0xf] %vm557, %v551
      %561 = vst.msk [vmem:[%s170 + $0xc] sm:$0xf] %vm557, %v552
      %562 = vst.msk [vmem:[%s170 + $0x10] sm:$0xf] %vm557, %v553
      %563 = vst.msk [vmem:[%s170 + $0x14] sm:$0xf] %vm557, %v554
      %564 = vst.msk [vmem:[%s170 + $0x18] sm:$0xf] %vm557, %v555
      %565 = vst.msk [vmem:[%s170 + $0x1c] sm:$0xf] %vm557, %v556
      %p566 = scmp.lt.s32.totalorder %s14, 1
      %s567 = scalar_select %p566, %s14, 1
      %s568 = smul.addr %s567, 8
      %s569 = smul.addr %s568, 4
      %s570 = scalar_lea.vmem %s3, %s569
      // Predicated region
      $region33: #{inception_c_forward.8} parent=31 // pred_check
        %p571 = pneg %p100
      $region34: #{inception_c_forward.8} parent=31 // pred_check_branch
        %573 = sbr.rel (%p571) target = $region36
      $region35: #{inception_c_forward.8} parent=31 // pred_region
        _
      $region36: #{inception_c_forward.8} parent=31 // pred_fallthru
        _
    $region32: #{inception_c_forward.8} parent=5 // pred_fallthru
      _
    %p574 = scmp.le.s32.totalorder 2, %s9
    // Predicated region
    $region37: #{inception_c_forward.8} parent=5 // pred_check
      %p575 = pneg %p574
    $region38: #{inception_c_forward.8} parent=5 // pred_check_branch
      %577 = sbr.rel (%p575) target = $region40
    $region39: #{inception_c_forward.8} parent=5 // pred_region
      %s578 = ssub.s32 %s9, 2
      // Predicated region
      $region41: #{inception_c_forward.8} parent=39 // pred_check
        %p579 = pneg %p106
      $region42: #{inception_c_forward.8} parent=39 // pred_check_branch
        %581 = sbr.rel (%p579) target = $region44
      $region43: #{inception_c_forward.8} parent=39 // pred_region
        %p582 = scmp.lt.s32.totalorder %s15, 1
        %s583 = scalar_select %p582, %s15, 1
        %s584 = smul.addr %s583, 8
        %s585 = smul.addr %s584, 4
        %s586 = scalar_lea.vmem %s3, %s585
      $region44: #{inception_c_forward.8} parent=39 // pred_fallthru
        _
    $region40: #{inception_c_forward.8} parent=5 // pred_fallthru
      _
  $region6: #{inception_c_forward.8} parent=0 // loop_footer
    %s13 = sadd.s32 1, %s9
  $region7: #{inception_c_forward.8} parent=0 // loop_footer_branch
    %8 = sbr.rel target = $region3
  $region8: #{inception_c_forward.8} parent=0 // loop_exit
    _

// kernel: inception_c_forward.7
$region0: #{inception_c_forward.7}
  #allocation0 [shape = 'u32[]', space=smem, size = 0x4, offset = 0x4, fixed_abs, tag = 'smem constant byte address 0x4 - core index']
  #allocation1 [shape = 'u32[144,128]{1,0:T(1,128)}', space=vmem, size = 0x12000, scoped, tag = 'internal scratch']
  %s0 = inlined_call_operand.vmem [shape: bf16[2,8,8,16], index: 0, kind: input, shape index: {}]
  %s1 = inlined_call_operand.vmem [shape: bf16[112,16], index: 1, kind: input, shape index: {}]
  %s2 = inlined_call_operand.vmem [shape: f32[1,16], index: 2, kind: input, shape index: {}]
  %s3 = inlined_call_operand.vmem [shape: bf16[2,8,8,16], index: 3, kind: output, shape index: {}]
  %s4 = sld [smem:[#allocation0]]
  $region45: #{inception_c_forward.7} parent=0
    _
  %s6 = ssub.s32 1, %s4
  %s7 = scalar_select 0, %s6, %s4
  loop: start=0, step=1, limit=4
  $region2: #{inception_c_forward.7} parent=0 // loop_pre_header
    _
  $region3: #{inception_c_forward.7} parent=0 // loop_header
    %s9 = sphi 0, %s13
    %p10 = scmp.ge.s32.totalorder %s9, 4
    %s19 = sphi 0, %s21
    %s22 = sphi 0, %s19
    %s23 = sphi 0, %s22
    %s39 = sphi 0, %s23
    %s43 = sphi 0, %s43
    %s45 = sphi 0, %s43
    %s46 = sphi 0, %s45
    %s60 = sphi 0, %s46
    %s64 = sphi 0, %s64
    %s66 = sphi 0, %s64
    %s67 = sphi 0, %s66
    %s81 = sphi 0, %s67
    %s87 = sphi 0, %s89
    %s90 = sphi 0, %s87
    %s91 = sphi 0, %s90
    %s107 = sphi 0, %s91
  $region4: #{inception_c_forward.7} parent=0 // loop_header_branch
    %12 = sbr.rel (%p10) target = $region8
  $region5: #{inception_c_forward.7} parent=0 // loop_body
    %s14 = ssub.s32 %s9, 1
    %s15 = ssub.s32 %s9, 2
    %s16 = sadd.s32 %s9, 1
    %s17 = ssub.s32 %s9, %s16
    %p18 = scmp.eq.s32.totalorder %s17, 0
    %s20 = sadd.s32 %s19, 1
    %s21 = scalar_select %p18, %s19, %s20
    %p24 = pneg %p18
    %p25 = scmp.eq.s32.totalorder %s9, 1
    %p26 = por %p24, %p25
    %p27 = scmp.ne.s32.totalorder %s19, %s22
    %p28 = scmp.eq.s32.totalorder %s9, 0
    %p29 = por %p27, %p28
    %p30 = scmp.ne.s32.totalorder %s19, %s22
    %p31 = scmp.eq.s32.totalorder %s14, 1
    %p32 = por %p30, %p31
    %p33 = scmp.ne.s32.totalorder %s22, %s23
    %p34 = scmp.eq.s32.totalorder %s14, 0
    %p35 = por %p33, %p34
    %p36 = scmp.ne.s32.totalorder %s22, %s23
    %p37 = scmp.eq.s32.totalorder %s15, 1
    %p38 = por %p36, %p37
    %p40 = scmp.ne.s32.totalorder %s23, %s39
    %p41 = scmp.eq.s32.totalorder %s15, 0
    %p42 = por %p40, %p41
    %s44 = sadd.s32 %s43, 1
    %p47 = scmp.eq.s32.totalorder %s9, 1
    %p48 = scmp.ne.s32.totalorder %s43, %s45
    %p49 = scmp.eq.s32.totalorder %s9, 0
    %p50 = por %p48, %p49
    %p51 = scmp.ne.s32.totalorder %s43, %s45
    %p52 = scmp.eq.s32.totalorder %s14, 1
    %p53 = por %p51, %p52
    %p54 = scmp.ne.s32.totalorder %s45, %s46
    %p55 = scmp.eq.s32.totalorder %s14, 0
    %p56 = por %p54, %p55
    %p57 = scmp.ne.s32.totalorder %s45, %s46
    %p58 = scmp.eq.s32.totalorder %s15, 1
    %p59 = por %p57, %p58
    %p61 = scmp.ne.s32.totalorder %s46, %s60
    %p62 = scmp.eq.s32.totalorder %s15, 0
    %p63 = por %p61, %p62
    %s65 = sadd.s32 %s64, 1
    %p68 = scmp.eq.s32.totalorder %s9, 1
    %p69 = scmp.ne.s32.totalorder %s64, %s66
    %p70 = scmp.eq.s32.totalorder %s9, 0
    %p71 = por %p69, %p70
    %p72 = scmp.ne.s32.totalorder %s64, %s66
    %p73 = scmp.eq.s32.totalorder %s14, 1
    %p74 = por %p72, %p73
    %p75 = scmp.ne.s32.totalorder %s66, %s67
    %p76 = scmp.eq.s32.totalorder %s14, 0
    %p77 = por %p75, %p76
    %p78 = scmp.ne.s32.totalorder %s66, %s67
    %p79 = scmp.eq.s32.totalorder %s15, 1
    %p80 = por %p78, %p79
    %p82 = scmp.ne.s32.totalorder %s67, %s81
    %p83 = scmp.eq.s32.totalorder %s15, 0
    %p84 = por %p82, %p83
    %s85 = ssub.s32 %s9, %s16
    %p86 = scmp.eq.s32.totalorder %s85, 0
    %s88 = sadd.s32 %s87, 1
    %s89 = scalar_select %p86, %s87, %s88
    %p92 = pneg %p86
    %p93 = scmp.eq.s32.totalorder %s9, 1
    %p94 = por %p92, %p93
    %p95 = scmp.ne.s32.totalorder %s87, %s90
    %p96 = scmp.eq.s32.totalorder %s9, 0
    %p97 = por %p95, %p96
    %p98 = scmp.ne.s32.totalorder %s87, %s90
    %p99 = scmp.eq.s32.totalorder %s14, 1
    %p100 = por %p98, %p99
    %p101 = scmp.ne.s32.totalorder %s90, %s91
    %p102 = scmp.eq.s32.totalorder %s14, 0
    %p103 = por %p101, %p102
    %p104 = scmp.ne.s32.totalorder %s90, %s91
    %p105 = scmp.eq.s32.totalorder %s15, 1
    %p106 = por %p104, %p105
    %p108 = scmp.ne.s32.totalorder %s91, %s107
    %p109 = scmp.eq.s32.totalorder %s15, 0
    %p110 = por %p108, %p109
    %p111 = scmp.le.s32.totalorder 1, %s9
    %p112 = scmp.lt.s32.totalorder %s9, 3
    %p113 = pnand %p111, %p112
    %p114 = pneg %p113
    // Predicated region
    $region9: #{inception_c_forward.7} parent=5 // pred_check
      _
    $region10: #{inception_c_forward.7} parent=5 // pred_check_branch
      %116 = sbr.rel (%p113) target = $region12
    $region11: #{inception_c_forward.7} parent=5 // pred_region
      %s117 = ssub.s32 %s9, 1
      // Predicated region
      $region13: #{inception_c_forward.7} parent=11 // pred_check
        %p118 = pneg %p56
      $region14: #{inception_c_forward.7} parent=11 // pred_check_branch
        %120 = sbr.rel (%p118) target = $region16
      $region15: #{inception_c_forward.7} parent=11 // pred_region
        _
      $region16: #{inception_c_forward.7} parent=11 // pred_fallthru
        _
      // Predicated region
      $region17: #{inception_c_forward.7} parent=11 // pred_check
        %p121 = pneg %p77
      $region18: #{inception_c_forward.7} parent=11 // pred_check_branch
        %123 = sbr.rel (%p121) target = $region20
      $region19: #{inception_c_forward.7} parent=11 // pred_region
        _
      $region20: #{inception_c_forward.7} parent=11 // pred_fallthru
        _
    $region12: #{inception_c_forward.7} parent=5 // pred_fallthru
      _
    %p124 = scmp.lt.s32.totalorder %s9, 2
    // Predicated region
    $region21: #{inception_c_forward.7} parent=5 // pred_check
      %p125 = pneg %p124
    $region22: #{inception_c_forward.7} parent=5 // pred_check_branch
      %127 = sbr.rel (%p125) target = $region24
    $region23: #{inception_c_forward.7} parent=5 // pred_region
      // Predicated region
      $region25: #{inception_c_forward.7} parent=23 // pred_check
        %p128 = pneg %p29
      $region26: #{inception_c_forward.7} parent=23 // pred_check_branch
        %130 = sbr.rel (%p128) target = $region28
      $region27: #{inception_c_forward.7} parent=23 // pred_region
        %p131 = scmp.lt.s32.totalorder %s9, 1
        %s132 = scalar_select %p131, %s9, 1
        %s133 = smul.addr %s132, 8
        %s134 = smul.addr %s133, 4
        %s135 = scalar_lea.vmem %s0, %s134
      $region28: #{inception_c_forward.7} parent=23 // pred_fallthru
        _
    $region24: #{inception_c_forward.7} parent=5 // pred_fallthru
      _
    %p136 = scmp.le.s32.totalorder 1, %s9
    %p137 = scmp.lt.s32.totalorder %s9, 3
    %p138 = pnand %p136, %p137
    %p139 = pneg %p138
    // Predicated region
    $region29: #{inception_c_forward.7} parent=5 // pred_check
      _
    $region30: #{inception_c_forward.7} parent=5 // pred_check_branch
      %141 = sbr.rel (%p138) target = $region32
    $region31: #{inception_c_forward.7} parent=5 // pred_region
      %s142 = ssub.s32 %s9, 1
      %p143 = scmp.lt.s32.totalorder %s14, 1
      %s144 = scalar_select %p143, %s14, 1
      %s145 = smul.addr %s144, 8
      %s146 = smul.addr %s145, 4
      %s147 = scalar_lea.vmem %s0, %s146
      %p148 = pneg %p35
      %p149 = pneg %p32
      %p150 = pneg %p56
      %p151 = pneg %p53
      %p152 = pneg %p77
      %p153 = pneg %p74
      %p154 = pneg %p103
      %p155 = pneg %p100
      %p156 = scmp.lt.s32.totalorder %s14, 1
      %s157 = scalar_select %p156, %s14, 1
      %s158 = smul.addr %s157, 8
      %s159 = smul.addr %s158, 4
      %s160 = scalar_lea.vmem %s3, %s159
      %p161 = scmp.lt.s32.totalorder %s14, 1
      %s162 = scalar_select %p161, %s14, 1
      %s163 = smul.addr %s162, 8
      %s164 = smul.addr %s163, 4
      %s165 = scalar_lea.vmem %s0, %s164
      %p166 = scmp.lt.s32.totalorder %s14, 1
      %s167 = scalar_select %p166, %s14, 1
      %s168 = smul.addr %s167, 8
      %s169 = smul.addr %s168, 4
      %s170 = scalar_lea.vmem %s3, %s169
      %v172 = vld [vmem:[%s165] sm:$0xf]
      %v173 = vld [vmem:[%s165 + $0x4] sm:$0xf]
      %v174 = vld [vmem:[%s165 + $0x8] sm:$0xf]
      %v175 = vld [vmem:[%s165 + $0xc] sm:$0xf]
      %v176 = vld [vmem:[%s165 + $0x10] sm:$0xf]
      %v177 = vld [vmem:[%s165 + $0x14] sm:$0xf]
      %v178 = vld [vmem:[%s165 + $0x18] sm:$0xf]
      %v179 = vld [vmem:[%s165 + $0x1c] sm:$0xf]
      %v180 = vld [vmem:[%s1] sm:$0xf]
      %v181 = vld [vmem:[%s1 + $0x4] sm:$0xf]
      %v182 = vld [vmem:[%s1 + $0x8] sm:$0xf]
      %v183 = vld [vmem:[%s1 + $0xc] sm:$0xf]
      %v184 = vld [vmem:[%s1 + $0x10] sm:$0xf]
      %v185 = vld [vmem:[%s1 + $0x14] sm:$0xf]
      %v186 = vld [vmem:[%s1 + $0x18] sm:$0xf]
      %v187 = vld [vmem:[%s1 + $0x1c] sm:$0xf]
      %v188 = vld [vmem:[%s1 + $0x20] sm:$0xf]
      %v189 = vld [vmem:[%s1 + $0x24] sm:$0xf]
      %v190 = vld [vmem:[%s1 + $0x28] sm:$0xf]
      %v191 = vld [vmem:[%s1 + $0x2c] sm:$0xf]
      %v192 = vld [vmem:[%s1 + $0x30] sm:$0xf]
      %v193 = vld [vmem:[%s1 + $0x34] sm:$0xf]
      %v194 = vld [vmem:[%s2] sm:$0x1]
      %v203 = vunpack.c.l.b16 %v172
      %v204 = vunpack.c.l.b16 %v173
      %v205 = vunpack.c.l.b16 %v174
      %v206 = vunpack.c.l.b16 %v175
      %v207 = vunpack.c.l.b16 %v176
      %v208 = vunpack.c.l.b16 %v177
      %v209 = vunpack.c.l.b16 %v178
      %v210 = vunpack.c.l.b16 %v179
      %v211 = vpack.c.b16 %v203, %v203
      %v212 = vpack.c.b16 %v204, %v204
      %v213 = vpack.c.b16 %v205, %v205
      %v214 = vpack.c.b16 %v206, %v206
      %v215 = vpack.c.b16 %v207, %v207
      %v216 = vpack.c.b16 %v208, %v208
      %v217 = vpack.c.b16 %v209, %v209
      %v218 = vpack.c.b16 %v210, %v210
      %v220 = vshrl.u32 %v211, 16
      %v222 = vrot.slane %v220, 6
      %v223 = vshll.u32 %v211, 16
      %v225 = vrot.slane %v223, 7
      %v226 = vor.u32 %v222, %v225
      %v228 = vshrl.u32 %v212, 16
      %v230 = vrot.slane %v228, 6
      %v231 = vshll.u32 %v212, 16
      %v233 = vrot.slane %v231, 7
      %v234 = vor.u32 %v230, %v233
      %v236 = vshrl.u32 %v213, 16
      %v238 = vrot.slane %v236, 6
      %v239 = vshll.u32 %v213, 16
      %v241 = vrot.slane %v239, 7
      %v242 = vor.u32 %v238, %v241
      %v244 = vshrl.u32 %v214, 16
      %v246 = vrot.slane %v244, 6
      %v247 = vshll.u32 %v214, 16
      %v249 = vrot.slane %v247, 7
      %v250 = vor.u32 %v246, %v249
      %v252 = vshrl.u32 %v215, 16
      %v254 = vrot.slane %v252, 6
      %v255 = vshll.u32 %v215, 16
      %v257 = vrot.slane %v255, 7
      %v258 = vor.u32 %v254, %v257
      %v260 = vshrl.u32 %v216, 16
      %v262 = vrot.slane %v260, 6
      %v263 = vshll.u32 %v216, 16
      %v265 = vrot.slane %v263, 7
      %v266 = vor.u32 %v262, %v265
      %v268 = vshrl.u32 %v217, 16
      %v270 = vrot.slane %v268, 6
      %v271 = vshll.u32 %v217, 16
      %v273 = vrot.slane %v271, 7
      %v274 = vor.u32 %v270, %v273
      %v276 = vshrl.u32 %v218, 16
      %v278 = vrot.slane %v276, 6
      %v279 = vshll.u32 %v218, 16
      %v281 = vrot.slane %v279, 7
      %v282 = vor.u32 %v278, %v281
      %vm291 = vcmask 1041408
      %vm292 = vsmask.f32 1280
      %vm293 = vmand %vm291, %vm292
      %v294 = vsel %vm293, 0, %v226
      %v295 = vsel %vm293, 0, %v234
      %v296 = vsel %vm293, 0, %v242
      %v297 = vsel %vm293, 0, %v250
      %v298 = vsel %vm293, 0, %v258
      %v299 = vsel %vm293, 0, %v266
      %v300 = vsel %vm293, 0, %v274
      %v301 = vsel %vm293, 0, %v282
      %vm302 = vcmask 1045504
      %vm303 = vsmask.f32 5376
      %vm304 = vmand %vm302, %vm303
      %v305 = vsel %vm304, %v294, 0
      %v306 = vsel %vm304, %v295, 0
      %v307 = vsel %vm304, %v296, 0
      %v308 = vsel %vm304, %v297, 0
      %v309 = vsel %vm304, %v298, 0
      %v310 = vsel %vm304, %v299, 0
      %v311 = vsel %vm304, %v300, 0
      %v312 = vsel %vm304, %v301, 0
      %v314 = vshrl.u32 %v305, 16
      %v316 = vshll.u32 %v305, 16
      %v318 = vrot.slane %v316, 1
      %v319 = vor.u32 %v314, %v318
      %v321 = vshrl.u32 %v306, 16
      %v323 = vshll.u32 %v306, 16
      %v325 = vrot.slane %v323, 1
      %v326 = vor.u32 %v321, %v325
      %v328 = vshrl.u32 %v307, 16
      %v330 = vshll.u32 %v307, 16
      %v332 = vrot.slane %v330, 1
      %v333 = vor.u32 %v328, %v332
      %v335 = vshrl.u32 %v308, 16
      %v337 = vshll.u32 %v308, 16
      %v339 = vrot.slane %v337, 1
      %v340 = vor.u32 %v335, %v339
      %v342 = vshrl.u32 %v309, 16
      %v344 = vshll.u32 %v309, 16
      %v346 = vrot.slane %v344, 1
      %v347 = vor.u32 %v342, %v346
      %v349 = vshrl.u32 %v310, 16
      %v351 = vshll.u32 %v310, 16
      %v353 = vrot.slane %v351, 1
      %v354 = vor.u32 %v349, %v353
      %v356 = vshrl.u32 %v311, 16
      %v358 = vshll.u32 %v311, 16
      %v360 = vrot.slane %v358, 1
      %v361 = vor.u32 %v356, %v360
      %v363 = vshrl.u32 %v312, 16
      %v365 = vshll.u32 %v312, 16
      %v367 = vrot.slane %v365, 1
      %v368 = vor.u32 %v363, %v367
      %369 = vrot.lane.b32.xlu0 %v319, 16
      %v370 = vpop.permute.xlu0 %369
      %371 = vrot.lane.b32.xlu0 %v326, 16
      %v372 = vpop.permute.xlu0 %371
      %373 = vrot.lane.b32.xlu0 %v333, 16
      %v374 = vpop.permute.xlu0 %373
      %375 = vrot.lane.b32.xlu0 %v340, 16
      %v376 = vpop.permute.xlu0 %375
      %377 = vrot.lane.b32.xlu0 %v347, 16
      %v378 = vpop.permute.xlu0 %377
      %379 = vrot.lane.b32.xlu0 %v354, 16
      %v380 = vpop.permute.xlu0 %379
      %381 = vrot.lane.b32.xlu0 %v361, 16
      %v382 = vpop.permute.xlu0 %381
      %383 = vrot.lane.b32.xlu0 %v368, 16
      %v384 = vpop.permute.xlu0 %383
      %v393 = vrot.slane %v305, 1
      %v394 = vrot.slane %v306, 1
      %v395 = vrot.slane %v307, 1
      %v396 = vrot.slane %v308, 1
      %v397 = vrot.slane %v309, 1
      %v398 = vrot.slane %v310, 1
      %v399 = vrot.slane %v311, 1
      %v400 = vrot.slane %v312, 1
      %401 = vrot.lane.b32.xlu0 %v393, 32
      %v402 = vpop.permute.xlu0 %401
      %403 = vrot.lane.b32.xlu0 %v394, 32
      %v404 = vpop.permute.xlu0 %403
      %405 = vrot.lane.b32.xlu0 %v395, 32
      %v406 = vpop.permute.xlu0 %405
      %407 = vrot.lane.b32.xlu0 %v396, 32
      %v408 = vpop.permute.xlu0 %407
      %409 = vrot.lane.b32.xlu0 %v397, 32
      %v410 = vpop.permute.xlu0 %409
      %411 = vrot.lane.b32.xlu0 %v398, 32
      %v412 = vpop.permute.xlu0 %411
      %413 = vrot.lane.b32.xlu0 %v399, 32
      %v414 = vpop.permute.xlu0 %413
      %415 = vrot.lane.b32.xlu0 %v400, 32
      %v416 = vpop.permute.xlu0 %415
      %v417 = vrot.slane %v314, 1
      %v418 = vrot.slane %v316, 2
      %v419 = vor.u32 %v417, %v418
      %v420 = vrot.slane %v321, 1
      %v421 = vrot.slane %v323, 2
      %v422 = vor.u32 %v420, %v421
      %v423 = vrot.slane %v328, 1
      %v424 = vrot.slane %v330, 2
      %v425 = vor.u32 %v423, %v424
      %v426 = vrot.slane %v335, 1
      %v427 = vrot.slane %v337, 2
      %v428 = vor.u32 %v426, %v427
      %v429 = vrot.slane %v342, 1
      %v430 = vrot.slane %v344, 2
      %v431 = vor.u32 %v429, %v430
      %v432 = vrot.slane %v349, 1
      %v433 = vrot.slane %v351, 2
      %v434 = vor.u32 %v432, %v433
      %v435 = vrot.slane %v356, 1
      %v436 = vrot.slane %v358, 2
      %v437 = vor.u32 %v435, %v436
      %v438 = vrot.slane %v363, 1
      %v439 = vrot.slane %v365, 2
      %v440 = vor.u32 %v438, %v439
      %441 = vrot.lane.b32.xlu0 %v419, 48
      %v442 = vpop.permute.xlu0 %441
      %443 = vrot.lane.b32.xlu0 %v422, 48
      %v444 = vpop.permute.xlu0 %443
      %445 = vrot.lane.b32.xlu0 %v425, 48
      %v446 = vpop.permute.xlu0 %445
      %447 = vrot.lane.b32.xlu0 %v428, 48
      %v448 = vpop.permute.xlu0 %447
      %449 = vrot.lane.b32.xlu0 %v431, 48
      %v450 = vpop.permute.xlu0 %449
      %451 = vrot.lane.b32.xlu0 %v434, 48
      %v452 = vpop.permute.xlu0 %451
      %453 = vrot.lane.b32.xlu0 %v437, 48
      %v454 = vpop.permute.xlu0 %453
      %455 = vrot.lane.b32.xlu0 %v440, 48
      %v456 = vpop.permute.xlu0 %455
      %v457 = vrot.slane %v305, 2
      %v458 = vrot.slane %v306, 2
      %v459 = vrot.slane %v307, 2
      %v460 = vrot.slane %v308, 2
      %v461 = vrot.slane %v309, 2
      %v462 = vrot.slane %v310, 2
      %v463 = vrot.slane %v311, 2
      %v464 = vrot.slane %v312, 2
      %465 = vrot.lane.b32.xlu0 %v457, 64
      %v466 = vpop.permute.xlu0 %465
      %467 = vrot.lane.b32.xlu0 %v458, 64
      %v468 = vpop.permute.xlu0 %467
      %469 = vrot.lane.b32.xlu0 %v459, 64
      %v470 = vpop.permute.xlu0 %469
      %471 = vrot.lane.b32.xlu0 %v460, 64
      %v472 = vpop.permute.xlu0 %471
      %473 = vrot.lane.b32.xlu0 %v461, 64
      %v474 = vpop.permute.xlu0 %473
      %475 = vrot.lane.b32.xlu0 %v462, 64
      %v476 = vpop.permute.xlu0 %475
      %477 = vrot.lane.b32.xlu0 %v463, 64
      %v478 = vpop.permute.xlu0 %477
      %479 = vrot.lane.b32.xlu0 %v464, 64
      %v480 = vpop.permute.xlu0 %479
      %v481 = vrot.slane %v314, 2
      %v482 = vrot.slane %v316, 3
      %v483 = vor.u32 %v481, %v482
      %v484 = vrot.slane %v321, 2
      %v485 = vrot.slane %v323, 3
      %v486 = vor.u32 %v484, %v485
      %v487 = vrot.slane %v328, 2
      %v488 = vrot.slane %v330, 3
      %v489 = vor.u32 %v487, %v488
      %v490 = vrot.slane %v335, 2
      %v491 = vrot.slane %v337, 3
      %v492 = vor.u32 %v490, %v491
      %v493 = vrot.slane %v342, 2
      %v494 = vrot.slane %v344, 3
      %v495 = vor.u32 %v493, %v494
      %v496 = vrot.slane %v349, 2
      %v497 = vrot.slane %v351, 3
      %v498 = vor.u32 %v496, %v497
      %v499 = vrot.slane %v356, 2
      %v500 = vrot.slane %v358, 3
      %v501 = vor.u32 %v499, %v500
      %v502 = vrot.slane %v363, 2
      %v503 = vrot.slane %v365, 3
      %v504 = vor.u32 %v502, %v503
      %505 = vrot.lane.b32.xlu0 %v483, 80
      %v506 = vpop.permute.xlu0 %505
      %507 = vrot.lane.b32.xlu0 %v486, 80
      %v508 = vpop.permute.xlu0 %507
      %509 = vrot.lane.b32.xlu0 %v489, 80
      %v510 = vpop.permute.xlu0 %509
      %511 = vrot.lane.b32.xlu0 %v492, 80
      %v512 = vpop.permute.xlu0 %511
      %513 = vrot.lane.b32.xlu0 %v495, 80
      %v514 = vpop.permute.xlu0 %513
      %515 = vrot.lane.b32.xlu0 %v498, 80
      %v516 = vpop.permute.xlu0 %515
      %517 = vrot.lane.b32.xlu0 %v501, 80
      %v518 = vpop.permute.xlu0 %517
      %519 = vrot.lane.b32.xlu0 %v504, 80
      %v520 = vpop.permute.xlu0 %519
      %v521 = vrot.slane %v305, 3
      %v522 = vrot.slane %v306, 3
      %v523 = vrot.slane %v307, 3
      %v524 = vrot.slane %v308, 3
      %v525 = vrot.slane %v309, 3
      %v526 = vrot.slane %v310, 3
      %v527 = vrot.slane %v311, 3
      %v528 = vrot.slane %v312, 3
      %529 = vrot.lane.b32.xlu0 %v521, 96
      %v530 = vpop.permute.xlu0 %529
      %531 = vrot.lane.b32.xlu0 %v522, 96
      %v532 = vpop.permute.xlu0 %531
      %533 = vrot.lane.b32.xlu0 %v523, 96
      %v534 = vpop.permute.xlu0 %533
      %535 = vrot.lane.b32.xlu0 %v524, 96
      %v536 = vpop.permute.xlu0 %535
      %537 = vrot.lane.b32.xlu0 %v525, 96
      %v538 = vpop.permute.xlu0 %537
      %539 = vrot.lane.b32.xlu0 %v526, 96
      %v540 = vpop.permute.xlu0 %539
      %541 = vrot.lane.b32.xlu0 %v527, 96
      %v542 = vpop.permute.xlu0 %541
      %543 = vrot.lane.b32.xlu0 %v528, 96
      %v544 = vpop.permute.xlu0 %543
      %vm545 = vcmask 130048
      %v547 = vsel %vm545, %v305, %v370
      %v549 = vsel %vm545, %v306, %v372
      %v551 = vsel %vm545, %v307, %v374
      %v553 = vsel %vm545, %v308, %v376
      %v555 = vsel %vm545, %v309, %v378
      %v557 = vsel %vm545, %v310, %v380
      %v559 = vsel %vm545, %v311, %v382
      %v561 = vsel %vm545, %v312, %v384
      %vm562 = vcmask 261120
      %v564 = vsel %vm562, %v547, %v402
      %v566 = vsel %vm562, %v549, %v404
      %v568 = vsel %vm562, %v551, %v406
      %v570 = vsel %vm562, %v553, %v408
      %v572 = vsel %vm562, %v555, %v410
      %v574 = vsel %vm562, %v557, %v412
      %v576 = vsel %vm562, %v559, %v414
      %v578 = vsel %vm562, %v561, %v416
      %vm579 = vcmask 392192
      %v581 = vsel %vm579, %v564, %v442
      %v583 = vsel %vm579, %v566, %v444
      %v585 = vsel %vm579, %v568, %v446
      %v587 = vsel %vm579, %v570, %v448
      %v589 = vsel %vm579, %v572, %v450
      %v591 = vsel %vm579, %v574, %v452
      %v593 = vsel %vm579, %v576, %v454
      %v595 = vsel %vm579, %v578, %v456
      %vm596 = vcmask 523264
      %v598 = vsel %vm596, %v581, %v466
      %v600 = vsel %vm596, %v583, %v468
      %v602 = vsel %vm596, %v585, %v470
      %v604 = vsel %vm596, %v587, %v472
      %v606 = vsel %vm596, %v589, %v474
      %v608 = vsel %vm596, %v591, %v476
      %v610 = vsel %vm596, %v593, %v478
      %v612 = vsel %vm596, %v595, %v480
      %vm613 = vcmask 654336
      %v615 = vsel %vm613, %v598, %v506
      %v617 = vsel %vm613, %v600, %v508
      %v619 = vsel %vm613, %v602, %v510
      %v621 = vsel %vm613, %v604, %v512
      %v623 = vsel %vm613, %v606, %v514
      %v625 = vsel %vm613, %v608, %v516
      %v627 = vsel %vm613, %v610, %v518
      %v629 = vsel %vm613, %v612, %v520
      %vm630 = vcmask 785408
      %v632 = vsel %vm630, %v615, %v530
      %v634 = vsel %vm630, %v617, %v532
      %v636 = vsel %vm630, %v619, %v534
      %v638 = vsel %vm630, %v621, %v536
      %v640 = vsel %vm630, %v623, %v538
      %v642 = vsel %vm630, %v625, %v540
      %v644 = vsel %vm630, %v627, %v542
      %v646 = vsel %vm630, %v629, %v544
      %v648 = vlaneseq
      %v649 = vshrl.u32 %v648, 7
      %v650 = vsub.s32 0, %v649
      %v651 = vrot.slane %v194, %v650
      %v661 = vunpack.c.l.b16 %v632
      %v662 = vunpack.c.l.b16 %v634
      %v663 = vunpack.c.l.b16 %v636
      %v664 = vunpack.c.l.b16 %v638
      %v665 = vunpack.c.l.b16 %v640
      %v666 = vunpack.c.l.b16 %v642
      %v667 = vunpack.c.l.b16 %v644
      %v668 = vunpack.c.l.b16 %v646
      %v669 = vpack.c.b16 %v662, %v661
      %v670 = vpack.c.b16 %v664, %v663
      %v671 = vpack.c.b16 %v666, %v665
      %v672 = vpack.c.b16 %v668, %v667
      %v687 = vunpack.c.l.b16 %v180
      %v688 = vunpack.c.l.b16 %v181
      %v689 = vunpack.c.l.b16 %v182
      %v690 = vunpack.c.l.b16 %v183
      %v691 = vunpack.c.l.b16 %v184
      %v692 = vunpack.c.l.b16 %v185
      %v693 = vunpack.c.l.b16 %v186
      %v694 = vunpack.c.l.b16 %v187
      %v695 = vunpack.c.l.b16 %v188
      %v696 = vunpack.c.l.b16 %v189
      %v697 = vunpack.c.l.b16 %v190
      %v698 = vunpack.c.l.b16 %v191
      %v699 = vunpack.c.l.b16 %v192
      %v700 = vunpack.c.l.b16 %v193
      %v701 = vpack.c.b16 %v688, %v687
      %v702 = vpack.c.b16 %v690, %v689
      %v703 = vpack.c.b16 %v692, %v691
      %v704 = vpack.c.b16 %v694, %v693
      %v705 = vpack.c.b16 %v696, %v695
      %v706 = vpack.c.b16 %v698, %v697
      %v707 = vpack.c.b16 %v700, %v699
      %vm715 = vcmask 916480
      %v717 = vsel %vm715, %v669, 0
      %v720 = vsel %vm715, %v670, 0
      %v723 = vsel %vm715, %v671, 0
      %v726 = vsel %vm715, %v672, 0
      %728 = vmatprep.subr.bf16.mxu0 0
      %729 = vmatpush1.bf16.msra.mxu0 %v701
      %730 = vmatprep.subr.bf16.mxu0 0
      %731 = vmatpush1.bf16.msra.mxu0 %v702
      %732 = vmatprep.subr.bf16.mxu0 0
      %733 = vmatpush1.bf16.msra.mxu0 %v703
      %734 = vmatprep.subr.bf16.mxu0 0
      %735 = vmatpush1.bf16.msra.mxu0 %v704
      %736 = vmatprep.subr.bf16.mxu0 0
      %737 = vmatpush1.bf16.msra.mxu0 %v705
      %738 = vmatprep.subr.bf16.mxu0 0
      %739 = vmatpush1.bf16.msra.mxu0 %v706
      %740 = vmatprep.subr.bf16.mxu0 0
      %741 = vmatpush1.bf16.msra.mxu0 %v707
      %742 = vmatprep.subr.bf16.mxu0 0
      %743 = vmatpush1.bf16.msra.mxu0 0
      %744 = vmatprep.subr.bf16.mxu0 0
      %745 = vmatpush1.bf16.msra.mxu0 0
      %746 = vmatprep.subr.bf16.mxu0 0
      %747 = vmatpush1.bf16.msra.mxu0 0
      %748 = vmatprep.subr.bf16.mxu0 0
      %749 = vmatpush1.bf16.msra.mxu0 0
      %750 = vmatprep.subr.bf16.mxu0 0
      %751 = vmatpush1.bf16.msra.mxu0 0
      %752 = vmatprep.subr.bf16.mxu0 0
      %753 = vmatpush1.bf16.msra.mxu0 0
      %754 = vmatprep.subr.bf16.mxu0 0
      %755 = vmatpush1.bf16.msra.mxu0 0
      %756 = vmatprep.subr.bf16.mxu0 0
      %757 = vmatpush1.bf16.msra.mxu0 0
      %758 = vmatprep.subr.bf16.mxu0 0
      %759 = vmatpush1.bf16.msra.mxu0 0
      %760 = vmatprep.mubr.bf16.mxu0 0
      %761 = vmatmul.mubr.bf16.gmra.mrb[0].mxu0 %v717
      %v762 = vpop.f32.mrb[0].mxu0
      %v763 = vadd.f32 %v651, %v762
      %v764 = vpop.f32.mrb[0].mxu0
      %v765 = vpop.f32.mrb[0].mxu0
      %v766 = vadd.f32 %v651, %v765
      %v767 = vpop.f32.mrb[0].mxu0
      %768 = vmatprep.mubr.bf16.mxu0 0
      %769 = vmatmul.mubr.bf16.gmra.mrb[0].mxu0 %v720
      %v770 = vpop.f32.mrb[0].mxu0
      %v771 = vadd.f32 %v651, %v770
      %v772 = vpop.f32.mrb[0].mxu0
      %v773 = vpop.f32.mrb[0].mxu0
      %v774 = vadd.f32 %v651, %v773
      %v775 = vpop.f32.mrb[0].mxu0
      %776 = vmatprep.mubr.bf16.mxu0 0
      %777 = vmatmul.mubr.bf16.gmra.mrb[0].mxu0 %v723
      %v778 = vpop.f32.mrb[0].mxu0
      %v779 = vadd.f32 %v651, %v778
      %v780 = vpop.f32.mrb[0].mxu0
      %v781 = vpop.f32.mrb[0].mxu0
      %v782 = vadd.f32 %v651, %v781
      %v783 = vpop.f32.mrb[0].mxu0
      %784 = vmatprep.mubr.bf16.mxu0 0
      %785 = vmatmul.mubr.bf16.gmra.mrb[0].mxu0 %v726
      %v786 = vpop.f32.mrb[0].mxu0
      %v787 = vadd.f32 %v651, %v786
      %v788 = vpop.f32.mrb[0].mxu0
      %v789 = vpop.f32.mrb[0].mxu0
      %v790 = vadd.f32 %v651, %v789
      %v791 = vpop.f32.mrb[0].mxu0
      %792 = vdwg.mxu0
      %v793 = vmax.f32 %v763, 0.0
      %v794 = vmax.f32 %v766, 0.0
      %v795 = vmax.f32 %v771, 0.0
      %v796 = vmax.f32 %v774, 0.0
      %v797 = vmax.f32 %v779, 0.0
      %v798 = vmax.f32 %v782, 0.0
      %v799 = vmax.f32 %v787, 0.0
      %v800 = vmax.f32 %v790, 0.0
      %v801 = vpack.c.bf16 %v793, %v793
      %v802 = vpack.c.bf16 %v794, %v794
      %v803 = vpack.c.bf16 %v795, %v795
      %v804 = vpack.c.bf16 %v796, %v796
      %v805 = vpack.c.bf16 %v797, %v797
      %v806 = vpack.c.bf16 %v798, %v798
      %v807 = vpack.c.bf16 %v799, %v799
      %v808 = vpack.c.bf16 %v800, %v800
      %vm809 = vcmask 125952
      %810 = vst.msk [vmem:[%s170] sm:$0xf] %vm809, %v801
      %811 = vst.msk [vmem:[%s170 + $0x4] sm:$0xf] %vm809, %v802
      %812 = vst.msk [vmem:[%s170 + $0x8] sm:$0xf] %vm809, %v803
      %813 = vst.msk [vmem:[%s170 + $0xc] sm:$0xf] %vm809, %v804
      %814 = vst.msk [vmem:[%s170 + $0x10] sm:$0xf] %vm809, %v805
      %815 = vst.msk [vmem:[%s170 + $0x14] sm:$0xf] %vm809, %v806
      %816 = vst.msk [vmem:[%s170 + $0x18] sm:$0xf] %vm809, %v807
      %817 = vst.msk [vmem:[%s170 + $0x1c] sm:$0xf] %vm809, %v808
      %p818 = scmp.lt.s32.totalorder %s14, 1
      %s819 = scalar_select %p818, %s14, 1
      %s820 = smul.addr %s819, 8
      %s821 = smul.addr %s820, 4
      %s822 = scalar_lea.vmem %s3, %s821
      // Predicated region
      $region33: #{inception_c_forward.7} parent=31 // pred_check
        %p823 = pneg %p100
      $region34: #{inception_c_forward.7} parent=31 // pred_check_branch
        %825 = sbr.rel (%p823) target = $region36
      $region35: #{inception_c_forward.7} parent=31 // pred_region
        _
      $region36: #{inception_c_forward.7} parent=31 // pred_fallthru
        _
    $region32: #{inception_c_forward.7} parent=5 // pred_fallthru
      _
    %p826 = scmp.le.s32.totalorder 2, %s9
    // Predicated region
    $region37: #{inception_c_forward.7} parent=5 // pred_check
      %p827 = pneg %p826
    $region38: #{inception_c_forward.7} parent=5 // pred_check_branch
      %829 = sbr.rel (%p827) target = $region40
    $region39: #{inception_c_forward.7} parent=5 // pred_region
      %s830 = ssub.s32 %s9, 2
      // Predicated region
      $region41: #{inception_c_forward.7} parent=39 // pred_check
        %p831 = pneg %p106
      $region42: #{inception_c_forward.7} parent=39 // pred_check_branch
        %833 = sbr.rel (%p831) target = $region44
      $region43: #{inception_c_forward.7} parent=39 // pred_region
        %p834 = scmp.lt.s32.totalorder %s15, 1
        %s835 = scalar_select %p834, %s15, 1
        %s836 = smul.addr %s835, 8
        %s837 = smul.addr %s836, 4
        %s838 = scalar_lea.vmem %s3, %s837
      $region44: #{inception_c_forward.7} parent=39 // pred_fallthru
        _
    $region40: #{inception_c_forward.7} parent=5 // pred_fallthru
      _
  $region6: #{inception_c_forward.7} parent=0 // loop_footer
    %s13 = sadd.s32 1, %s9
  $region7: #{inception_c_forward.7} parent=0 // loop_footer_branch
    %8 = sbr.rel target = $region3
  $region8: #{inception_c_forward.7} parent=0 // loop_exit
    _

// kernel: inception_c_forward.6
$region0: #{inception_c_forward.6}
  #allocation0 [shape = 'u32[]', space=smem, size = 0x4, offset = 0x4, fixed_abs, tag = 'smem constant byte address 0x4 - core index']
  #allocation1 [shape = 'u32[144,128]{1,0:T(1,128)}', space=vmem, size = 0x12000, scoped, tag = 'internal scratch']
  %s0 = inlined_call_operand.vmem [shape: bf16[2,8,8,32], index: 0, kind: input, shape index: {}]
  %s1 = inlined_call_operand.vmem [shape: bf16[32,192], index: 1, kind: input, shape index: {}]
  %s2 = inlined_call_operand.vmem [shape: bf16[32,16], index: 2, kind: input, shape index: {}]
  %s3 = inlined_call_operand.vmem [shape: bf16[32,16], index: 3, kind: input, shape index: {}]
  %s4 = inlined_call_operand.vmem [shape: bf16[32,192], index: 4, kind: input, shape index: {}]
  %s5 = inlined_call_operand.vmem [shape: f32[1,192], index: 5, kind: input, shape index: {}]
  %s6 = inlined_call_operand.vmem [shape: f32[1,16], index: 6, kind: input, shape index: {}]
  %s7 = inlined_call_operand.vmem [shape: f32[1,16], index: 7, kind: input, shape index: {}]
  %s8 = inlined_call_operand.vmem [shape: f32[1,192], index: 8, kind: input, shape index: {}]
  %s9 = inlined_call_operand.vmem [shape: bf16[2,8,8,192], index: 9, kind: output, shape index: {0}]
  %s10 = inlined_call_operand.vmem [shape: bf16[2,8,8,16], index: 10, kind: output, shape index: {1}]
  %s11 = inlined_call_operand.vmem [shape: bf16[2,8,8,16], index: 11, kind: output, shape index: {2}]
  %s12 = inlined_call_operand.vmem [shape: bf16[2,8,8,192], index: 12, kind: output, shape index: {3}]
  %13 = xla_tuple %s9, %s10, %s11, %s12
  %s14 = sld [smem:[#allocation0]]
  $region93: #{inception_c_forward.6} parent=0
    _
  %s16 = ssub.s32 1, %s14
  %s17 = scalar_select 0, %s16, %s14
  loop: start=0, step=1, limit=4
  $region2: #{inception_c_forward.6} parent=0 // loop_pre_header
    _
  $region3: #{inception_c_forward.6} parent=0 // loop_header
    %s19 = sphi 0, %s23
    %p20 = scmp.ge.s32.totalorder %s19, 4
    %s29 = sphi 0, %s31
    %s32 = sphi 0, %s29
    %s33 = sphi 0, %s32
    %s49 = sphi 0, %s33
    %s53 = sphi 0, %s53
    %s55 = sphi 0, %s53
    %s56 = sphi 0, %s55
    %s70 = sphi 0, %s56
    %s74 = sphi 0, %s74
    %s76 = sphi 0, %s74
    %s77 = sphi 0, %s76
    %s91 = sphi 0, %s77
    %s95 = sphi 0, %s95
    %s97 = sphi 0, %s95
    %s98 = sphi 0, %s97
    %s112 = sphi 0, %s98
    %s116 = sphi 0, %s116
    %s118 = sphi 0, %s116
    %s119 = sphi 0, %s118
    %s133 = sphi 0, %s119
    %s137 = sphi 0, %s137
    %s139 = sphi 0, %s137
    %s140 = sphi 0, %s139
    %s154 = sphi 0, %s140
    %s158 = sphi 0, %s158
    %s160 = sphi 0, %s158
    %s161 = sphi 0, %s160
    %s175 = sphi 0, %s161
    %s179 = sphi 0, %s179
    %s181 = sphi 0, %s179
    %s182 = sphi 0, %s181
    %s196 = sphi 0, %s182
    %s200 = sphi 0, %s200
    %s202 = sphi 0, %s200
    %s203 = sphi 0, %s202
    %s217 = sphi 0, %s203
    %s223 = sphi 0, %s225
    %s226 = sphi 0, %s223
    %s227 = sphi 0, %s226
    %s243 = sphi 0, %s227
    %s249 = sphi 0, %s251
    %s252 = sphi 0, %s249
    %s253 = sphi 0, %s252
    %s269 = sphi 0, %s253
    %s275 = sphi 0, %s277
    %s278 = sphi 0, %s275
    %s279 = sphi 0, %s278
    %s295 = sphi 0, %s279
    %s301 = sphi 0, %s303
    %s304 = sphi 0, %s301
    %s305 = sphi 0, %s304
    %s321 = sphi 0, %s305
  $region4: #{inception_c_forward.6} parent=0 // loop_header_branch
    %22 = sbr.rel (%p20) target = $region8
  $region5: #{inception_c_forward.6} parent=0 // loop_body
    %s24 = ssub.s32 %s19, 1
    %s25 = ssub.s32 %s19, 2
    %s26 = sadd.s32 %s19, 1
    %s27 = ssub.s32 %s19, %s26
    %p28 = scmp.eq.s32.totalorder %s27, 0
    %s30 = sadd.s32 %s29, 1
    %s31 = scalar_select %p28, %s29, %s30
    %p34 = pneg %p28
    %p35 = scmp.eq.s32.totalorder %s19, 1
    %p36 = por %p34, %p35
    %p37 = scmp.ne.s32.totalorder %s29, %s32
    %p38 = scmp.eq.s32.totalorder %s19, 0
    %p39 = por %p37, %p38
    %p40 = scmp.ne.s32.totalorder %s29, %s32
    %p41 = scmp.eq.s32.totalorder %s24, 1
    %p42 = por %p40, %p41
    %p43 = scmp.ne.s32.totalorder %s32, %s33
    %p44 = scmp.eq.s32.totalorder %s24, 0
    %p45 = por %p43, %p44
    %p46 = scmp.ne.s32.totalorder %s32, %s33
    %p47 = scmp.eq.s32.totalorder %s25, 1
    %p48 = por %p46, %p47
    %p50 = scmp.ne.s32.totalorder %s33, %s49
    %p51 = scmp.eq.s32.totalorder %s25, 0
    %p52 = por %p50, %p51
    %s54 = sadd.s32 %s53, 1
    %p57 = scmp.eq.s32.totalorder %s19, 1
    %p58 = scmp.ne.s32.totalorder %s53, %s55
    %p59 = scmp.eq.s32.totalorder %s19, 0
    %p60 = por %p58, %p59
    %p61 = scmp.ne.s32.totalorder %s53, %s55
    %p62 = scmp.eq.s32.totalorder %s24, 1
    %p63 = por %p61, %p62
    %p64 = scmp.ne.s32.totalorder %s55, %s56
    %p65 = scmp.eq.s32.totalorder %s24, 0
    %p66 = por %p64, %p65
    %p67 = scmp.ne.s32.totalorder %s55, %s56
    %p68 = scmp.eq.s32.totalorder %s25, 1
    %p69 = por %p67, %p68
    %p71 = scmp.ne.s32.totalorder %s56, %s70
    %p72 = scmp.eq.s32.totalorder %s25, 0
    %p73 = por %p71, %p72
    %s75 = sadd.s32 %s74, 1
    %p78 = scmp.eq.s32.totalorder %s19, 1
    %p79 = scmp.ne.s32.totalorder %s74, %s76
    %p80 = scmp.eq.s32.totalorder %s19, 0
    %p81 = por %p79, %p80
    %p82 = scmp.ne.s32.totalorder %s74, %s76
    %p83 = scmp.eq.s32.totalorder %s24, 1
    %p84 = por %p82, %p83
    %p85 = scmp.ne.s32.totalorder %s76, %s77
    %p86 = scmp.eq.s32.totalorder %s24, 0
    %p87 = por %p85, %p86
    %p88 = scmp.ne.s32.totalorder %s76, %s77
    %p89 = scmp.eq.s32.totalorder %s25, 1
    %p90 = por %p88, %p89
    %p92 = scmp.ne.s32.totalorder %s77, %s91
    %p93 = scmp.eq.s32.totalorder %s25, 0
    %p94 = por %p92, %p93
    %s96 = sadd.s32 %s95, 1
    %p99 = scmp.eq.s32.totalorder %s19, 1
    %p100 = scmp.ne.s32.totalorder %s95, %s97
    %p101 = scmp.eq.s32.totalorder %s19, 0
    %p102 = por %p100, %p101
    %p103 = scmp.ne.s32.totalorder %s95, %s97
    %p104 = scmp.eq.s32.totalorder %s24, 1
    %p105 = por %p103, %p104
    %p106 = scmp.ne.s32.totalorder %s97, %s98
    %p107 = scmp.eq.s32.totalorder %s24, 0
    %p108 = por %p106, %p107
    %p109 = scmp.ne.s32.totalorder %s97, %s98
    %p110 = scmp.eq.s32.totalorder %s25, 1
    %p111 = por %p109, %p110
    %p113 = scmp.ne.s32.totalorder %s98, %s112
    %p114 = scmp.eq.s32.totalorder %s25, 0
    %p115 = por %p113, %p114
    %s117 = sadd.s32 %s116, 1
    %p120 = scmp.eq.s32.totalorder %s19, 1
    %p121 = scmp.ne.s32.totalorder %s116, %s118
    %p122 = scmp.eq.s32.totalorder %s19, 0
    %p123 = por %p121, %p122
    %p124 = scmp.ne.s32.totalorder %s116, %s118
    %p125 = scmp.eq.s32.totalorder %s24, 1
    %p126 = por %p124, %p125
    %p127 = scmp.ne.s32.totalorder %s118, %s119
    %p128 = scmp.eq.s32.totalorder %s24, 0
    %p129 = por %p127, %p128
    %p130 = scmp.ne.s32.totalorder %s118, %s119
    %p131 = scmp.eq.s32.totalorder %s25, 1
    %p132 = por %p130, %p131
    %p134 = scmp.ne.s32.totalorder %s119, %s133
    %p135 = scmp.eq.s32.totalorder %s25, 0
    %p136 = por %p134, %p135
    %s138 = sadd.s32 %s137, 1
    %p141 = scmp.eq.s32.totalorder %s19, 1
    %p142 = scmp.ne.s32.totalorder %s137, %s139
    %p143 = scmp.eq.s32.totalorder %s19, 0
    %p144 = por %p142, %p143
    %p145 = scmp.ne.s32.totalorder %s137, %s139
    %p146 = scmp.eq.s32.totalorder %s24, 1
    %p147 = por %p145, %p146
    %p148 = scmp.ne.s32.totalorder %s139, %s140
    %p149 = scmp.eq.s32.totalorder %s24, 0
    %p150 = por %p148, %p149
    %p151 = scmp.ne.s32.totalorder %s139, %s140
    %p152 = scmp.eq.s32.totalorder %s25, 1
    %p153 = por %p151, %p152
    %p155 = scmp.ne.s32.totalorder %s140, %s154
    %p156 = scmp.eq.s32.totalorder %s25, 0
    %p157 = por %p155, %p156
    %s159 = sadd.s32 %s158, 1
    %p162 = scmp.eq.s32.totalorder %s19, 1
    %p163 = scmp.ne.s32.totalorder %s158, %s160
    %p164 = scmp.eq.s32.totalorder %s19, 0
    %p165 = por %p163, %p164
    %p166 = scmp.ne.s32.totalorder %s158, %s160
    %p167 = scmp.eq.s32.totalorder %s24, 1
    %p168 = por %p166, %p167
    %p169 = scmp.ne.s32.totalorder %s160, %s161
    %p170 = scmp.eq.s32.totalorder %s24, 0
    %p171 = por %p169, %p170
    %p172 = scmp.ne.s32.totalorder %s160, %s161
    %p173 = scmp.eq.s32.totalorder %s25, 1
    %p174 = por %p172, %p173
    %p176 = scmp.ne.s32.totalorder %s161, %s175
    %p177 = scmp.eq.s32.totalorder %s25, 0
    %p178 = por %p176, %p177
    %s180 = sadd.s32 %s179, 1
    %p183 = scmp.eq.s32.totalorder %s19, 1
    %p184 = scmp.ne.s32.totalorder %s179, %s181
    %p185 = scmp.eq.s32.totalorder %s19, 0
    %p186 = por %p184, %p185
    %p187 = scmp.ne.s32.totalorder %s179, %s181
    %p188 = scmp.eq.s32.totalorder %s24, 1
    %p189 = por %p187, %p188
    %p190 = scmp.ne.s32.totalorder %s181, %s182
    %p191 = scmp.eq.s32.totalorder %s24, 0
    %p192 = por %p190, %p191
    %p193 = scmp.ne.s32.totalorder %s181, %s182
    %p194 = scmp.eq.s32.totalorder %s25, 1
    %p195 = por %p193, %p194
    %p197 = scmp.ne.s32.totalorder %s182, %s196
    %p198 = scmp.eq.s32.totalorder %s25, 0
    %p199 = por %p197, %p198
    %s201 = sadd.s32 %s200, 1
    %p204 = scmp.eq.s32.totalorder %s19, 1
    %p205 = scmp.ne.s32.totalorder %s200, %s202
    %p206 = scmp.eq.s32.totalorder %s19, 0
    %p207 = por %p205, %p206
    %p208 = scmp.ne.s32.totalorder %s200, %s202
    %p209 = scmp.eq.s32.totalorder %s24, 1
    %p210 = por %p208, %p209
    %p211 = scmp.ne.s32.totalorder %s202, %s203
    %p212 = scmp.eq.s32.totalorder %s24, 0
    %p213 = por %p211, %p212
    %p214 = scmp.ne.s32.totalorder %s202, %s203
    %p215 = scmp.eq.s32.totalorder %s25, 1
    %p216 = por %p214, %p215
    %p218 = scmp.ne.s32.totalorder %s203, %s217
    %p219 = scmp.eq.s32.totalorder %s25, 0
    %p220 = por %p218, %p219
    %s221 = ssub.s32 %s19, %s26
    %p222 = scmp.eq.s32.totalorder %s221, 0
    %s224 = sadd.s32 %s223, 1
    %s225 = scalar_select %p222, %s223, %s224
    %p228 = pneg %p222
    %p229 = scmp.eq.s32.totalorder %s19, 1
    %p230 = por %p228, %p229
    %p231 = scmp.ne.s32.totalorder %s223, %s226
    %p232 = scmp.eq.s32.totalorder %s19, 0
    %p233 = por %p231, %p232
    %p234 = scmp.ne.s32.totalorder %s223, %s226
    %p235 = scmp.eq.s32.totalorder %s24, 1
    %p236 = por %p234, %p235
    %p237 = scmp.ne.s32.totalorder %s226, %s227
    %p238 = scmp.eq.s32.totalorder %s24, 0
    %p239 = por %p237, %p238
    %p240 = scmp.ne.s32.totalorder %s226, %s227
    %p241 = scmp.eq.s32.totalorder %s25, 1
    %p242 = por %p240, %p241
    %p244 = scmp.ne.s32.totalorder %s227, %s243
    %p245 = scmp.eq.s32.totalorder %s25, 0
    %p246 = por %p244, %p245
    %s247 = ssub.s32 %s19, %s26
    %p248 = scmp.eq.s32.totalorder %s247, 0
    %s250 = sadd.s32 %s249, 1
    %s251 = scalar_select %p248, %s249, %s250
    %p254 = pneg %p248
    %p255 = scmp.eq.s32.totalorder %s19, 1
    %p256 = por %p254, %p255
    %p257 = scmp.ne.s32.totalorder %s249, %s252
    %p258 = scmp.eq.s32.totalorder %s19, 0
    %p259 = por %p257, %p258
    %p260 = scmp.ne.s32.totalorder %s249, %s252
    %p261 = scmp.eq.s32.totalorder %s24, 1
    %p262 = por %p260, %p261
    %p263 = scmp.ne.s32.totalorder %s252, %s253
    %p264 = scmp.eq.s32.totalorder %s24, 0
    %p265 = por %p263, %p264
    %p266 = scmp.ne.s32.totalorder %s252, %s253
    %p267 = scmp.eq.s32.totalorder %s25, 1
    %p268 = por %p266, %p267
    %p270 = scmp.ne.s32.totalorder %s253, %s269
    %p271 = scmp.eq.s32.totalorder %s25, 0
    %p272 = por %p270, %p271
    %s273 = ssub.s32 %s19, %s26
    %p274 = scmp.eq.s32.totalorder %s273, 0
    %s276 = sadd.s32 %s275, 1
    %s277 = scalar_select %p274, %s275, %s276
    %p280 = pneg %p274
    %p281 = scmp.eq.s32.totalorder %s19, 1
    %p282 = por %p280, %p281
    %p283 = scmp.ne.s32.totalorder %s275, %s278
    %p284 = scmp.eq.s32.totalorder %s19, 0
    %p285 = por %p283, %p284
    %p286 = scmp.ne.s32.totalorder %s275, %s278
    %p287 = scmp.eq.s32.totalorder %s24, 1
    %p288 = por %p286, %p287
    %p289 = scmp.ne.s32.totalorder %s278, %s279
    %p290 = scmp.eq.s32.totalorder %s24, 0
    %p291 = por %p289, %p290
    %p292 = scmp.ne.s32.totalorder %s278, %s279
    %p293 = scmp.eq.s32.totalorder %s25, 1
    %p294 = por %p292, %p293
    %p296 = scmp.ne.s32.totalorder %s279, %s295
    %p297 = scmp.eq.s32.totalorder %s25, 0
    %p298 = por %p296, %p297
    %s299 = ssub.s32 %s19, %s26
    %p300 = scmp.eq.s32.totalorder %s299, 0
    %s302 = sadd.s32 %s301, 1
    %s303 = scalar_select %p300, %s301, %s302
    %p306 = pneg %p300
    %p307 = scmp.eq.s32.totalorder %s19, 1
    %p308 = por %p306, %p307
    %p309 = scmp.ne.s32.totalorder %s301, %s304
    %p310 = scmp.eq.s32.totalorder %s19, 0
    %p311 = por %p309, %p310
    %p312 = scmp.ne.s32.totalorder %s301, %s304
    %p313 = scmp.eq.s32.totalorder %s24, 1
    %p314 = por %p312, %p313
    %p315 = scmp.ne.s32.totalorder %s304, %s305
    %p316 = scmp.eq.s32.totalorder %s24, 0
    %p317 = por %p315, %p316
    %p318 = scmp.ne.s32.totalorder %s304, %s305
    %p319 = scmp.eq.s32.totalorder %s25, 1
    %p320 = por %p318, %p319
    %p322 = scmp.ne.s32.totalorder %s305, %s321
    %p323 = scmp.eq.s32.totalorder %s25, 0
    %p324 = por %p322, %p323
    %p325 = scmp.le.s32.totalorder 1, %s19
    %p326 = scmp.lt.s32.totalorder %s19, 3
    %p327 = pnand %p325, %p326
    %p328 = pneg %p327
    // Predicated region
    $region9: #{inception_c_forward.6} parent=5 // pred_check
      _
    $region10: #{inception_c_forward.6} parent=5 // pred_check_branch
      %330 = sbr.rel (%p327) target = $region12
    $region11: #{inception_c_forward.6} parent=5 // pred_region
      %s331 = ssub.s32 %s19, 1
      // Predicated region
      $region13: #{inception_c_forward.6} parent=11 // pred_check
        %p332 = pneg %p66
      $region14: #{inception_c_forward.6} parent=11 // pred_check_branch
        %334 = sbr.rel (%p332) target = $region16
      $region15: #{inception_c_forward.6} parent=11 // pred_region
        _
      $region16: #{inception_c_forward.6} parent=11 // pred_fallthru
        _
      // Predicated region
      $region17: #{inception_c_forward.6} parent=11 // pred_check
        %p335 = pneg %p87
      $region18: #{inception_c_forward.6} parent=11 // pred_check_branch
        %337 = sbr.rel (%p335) target = $region20
      $region19: #{inception_c_forward.6} parent=11 // pred_region
        _
      $region20: #{inception_c_forward.6} parent=11 // pred_fallthru
        _
      // Predicated region
      $region21: #{inception_c_forward.6} parent=11 // pred_check
        %p338 = pneg %p108
      $region22: #{inception_c_forward.6} parent=11 // pred_check_branch
        %340 = sbr.rel (%p338) target = $region24
      $region23: #{inception_c_forward.6} parent=11 // pred_region
        _
      $region24: #{inception_c_forward.6} parent=11 // pred_fallthru
        _
      // Predicated region
      $region25: #{inception_c_forward.6} parent=11 // pred_check
        %p341 = pneg %p129
      $region26: #{inception_c_forward.6} parent=11 // pred_check_branch
        %343 = sbr.rel (%p341) target = $region28
      $region27: #{inception_c_forward.6} parent=11 // pred_region
        _
      $region28: #{inception_c_forward.6} parent=11 // pred_fallthru
        _
      // Predicated region
      $region29: #{inception_c_forward.6} parent=11 // pred_check
        %p344 = pneg %p150
      $region30: #{inception_c_forward.6} parent=11 // pred_check_branch
        %346 = sbr.rel (%p344) target = $region32
      $region31: #{inception_c_forward.6} parent=11 // pred_region
        _
      $region32: #{inception_c_forward.6} parent=11 // pred_fallthru
        _
      // Predicated region
      $region33: #{inception_c_forward.6} parent=11 // pred_check
        %p347 = pneg %p171
      $region34: #{inception_c_forward.6} parent=11 // pred_check_branch
        %349 = sbr.rel (%p347) target = $region36
      $region35: #{inception_c_forward.6} parent=11 // pred_region
        _
      $region36: #{inception_c_forward.6} parent=11 // pred_fallthru
        _
      // Predicated region
      $region37: #{inception_c_forward.6} parent=11 // pred_check
        %p350 = pneg %p192
      $region38: #{inception_c_forward.6} parent=11 // pred_check_branch
        %352 = sbr.rel (%p350) target = $region40
      $region39: #{inception_c_forward.6} parent=11 // pred_region
        _
      $region40: #{inception_c_forward.6} parent=11 // pred_fallthru
        _
      // Predicated region
      $region41: #{inception_c_forward.6} parent=11 // pred_check
        %p353 = pneg %p213
      $region42: #{inception_c_forward.6} parent=11 // pred_check_branch
        %355 = sbr.rel (%p353) target = $region44
      $region43: #{inception_c_forward.6} parent=11 // pred_region
        _
      $region44: #{inception_c_forward.6} parent=11 // pred_fallthru
        _
    $region12: #{inception_c_forward.6} parent=5 // pred_fallthru
      _
    %p356 = scmp.lt.s32.totalorder %s19, 2
    // Predicated region
    $region45: #{inception_c_forward.6} parent=5 // pred_check
      %p357 = pneg %p356
    $region46: #{inception_c_forward.6} parent=5 // pred_check_branch
      %359 = sbr.rel (%p357) target = $region48
    $region47: #{inception_c_forward.6} parent=5 // pred_region
      // Predicated region
      $region49: #{inception_c_forward.6} parent=47 // pred_check
        %p360 = pneg %p39
      $region50: #{inception_c_forward.6} parent=47 // pred_check_branch
        %362 = sbr.rel (%p360) target = $region52
      $region51: #{inception_c_forward.6} parent=47 // pred_region
        %p363 = scmp.lt.s32.totalorder %s19, 1
        %s364 = scalar_select %p363, %s19, 1
        %s365 = smul.addr %s364, 8
        %s366 = smul.addr %s365, 4
        %s367 = scalar_lea.vmem %s0, %s366
      $region52: #{inception_c_forward.6} parent=47 // pred_fallthru
        _
    $region48: #{inception_c_forward.6} parent=5 // pred_fallthru
      _
    %p368 = scmp.le.s32.totalorder 1, %s19
    %p369 = scmp.lt.s32.totalorder %s19, 3
    %p370 = pnand %p368, %p369
    %p371 = pneg %p370
    // Predicated region
    $region53: #{inception_c_forward.6} parent=5 // pred_check
      _
    $region54: #{inception_c_forward.6} parent=5 // pred_check_branch
      %373 = sbr.rel (%p370) target = $region56
    $region55: #{inception_c_forward.6} parent=5 // pred_region
      %s374 = ssub.s32 %s19, 1
      %p375 = scmp.lt.s32.totalorder %s24, 1
      %s376 = scalar_select %p375, %s24, 1
      %s377 = smul.addr %s376, 8
      %s378 = smul.addr %s377, 4
      %s379 = scalar_lea.vmem %s0, %s378
      %p380 = pneg %p45
      %p381 = pneg %p42
      %p382 = pneg %p66
      %p383 = pneg %p63
      %p384 = pneg %p87
      %p385 = pneg %p84
      %p386 = pneg %p108
      %p387 = pneg %p105
      %p388 = pneg %p129
      %p389 = pneg %p126
      %p390 = pneg %p150
      %p391 = pneg %p147
      %p392 = pneg %p171
      %p393 = pneg %p168
      %p394 = pneg %p192
      %p395 = pneg %p189
      %p396 = pneg %p213
      %p397 = pneg %p210
      %p398 = pneg %p239
      %p399 = pneg %p236
      %p400 = scmp.lt.s32.totalorder %s24, 1
      %s401 = scalar_select %p400, %s24, 1
      %s402 = smul.addr %s401, 16
      %s403 = smul.addr %s402, 4
      %s404 = scalar_lea.vmem %s9, %s403
      %p405 = pneg %p265
      %p406 = pneg %p262
      %p407 = scmp.lt.s32.totalorder %s24, 1
      %s408 = scalar_select %p407, %s24, 1
      %s409 = smul.addr %s408, 8
      %s410 = smul.addr %s409, 4
      %s411 = scalar_lea.vmem %s10, %s410
      %p412 = pneg %p291
      %p413 = pneg %p288
      %p414 = scmp.lt.s32.totalorder %s24, 1
      %s415 = scalar_select %p414, %s24, 1
      %s416 = smul.addr %s415, 8
      %s417 = smul.addr %s416, 4
      %s418 = scalar_lea.vmem %s11, %s417
      %p419 = pneg %p317
      %p420 = pneg %p314
      %p421 = scmp.lt.s32.totalorder %s24, 1
      %s422 = scalar_select %p421, %s24, 1
      %s423 = smul.addr %s422, 16
      %s424 = smul.addr %s423, 4
      %s425 = scalar_lea.vmem %s12, %s424
      %p426 = scmp.lt.s32.totalorder %s24, 1
      %s427 = scalar_select %p426, %s24, 1
      %s428 = smul.addr %s427, 8
      %s429 = smul.addr %s428, 4
      %s430 = scalar_lea.vmem %s0, %s429
      %p431 = scmp.lt.s32.totalorder %s24, 1
      %s432 = scalar_select %p431, %s24, 1
      %s433 = smul.addr %s432, 16
      %s434 = smul.addr %s433, 4
      %s435 = scalar_lea.vmem %s9, %s434
      %p436 = scmp.lt.s32.totalorder %s24, 1
      %s437 = scalar_select %p436, %s24, 1
      %s438 = smul.addr %s437, 8
      %s439 = smul.addr %s438, 4
      %s440 = scalar_lea.vmem %s10, %s439
      %p441 = scmp.lt.s32.totalorder %s24, 1
      %s442 = scalar_select %p441, %s24, 1
      %s443 = smul.addr %s442, 8
      %s444 = smul.addr %s443, 4
      %s445 = scalar_lea.vmem %s11, %s444
      %p446 = scmp.lt.s32.totalorder %s24, 1
      %s447 = scalar_select %p446, %s24, 1
      %s448 = smul.addr %s447, 16
      %s449 = smul.addr %s448, 4
      %s450 = scalar_lea.vmem %s12, %s449
      %v452 = vld [vmem:[%s430] sm:$0xf]
      %v453 = vld [vmem:[%s430 + $0x4] sm:$0xf]
      %v454 = vld [vmem:[%s430 + $0x8] sm:$0xf]
      %v455 = vld [vmem:[%s430 + $0xc] sm:$0xf]
      %v456 = vld [vmem:[%s430 + $0x10] sm:$0xf]
      %v457 = vld [vmem:[%s430 + $0x14] sm:$0xf]
      %v458 = vld [vmem:[%s430 + $0x18] sm:$0xf]
      %v459 = vld [vmem:[%s430 + $0x1c] sm:$0xf]
      %v460 = vld [vmem:[%s1] sm:$0xff]
      %v461 = vld [vmem:[%s1 + $0x8] sm:$0xff]
      %v462 = vld [vmem:[%s1 + $0x10] sm:$0xff]
      %v463 = vld [vmem:[%s1 + $0x18] sm:$0xff]
      %v464 = vld [vmem:[%s5] sm:$0x3]
      %v466 = vlaneseq
      %v467 = vshrl.u32 %v466, 7
      %v468 = vsub.s32 0, %v467
      %v469 = vrot.slane %v464, %v468
      %v470 = vlaneseq
      %v471 = vshrl.u32 %v470, 7
      %v472 = vsub.s32 1, %v471
      %v473 = vrot.slane %v464, %v472
      %v484 = vunpack.c.l.b16 %v452
      %v485 = vunpack.c.l.b16 %v453
      %v486 = vunpack.c.l.b16 %v454
      %v487 = vunpack.c.l.b16 %v455
      %v488 = vunpack.c.l.b16 %v456
      %v489 = vunpack.c.l.b16 %v457
      %v490 = vunpack.c.l.b16 %v458
      %v491 = vunpack.c.l.b16 %v459
      %v492 = vpack.c.b16 %v485, %v484
      %v493 = vpack.c.b16 %v487, %v486
      %v494 = vpack.c.b16 %v489, %v488
      %v495 = vpack.c.b16 %v491, %v490
      %v500 = vunpack.c.l.b16 %v460
      %v501 = vunpack.c.h.b16 %v460
      %v502 = vunpack.c.l.b16 %v461
      %v503 = vunpack.c.h.b16 %v461
      %v504 = vunpack.c.l.b16 %v462
      %v505 = vunpack.c.h.b16 %v462
      %v506 = vunpack.c.l.b16 %v463
      %v507 = vunpack.c.h.b16 %v463
      %v508 = vpack.c.b16 %v502, %v500
      %v509 = vpack.c.b16 %v503, %v501
      %v510 = vpack.c.b16 %v506, %v504
      %v511 = vpack.c.b16 %v507, %v505
      %vm516 = vcmask 261120
      %v518 = vsel %vm516, %v492, 0
      %v521 = vsel %vm516, %v493, 0
      %v524 = vsel %vm516, %v494, 0
      %v527 = vsel %vm516, %v495, 0
      %529 = vmatprep.subr.bf16.mxu0 %v509
      %530 = vmatpush1.bf16.msra.mxu0 %v508
      %531 = vmatprep.subr.bf16.mxu0 %v511
      %532 = vmatpush1.bf16.msra.mxu0 %v510
      %533 = vmatprep.subr.bf16.mxu0 0
      %534 = vmatpush1.bf16.msra.mxu0 0
      %535 = vmatprep.subr.bf16.mxu0 0
      %536 = vmatpush1.bf16.msra.mxu0 0
      %537 = vmatprep.subr.bf16.mxu0 0
      %538 = vmatpush1.bf16.msra.mxu0 0
      %539 = vmatprep.subr.bf16.mxu0 0
      %540 = vmatpush1.bf16.msra.mxu0 0
      %541 = vmatprep.subr.bf16.mxu0 0
      %542 = vmatpush1.bf16.msra.mxu0 0
      %543 = vmatprep.subr.bf16.mxu0 0
      %544 = vmatpush1.bf16.msra.mxu0 0
      %545 = vmatprep.subr.bf16.mxu0 0
      %546 = vmatpush1.bf16.msra.mxu0 0
      %547 = vmatprep.subr.bf16.mxu0 0
      %548 = vmatpush1.bf16.msra.mxu0 0
      %549 = vmatprep.subr.bf16.mxu0 0
      %550 = vmatpush1.bf16.msra.mxu0 0
      %551 = vmatprep.subr.bf16.mxu0 0
      %552 = vmatpush1.bf16.msra.mxu0 0
      %553 = vmatprep.subr.bf16.mxu0 0
      %554 = vmatpush1.bf16.msra.mxu0 0
      %555 = vmatprep.subr.bf16.mxu0 0
      %556 = vmatpush1.bf16.msra.mxu0 0
      %557 = vmatprep.subr.bf16.mxu0 0
      %558 = vmatpush1.bf16.msra.mxu0 0
      %559 = vmatprep.subr.bf16.mxu0 0
      %560 = vmatpush1.bf16.msra.mxu0 0
      %561 = vmatprep.mubr.bf16.mxu0 0
      %562 = vmatmul.mubr.bf16.gmra.mrb[0].mxu0 %v518
      %v563 = vpop.f32.mrb[0].mxu0
      %v564 = vadd.f32 %v469, %v563
      %v565 = vpop.f32.mrb[0].mxu0
      %v566 = vadd.f32 %v473, %v565
      %v567 = vpop.f32.mrb[0].mxu0
      %v568 = vadd.f32 %v469, %v567
      %v569 = vpop.f32.mrb[0].mxu0
      %v570 = vadd.f32 %v473, %v569
      %571 = vmatprep.mubr.bf16.mxu0 0
      %572 = vmatmul.mubr.bf16.gmra.mrb[0].mxu0 %v521
      %v573 = vpop.f32.mrb[0].mxu0
      %v574 = vadd.f32 %v469, %v573
      %v575 = vpop.f32.mrb[0].mxu0
      %v576 = vadd.f32 %v473, %v575
      %v577 = vpop.f32.mrb[0].mxu0
      %v578 = vadd.f32 %v469, %v577
      %v579 = vpop.f32.mrb[0].mxu0
      %v580 = vadd.f32 %v473, %v579
      %581 = vmatprep.mubr.bf16.mxu0 0
      %582 = vmatmul.mubr.bf16.gmra.mrb[0].mxu0 %v524
      %v583 = vpop.f32.mrb[0].mxu0
      %v584 = vadd.f32 %v469, %v583
      %v585 = vpop.f32.mrb[0].mxu0
      %v586 = vadd.f32 %v473, %v585
      %v587 = vpop.f32.mrb[0].mxu0
      %v588 = vadd.f32 %v469, %v587
      %v589 = vpop.f32.mrb[0].mxu0
      %v590 = vadd.f32 %v473, %v589
      %591 = vmatprep.mubr.bf16.mxu0 0
      %592 = vmatmul.mubr.bf16.gmra.mrb[0].mxu0 %v527
      %v593 = vpop.f32.mrb[0].mxu0
      %v594 = vadd.f32 %v469, %v593
      %v595 = vpop.f32.mrb[0].mxu0
      %v596 = vadd.f32 %v473, %v595
      %v597 = vpop.f32.mrb[0].mxu0
      %v598 = vadd.f32 %v469, %v597
      %v599 = vpop.f32.mrb[0].mxu0
      %v600 = vadd.f32 %v473, %v599
      %601 = vdwg.mxu0
      %v602 = vmax.f32 %v564, 0.0
      %v603 = vmax.f32 %v566, 0.0
      %v604 = vmax.f32 %v568, 0.0
      %v605 = vmax.f32 %v570, 0.0
      %v606 = vmax.f32 %v574, 0.0
      %v607 = vmax.f32 %v576, 0.0
      %v608 = vmax.f32 %v578, 0.0
      %v609 = vmax.f32 %v580, 0.0
      %v610 = vmax.f32 %v584, 0.0
      %v611 = vmax.f32 %v586, 0.0
      %v612 = vmax.f32 %v588, 0.0
      %v613 = vmax.f32 %v590, 0.0
      %v614 = vmax.f32 %v594, 0.0
      %v615 = vmax.f32 %v596, 0.0
      %v616 = vmax.f32 %v598, 0.0
      %v617 = vmax.f32 %v600, 0.0
      %v618 = vpack.c.bf16 %v602, %v602
      %v619 = vpack.c.bf16 %v603, %v603
      %v620 = vpack.c.bf16 %v604, %v604
      %v621 = vpack.c.bf16 %v605, %v605
      %v622 = vpack.c.bf16 %v606, %v606
      %v623 = vpack.c.bf16 %v607, %v607
      %v624 = vpack.c.bf16 %v608, %v608
      %v625 = vpack.c.bf16 %v609, %v609
      %v626 = vpack.c.bf16 %v610, %v610
      %v627 = vpack.c.bf16 %v611, %v611
      %v628 = vpack.c.bf16 %v612, %v612
      %v629 = vpack.c.bf16 %v613, %v613
      %v630 = vpack.c.bf16 %v614, %v614
      %v631 = vpack.c.bf16 %v615, %v615
      %v632 = vpack.c.bf16 %v616, %v616
      %v633 = vpack.c.bf16 %v617, %v617
      %v650 = vunpack.c.l.b16 %v618
      %v651 = vunpack.c.l.b16 %v619
      %v652 = vunpack.c.l.b16 %v620
      %v653 = vunpack.c.l.b16 %v621
      %v654 = vunpack.c.l.b16 %v622
      %v655 = vunpack.c.l.b16 %v623
      %v656 = vunpack.c.l.b16 %v624
      %v657 = vunpack.c.l.b16 %v625
      %v658 = vunpack.c.l.b16 %v626
      %v659 = vunpack.c.l.b16 %v627
      %v660 = vunpack.c.l.b16 %v628
      %v661 = vunpack.c.l.b16 %v629
      %v662 = vunpack.c.l.b16 %v630
      %v663 = vunpack.c.l.b16 %v631
      %v664 = vunpack.c.l.b16 %v632
      %v665 = vunpack.c.l.b16 %v633
      %v666 = vpack.c.b16 %v651, %v650
      %v667 = vpack.c.b16 %v653, %v652
      %v668 = vpack.c.b16 %v655, %v654
      %v669 = vpack.c.b16 %v657, %v656
      %v670 = vpack.c.b16 %v659, %v658
      %v671 = vpack.c.b16 %v661, %v660
      %v672 = vpack.c.b16 %v663, %v662
      %v673 = vpack.c.b16 %v665, %v664
      %vm682 = vcmask 1043456
      %vm683 = vcmask 523268
      %vm684 = vmor %vm683, %vm682
      %685 = vst.msk [vmem:[%s435] sm:$0xff] %vm684, %v666
      %686 = vst.msk [vmem:[%s435 + $0x8] sm:$0xff] %vm684, %v667
      %687 = vst.msk [vmem:[%s435 + $0x10] sm:$0xff] %vm684, %v668
      %688 = vst.msk [vmem:[%s435 + $0x18] sm:$0xff] %vm684, %v669
      %689 = vst.msk [vmem:[%s435 + $0x20] sm:$0xff] %vm684, %v670
      %690 = vst.msk [vmem:[%s435 + $0x28] sm:$0xff] %vm684, %v671
      %691 = vst.msk [vmem:[%s435 + $0x30] sm:$0xff] %vm684, %v672
      %692 = vst.msk [vmem:[%s435 + $0x38] sm:$0xff] %vm684, %v673
      %v693 = vld [vmem:[%s2] sm:$0xf]
      %v694 = vld [vmem:[%s2 + $0x4] sm:$0xf]
      %v695 = vld [vmem:[%s2 + $0x8] sm:$0xf]
      %v696 = vld [vmem:[%s2 + $0xc] sm:$0xf]
      %v697 = vld [vmem:[%s6] sm:$0x1]
      %v699 = vlaneseq
      %v700 = vshrl.u32 %v699, 7
      %v701 = vsub.s32 0, %v700
      %v702 = vrot.slane %v697, %v701
      %v708 = vunpack.c.l.b16 %v693
      %v709 = vunpack.c.l.b16 %v694
      %v710 = vunpack.c.l.b16 %v695
      %v711 = vunpack.c.l.b16 %v696
      %v712 = vpack.c.b16 %v709, %v708
      %v713 = vpack.c.b16 %v711, %v710
      %716 = vmatprep.subr.bf16.mxu0 0
      %717 = vmatpush1.bf16.msra.mxu0 %v712
      %718 = vmatprep.subr.bf16.mxu0 0
      %719 = vmatpush1.bf16.msra.mxu0 %v713
      %720 = vmatprep.subr.bf16.mxu0 0
      %721 = vmatpush1.bf16.msra.mxu0 0
      %722 = vmatprep.subr.bf16.mxu0 0
      %723 = vmatpush1.bf16.msra.mxu0 0
      %724 = vmatprep.subr.bf16.mxu0 0
      %725 = vmatpush1.bf16.msra.mxu0 0
      %726 = vmatprep.subr.bf16.mxu0 0
      %727 = vmatpush1.bf16.msra.mxu0 0
      %728 = vmatprep.subr.bf16.mxu0 0
      %729 = vmatpush1.bf16.msra.mxu0 0
      %730 = vmatprep.subr.bf16.mxu0 0
      %731 = vmatpush1.bf16.msra.mxu0 0
      %732 = vmatprep.subr.bf16.mxu0 0
      %733 = vmatpush1.bf16.msra.mxu0 0
      %734 = vmatprep.subr.bf16.mxu0 0
      %735 = vmatpush1.bf16.msra.mxu0 0
      %736 = vmatprep.subr.bf16.mxu0 0
      %737 = vmatpush1.bf16.msra.mxu0 0
      %738 = vmatprep.subr.bf16.mxu0 0
      %739 = vmatpush1.bf16.msra.mxu0 0
      %740 = vmatprep.subr.bf16.mxu0 0
      %741 = vmatpush1.bf16.msra.mxu0 0
      %742 = vmatprep.subr.bf16.mxu0 0
      %743 = vmatpush1.bf16.msra.mxu0 0
      %744 = vmatprep.subr.bf16.mxu0 0
      %745 = vmatpush1.bf16.msra.mxu0 0
      %746 = vmatprep.subr.bf16.mxu0 0
      %747 = vmatpush1.bf16.msra.mxu0 0
      %748 = vmatprep.mubr.bf16.mxu0 0
      %749 = vmatmul.mubr.bf16.gmra.mrb[0].mxu0 %v518
      %v750 = vpop.f32.mrb[0].mxu0
      %v751 = vadd.f32 %v702, %v750
      %v752 = vpop.f32.mrb[0].mxu0
      %v753 = vpop.f32.mrb[0].mxu0
      %v754 = vadd.f32 %v702, %v753
      %v755 = vpop.f32.mrb[0].mxu0
      %756 = vmatprep.mubr.bf16.mxu0 0
      %757 = vmatmul.mubr.bf16.gmra.mrb[0].mxu0 %v521
      %v758 = vpop.f32.mrb[0].mxu0
      %v759 = vadd.f32 %v702, %v758
      %v760 = vpop.f32.mrb[0].mxu0
      %v761 = vpop.f32.mrb[0].mxu0
      %v762 = vadd.f32 %v702, %v761
      %v763 = vpop.f32.mrb[0].mxu0
      %764 = vmatprep.mubr.bf16.mxu0 0
      %765 = vmatmul.mubr.bf16.gmra.mrb[0].mxu0 %v524
      %v766 = vpop.f32.mrb[0].mxu0
      %v767 = vadd.f32 %v702, %v766
      %v768 = vpop.f32.mrb[0].mxu0
      %v769 = vpop.f32.mrb[0].mxu0
      %v770 = vadd.f32 %v702, %v769
      %v771 = vpop.f32.mrb[0].mxu0
      %772 = vmatprep.mubr.bf16.mxu0 0
      %773 = vmatmul.mubr.bf16.gmra.mrb[0].mxu0 %v527
      %v774 = vpop.f32.mrb[0].mxu0
      %v775 = vadd.f32 %v702, %v774
      %v776 = vpop.f32.mrb[0].mxu0
      %v777 = vpop.f32.mrb[0].mxu0
      %v778 = vadd.f32 %v702, %v777
      %v779 = vpop.f32.mrb[0].mxu0
      %780 = vdwg.mxu0
      %v781 = vmax.f32 %v751, 0.0
      %v782 = vmax.f32 %v754, 0.0
      %v783 = vmax.f32 %v759, 0.0
      %v784 = vmax.f32 %v762, 0.0
      %v785 = vmax.f32 %v767, 0.0
      %v786 = vmax.f32 %v770, 0.0
      %v787 = vmax.f32 %v775, 0.0
      %v788 = vmax.f32 %v778, 0.0
      %v789 = vpack.c.bf16 %v781, %v781
      %v790 = vpack.c.bf16 %v782, %v782
      %v791 = vpack.c.bf16 %v783, %v783
      %v792 = vpack.c.bf16 %v784, %v784
      %v793 = vpack.c.bf16 %v785, %v785
      %v794 = vpack.c.bf16 %v786, %v786
      %v795 = vpack.c.bf16 %v787, %v787
      %v796 = vpack.c.bf16 %v788, %v788
      %vm797 = vcmask 125952
      %798 = vst.msk [vmem:[%s440] sm:$0xf] %vm797, %v789
      %799 = vst.msk [vmem:[%s440 + $0x4] sm:$0xf] %vm797, %v790
      %800 = vst.msk [vmem:[%s440 + $0x8] sm:$0xf] %vm797, %v791
      %801 = vst.msk [vmem:[%s440 + $0xc] sm:$0xf] %vm797, %v792
      %802 = vst.msk [vmem:[%s440 + $0x10] sm:$0xf] %vm797, %v793
      %803 = vst.msk [vmem:[%s440 + $0x14] sm:$0xf] %vm797, %v794
      %804 = vst.msk [vmem:[%s440 + $0x18] sm:$0xf] %vm797, %v795
      %805 = vst.msk [vmem:[%s440 + $0x1c] sm:$0xf] %vm797, %v796
      %v806 = vld [vmem:[%s3] sm:$0xf]
      %v807 = vld [vmem:[%s3 + $0x4] sm:$0xf]
      %v808 = vld [vmem:[%s3 + $0x8] sm:$0xf]
      %v809 = vld [vmem:[%s3 + $0xc] sm:$0xf]
      %v810 = vld [vmem:[%s7] sm:$0x1]
      %v812 = vlaneseq
      %v813 = vshrl.u32 %v812, 7
      %v814 = vsub.s32 0, %v813
      %v815 = vrot.slane %v810, %v814
      %v821 = vunpack.c.l.b16 %v806
      %v822 = vunpack.c.l.b16 %v807
      %v823 = vunpack.c.l.b16 %v808
      %v824 = vunpack.c.l.b16 %v809
      %v825 = vpack.c.b16 %v822, %v821
      %v826 = vpack.c.b16 %v824, %v823
      %829 = vmatprep.subr.bf16.mxu0 0
      %830 = vmatpush1.bf16.msra.mxu0 %v825
      %831 = vmatprep.subr.bf16.mxu0 0
      %832 = vmatpush1.bf16.msra.mxu0 %v826
      %833 = vmatprep.subr.bf16.mxu0 0
      %834 = vmatpush1.bf16.msra.mxu0 0
      %835 = vmatprep.subr.bf16.mxu0 0
      %836 = vmatpush1.bf16.msra.mxu0 0
      %837 = vmatprep.subr.bf16.mxu0 0
      %838 = vmatpush1.bf16.msra.mxu0 0
      %839 = vmatprep.subr.bf16.mxu0 0
      %840 = vmatpush1.bf16.msra.mxu0 0
      %841 = vmatprep.subr.bf16.mxu0 0
      %842 = vmatpush1.bf16.msra.mxu0 0
      %843 = vmatprep.subr.bf16.mxu0 0
      %844 = vmatpush1.bf16.msra.mxu0 0
      %845 = vmatprep.subr.bf16.mxu0 0
      %846 = vmatpush1.bf16.msra.mxu0 0
      %847 = vmatprep.subr.bf16.mxu0 0
      %848 = vmatpush1.bf16.msra.mxu0 0
      %849 = vmatprep.subr.bf16.mxu0 0
      %850 = vmatpush1.bf16.msra.mxu0 0
      %851 = vmatprep.subr.bf16.mxu0 0
      %852 = vmatpush1.bf16.msra.mxu0 0
      %853 = vmatprep.subr.bf16.mxu0 0
      %854 = vmatpush1.bf16.msra.mxu0 0
      %855 = vmatprep.subr.bf16.mxu0 0
      %856 = vmatpush1.bf16.msra.mxu0 0
      %857 = vmatprep.subr.bf16.mxu0 0
      %858 = vmatpush1.bf16.msra.mxu0 0
      %859 = vmatprep.subr.bf16.mxu0 0
      %860 = vmatpush1.bf16.msra.mxu0 0
      %861 = vmatprep.mubr.bf16.mxu0 0
      %862 = vmatmul.mubr.bf16.gmra.mrb[0].mxu0 %v518
      %v863 = vpop.f32.mrb[0].mxu0
      %v864 = vadd.f32 %v815, %v863
      %v865 = vpop.f32.mrb[0].mxu0
      %v866 = vpop.f32.mrb[0].mxu0
      %v867 = vadd.f32 %v815, %v866
      %v868 = vpop.f32.mrb[0].mxu0
      %869 = vmatprep.mubr.bf16.mxu0 0
      %870 = vmatmul.mubr.bf16.gmra.mrb[0].mxu0 %v521
      %v871 = vpop.f32.mrb[0].mxu0
      %v872 = vadd.f32 %v815, %v871
      %v873 = vpop.f32.mrb[0].mxu0
      %v874 = vpop.f32.mrb[0].mxu0
      %v875 = vadd.f32 %v815, %v874
      %v876 = vpop.f32.mrb[0].mxu0
      %877 = vmatprep.mubr.bf16.mxu0 0
      %878 = vmatmul.mubr.bf16.gmra.mrb[0].mxu0 %v524
      %v879 = vpop.f32.mrb[0].mxu0
      %v880 = vadd.f32 %v815, %v879
      %v881 = vpop.f32.mrb[0].mxu0
      %v882 = vpop.f32.mrb[0].mxu0
      %v883 = vadd.f32 %v815, %v882
      %v884 = vpop.f32.mrb[0].mxu0
      %885 = vmatprep.mubr.bf16.mxu0 0
      %886 = vmatmul.mubr.bf16.gmra.mrb[0].mxu0 %v527
      %v887 = vpop.f32.mrb[0].mxu0
      %v888 = vadd.f32 %v815, %v887
      %v889 = vpop.f32.mrb[0].mxu0
      %v890 = vpop.f32.mrb[0].mxu0
      %v891 = vadd.f32 %v815, %v890
      %v892 = vpop.f32.mrb[0].mxu0
      %893 = vdwg.mxu0
      %v894 = vmax.f32 %v864, 0.0
      %v895 = vmax.f32 %v867, 0.0
      %v896 = vmax.f32 %v872, 0.0
      %v897 = vmax.f32 %v875, 0.0
      %v898 = vmax.f32 %v880, 0.0
      %v899 = vmax.f32 %v883, 0.0
      %v900 = vmax.f32 %v888, 0.0
      %v901 = vmax.f32 %v891, 0.0
      %v902 = vpack.c.bf16 %v894, %v894
      %v903 = vpack.c.bf16 %v895, %v895
      %v904 = vpack.c.bf16 %v896, %v896
      %v905 = vpack.c.bf16 %v897, %v897
      %v906 = vpack.c.bf16 %v898, %v898
      %v907 = vpack.c.bf16 %v899, %v899
      %v908 = vpack.c.bf16 %v900, %v900
      %v909 = vpack.c.bf16 %v901, %v901
      %910 = vst.msk [vmem:[%s445] sm:$0xf] %vm797, %v902
      %911 = vst.msk [vmem:[%s445 + $0x4] sm:$0xf] %vm797, %v903
      %912 = vst.msk [vmem:[%s445 + $0x8] sm:$0xf] %vm797, %v904
      %913 = vst.msk [vmem:[%s445 + $0xc] sm:$0xf] %vm797, %v905
      %914 = vst.msk [vmem:[%s445 + $0x10] sm:$0xf] %vm797, %v906
      %915 = vst.msk [vmem:[%s445 + $0x14] sm:$0xf] %vm797, %v907
      %916 = vst.msk [vmem:[%s445 + $0x18] sm:$0xf] %vm797, %v908
      %917 = vst.msk [vmem:[%s445 + $0x1c] sm:$0xf] %vm797, %v909
      %v918 = vunpack.c.l.bf16 %v452
      %v919 = vunpack.c.l.bf16 %v453
      %v920 = vunpack.c.l.bf16 %v454
      %v921 = vunpack.c.l.bf16 %v455
      %v922 = vunpack.c.l.bf16 %v456
      %v923 = vunpack.c.l.bf16 %v457
      %v924 = vunpack.c.l.bf16 %v458
      %v925 = vunpack.c.l.bf16 %v459
      %v926 = vadd.f32 %v918, 0.0
      %v927 = vadd.f32 %v918, %v919
      %v928 = vadd.f32 %v919, %v920
      %v929 = vadd.f32 %v920, %v921
      %v930 = vadd.f32 %v921, %v922
      %v931 = vadd.f32 %v922, %v923
      %v932 = vadd.f32 %v923, %v924
      %v933 = vadd.f32 %v924, %v925
      %v934 = vadd.f32 %v926, %v919
      %v935 = vadd.f32 %v927, %v920
      %v936 = vadd.f32 %v928, %v921
      %v937 = vadd.f32 %v929, %v922
      %v938 = vadd.f32 %v930, %v923
      %v939 = vadd.f32 %v931, %v924
      %v940 = vadd.f32 %v932, %v925
      %v941 = vadd.f32 %v933, 0.0
      %v950 = vrot.slane %v934, 7
      %v951 = vrot.slane %v935, 7
      %v952 = vrot.slane %v936, 7
      %v953 = vrot.slane %v937, 7
      %v954 = vrot.slane %v938, 7
      %v955 = vrot.slane %v939, 7
      %v956 = vrot.slane %v940, 7
      %v957 = vrot.slane %v941, 7
      %vm966 = vcmask 1040384
      %v967 = vsel %vm966, 0.0, %v950
      %v968 = vsel %vm966, 0.0, %v951
      %v969 = vsel %vm966, 0.0, %v952
      %v970 = vsel %vm966, 0.0, %v953
      %v971 = vsel %vm966, 0.0, %v954
      %v972 = vsel %vm966, 0.0, %v955
      %v973 = vsel %vm966, 0.0, %v956
      %v974 = vsel %vm966, 0.0, %v957
      %v975 = vsel %vm966, %v950, 0.0
      %v976 = vsel %vm966, %v951, 0.0
      %v977 = vsel %vm966, %v952, 0.0
      %v978 = vsel %vm966, %v953, 0.0
      %v979 = vsel %vm966, %v954, 0.0
      %v980 = vsel %vm966, %v955, 0.0
      %v981 = vsel %vm966, %v956, 0.0
      %v982 = vsel %vm966, %v957, 0.0
      %vm999 = vcmask 1046528
      %v1000 = vrot.slane %v967, 1
      %v1001 = vrot.slane %v975, 1
      %v1002 = vsel %vm999, %v1000, %v1001
      %v1003 = vrot.slane %v968, 1
      %v1004 = vrot.slane %v976, 1
      %v1005 = vsel %vm999, %v1003, %v1004
      %v1006 = vrot.slane %v969, 1
      %v1007 = vrot.slane %v977, 1
      %v1008 = vsel %vm999, %v1006, %v1007
      %v1009 = vrot.slane %v970, 1
      %v1010 = vrot.slane %v978, 1
      %v1011 = vsel %vm999, %v1009, %v1010
      %v1012 = vrot.slane %v971, 1
      %v1013 = vrot.slane %v979, 1
      %v1014 = vsel %vm999, %v1012, %v1013
      %v1015 = vrot.slane %v972, 1
      %v1016 = vrot.slane %v980, 1
      %v1017 = vsel %vm999, %v1015, %v1016
      %v1018 = vrot.slane %v973, 1
      %v1019 = vrot.slane %v981, 1
      %v1020 = vsel %vm999, %v1018, %v1019
      %v1021 = vrot.slane %v974, 1
      %v1022 = vrot.slane %v982, 1
      %v1023 = vsel %vm999, %v1021, %v1022
      %v1032 = vadd.f32 %v967, %v1002
      %v1033 = vadd.f32 %v968, %v1005
      %v1034 = vadd.f32 %v969, %v1008
      %v1035 = vadd.f32 %v970, %v1011
      %v1036 = vadd.f32 %v971, %v1014
      %v1037 = vadd.f32 %v972, %v1017
      %v1038 = vadd.f32 %v973, %v1020
      %v1039 = vadd.f32 %v974, %v1023
      %vm1040 = vcmask 1045504
      %v1041 = vrot.slane %v967, 2
      %v1042 = vrot.slane %v975, 2
      %v1043 = vsel %vm1040, %v1041, %v1042
      %v1044 = vrot.slane %v968, 2
      %v1045 = vrot.slane %v976, 2
      %v1046 = vsel %vm1040, %v1044, %v1045
      %v1047 = vrot.slane %v969, 2
      %v1048 = vrot.slane %v977, 2
      %v1049 = vsel %vm1040, %v1047, %v1048
      %v1050 = vrot.slane %v970, 2
      %v1051 = vrot.slane %v978, 2
      %v1052 = vsel %vm1040, %v1050, %v1051
      %v1053 = vrot.slane %v971, 2
      %v1054 = vrot.slane %v979, 2
      %v1055 = vsel %vm1040, %v1053, %v1054
      %v1056 = vrot.slane %v972, 2
      %v1057 = vrot.slane %v980, 2
      %v1058 = vsel %vm1040, %v1056, %v1057
      %v1059 = vrot.slane %v973, 2
      %v1060 = vrot.slane %v981, 2
      %v1061 = vsel %vm1040, %v1059, %v1060
      %v1062 = vrot.slane %v974, 2
      %v1063 = vrot.slane %v982, 2
      %v1064 = vsel %vm1040, %v1062, %v1063
      %v1073 = vadd.f32 %v1032, %v1043
      %v1074 = vadd.f32 %v1033, %v1046
      %v1075 = vadd.f32 %v1034, %v1049
      %v1076 = vadd.f32 %v1035, %v1052
      %v1077 = vadd.f32 %v1036, %v1055
      %v1078 = vadd.f32 %v1037, %v1058
      %v1079 = vadd.f32 %v1038, %v1061
      %v1080 = vadd.f32 %v1039, %v1064
      %v1081 = vmul.f32 %v1073, 0.11111111
      %v1082 = vmul.f32 %v1074, 0.11111111
      %v1083 = vmul.f32 %v1075, 0.11111111
      %v1084 = vmul.f32 %v1076, 0.11111111
      %v1085 = vmul.f32 %v1077, 0.11111111
      %v1086 = vmul.f32 %v1078, 0.11111111
      %v1087 = vmul.f32 %v1079, 0.11111111
      %v1088 = vmul.f32 %v1080, 0.11111111
      %v1089 = vpack.c.bf16 %v1081, %v1081
      %v1090 = vpack.c.bf16 %v1082, %v1082
      %v1091 = vpack.c.bf16 %v1083, %v1083
      %v1092 = vpack.c.bf16 %v1084, %v1084
      %v1093 = vpack.c.bf16 %v1085, %v1085
      %v1094 = vpack.c.bf16 %v1086, %v1086
      %v1095 = vpack.c.bf16 %v1087, %v1087
      %v1096 = vpack.c.bf16 %v1088, %v1088
      %v1097 = vld [vmem:[%s4] sm:$0xff]
      %v1098 = vld [vmem:[%s4 + $0x8] sm:$0xff]
      %v1099 = vld [vmem:[%s4 + $0x10] sm:$0xff]
      %v1100 = vld [vmem:[%s4 + $0x18] sm:$0xff]
      %v1101 = vld [vmem:[%s8] sm:$0x3]
      %v1103 = vlaneseq
      %v1104 = vshrl.u32 %v1103, 7
      %v1105 = vsub.s32 0, %v1104
      %v1106 = vrot.slane %v1101, %v1105
      %v1107 = vlaneseq
      %v1108 = vshrl.u32 %v1107, 7
      %v1109 = vsub.s32 1, %v1108
      %v1110 = vrot.slane %v1101, %v1109
      %v1121 = vunpack.c.l.b16 %v1089
      %v1122 = vunpack.c.l.b16 %v1090
      %v1123 = vunpack.c.l.b16 %v1091
      %v1124 = vunpack.c.l.b16 %v1092
      %v1125 = vunpack.c.l.b16 %v1093
      %v1126 = vunpack.c.l.b16 %v1094
      %v1127 = vunpack.c.l.b16 %v1095
      %v1128 = vunpack.c.l.b16 %v1096
      %v1129 = vpack.c.b16 %v1122, %v1121
      %v1130 = vpack.c.b16 %v1124, %v1123
      %v1131 = vpack.c.b16 %v1126, %v1125
      %v1132 = vpack.c.b16 %v1128, %v1127
      %v1137 = vunpack.c.l.b16 %v1097
      %v1138 = vunpack.c.h.b16 %v1097
      %v1139 = vunpack.c.l.b16 %v1098
      %v1140 = vunpack.c.h.b16 %v1098
      %v1141 = vunpack.c.l.b16 %v1099
      %v1142 = vunpack.c.h.b16 %v1099
      %v1143 = vunpack.c.l.b16 %v1100
      %v1144 = vunpack.c.h.b16 %v1100
      %v1145 = vpack.c.b16 %v1139, %v1137
      %v1146 = vpack.c.b16 %v1140, %v1138
      %v1147 = vpack.c.b16 %v1143, %v1141
      %v1148 = vpack.c.b16 %v1144, %v1142
      %v1154 = vsel %vm516, %v1129, 0
      %v1157 = vsel %vm516, %v1130, 0
      %v1160 = vsel %vm516, %v1131, 0
      %v1163 = vsel %vm516, %v1132, 0
      %1165 = vmatprep.subr.bf16.mxu0 %v1146
      %1166 = vmatpush1.bf16.msra.mxu0 %v1145
      %1167 = vmatprep.subr.bf16.mxu0 %v1148
      %1168 = vmatpush1.bf16.msra.mxu0 %v1147
      %1169 = vmatprep.subr.bf16.mxu0 0
      %1170 = vmatpush1.bf16.msra.mxu0 0
      %1171 = vmatprep.subr.bf16.mxu0 0
      %1172 = vmatpush1.bf16.msra.mxu0 0
      %1173 = vmatprep.subr.bf16.mxu0 0
      %1174 = vmatpush1.bf16.msra.mxu0 0
      %1175 = vmatprep.subr.bf16.mxu0 0
      %1176 = vmatpush1.bf16.msra.mxu0 0
      %1177 = vmatprep.subr.bf16.mxu0 0
      %1178 = vmatpush1.bf16.msra.mxu0 0
      %1179 = vmatprep.subr.bf16.mxu0 0
      %1180 = vmatpush1.bf16.msra.mxu0 0
      %1181 = vmatprep.subr.bf16.mxu0 0
      %1182 = vmatpush1.bf16.msra.mxu0 0
      %1183 = vmatprep.subr.bf16.mxu0 0
      %1184 = vmatpush1.bf16.msra.mxu0 0
      %1185 = vmatprep.subr.bf16.mxu0 0
      %1186 = vmatpush1.bf16.msra.mxu0 0
      %1187 = vmatprep.subr.bf16.mxu0 0
      %1188 = vmatpush1.bf16.msra.mxu0 0
      %1189 = vmatprep.subr.bf16.mxu0 0
      %1190 = vmatpush1.bf16.msra.mxu0 0
      %1191 = vmatprep.subr.bf16.mxu0 0
      %1192 = vmatpush1.bf16.msra.mxu0 0
      %1193 = vmatprep.subr.bf16.mxu0 0
      %1194 = vmatpush1.bf16.msra.mxu0 0
      %1195 = vmatprep.subr.bf16.mxu0 0
      %1196 = vmatpush1.bf16.msra.mxu0 0
      %1197 = vmatprep.mubr.bf16.mxu0 0
      %1198 = vmatmul.mubr.bf16.gmra.mrb[0].mxu0 %v1154
      %v1199 = vpop.f32.mrb[0].mxu0
      %v1200 = vadd.f32 %v1106, %v1199
      %v1201 = vpop.f32.mrb[0].mxu0
      %v1202 = vadd.f32 %v1110, %v1201
      %v1203 = vpop.f32.mrb[0].mxu0
      %v1204 = vadd.f32 %v1106, %v1203
      %v1205 = vpop.f32.mrb[0].mxu0
      %v1206 = vadd.f32 %v1110, %v1205
      %1207 = vmatprep.mubr.bf16.mxu0 0
      %1208 = vmatmul.mubr.bf16.gmra.mrb[0].mxu0 %v1157
      %v1209 = vpop.f32.mrb[0].mxu0
      %v1210 = vadd.f32 %v1106, %v1209
      %v1211 = vpop.f32.mrb[0].mxu0
      %v1212 = vadd.f32 %v1110, %v1211
      %v1213 = vpop.f32.mrb[0].mxu0
      %v1214 = vadd.f32 %v1106, %v1213
      %v1215 = vpop.f32.mrb[0].mxu0
      %v1216 = vadd.f32 %v1110, %v1215
      %1217 = vmatprep.mubr.bf16.mxu0 0
      %1218 = vmatmul.mubr.bf16.gmra.mrb[0].mxu0 %v1160
      %v1219 = vpop.f32.mrb[0].mxu0
      %v1220 = vadd.f32 %v1106, %v1219
      %v1221 = vpop.f32.mrb[0].mxu0
      %v1222 = vadd.f32 %v1110, %v1221
      %v1223 = vpop.f32.mrb[0].mxu0
      %v1224 = vadd.f32 %v1106, %v1223
      %v1225 = vpop.f32.mrb[0].mxu0
      %v1226 = vadd.f32 %v1110, %v1225
      %1227 = vmatprep.mubr.bf16.mxu0 0
      %1228 = vmatmul.mubr.bf16.gmra.mrb[0].mxu0 %v1163
      %v1229 = vpop.f32.mrb[0].mxu0
      %v1230 = vadd.f32 %v1106, %v1229
      %v1231 = vpop.f32.mrb[0].mxu0
      %v1232 = vadd.f32 %v1110, %v1231
      %v1233 = vpop.f32.mrb[0].mxu0
      %v1234 = vadd.f32 %v1106, %v1233
      %v1235 = vpop.f32.mrb[0].mxu0
      %v1236 = vadd.f32 %v1110, %v1235
      %1237 = vdwg.mxu0
      %v1238 = vmax.f32 %v1200, 0.0
      %v1239 = vmax.f32 %v1202, 0.0
      %v1240 = vmax.f32 %v1204, 0.0
      %v1241 = vmax.f32 %v1206, 0.0
      %v1242 = vmax.f32 %v1210, 0.0
      %v1243 = vmax.f32 %v1212, 0.0
      %v1244 = vmax.f32 %v1214, 0.0
      %v1245 = vmax.f32 %v1216, 0.0
      %v1246 = vmax.f32 %v1220, 0.0
      %v1247 = vmax.f32 %v1222, 0.0
      %v1248 = vmax.f32 %v1224, 0.0
      %v1249 = vmax.f32 %v1226, 0.0
      %v1250 = vmax.f32 %v1230, 0.0
      %v1251 = vmax.f32 %v1232, 0.0
      %v1252 = vmax.f32 %v1234, 0.0
      %v1253 = vmax.f32 %v1236, 0.0
      %v1254 = vpack.c.bf16 %v1238, %v1238
      %v1255 = vpack.c.bf16 %v1239, %v1239
      %v1256 = vpack.c.bf16 %v1240, %v1240
      %v1257 = vpack.c.bf16 %v1241, %v1241
      %v1258 = vpack.c.bf16 %v1242, %v1242
      %v1259 = vpack.c.bf16 %v1243, %v1243
      %v1260 = vpack.c.bf16 %v1244, %v1244
      %v1261 = vpack.c.bf16 %v1245, %v1245
      %v1262 = vpack.c.bf16 %v1246, %v1246
      %v1263 = vpack.c.bf16 %v1247, %v1247
      %v1264 = vpack.c.bf16 %v1248, %v1248
      %v1265 = vpack.c.bf16 %v1249, %v1249
      %v1266 = vpack.c.bf16 %v1250, %v1250
      %v1267 = vpack.c.bf16 %v1251, %v1251
      %v1268 = vpack.c.bf16 %v1252, %v1252
      %v1269 = vpack.c.bf16 %v1253, %v1253
      %v1286 = vunpack.c.l.b16 %v1254
      %v1287 = vunpack.c.l.b16 %v1255
      %v1288 = vunpack.c.l.b16 %v1256
      %v1289 = vunpack.c.l.b16 %v1257
      %v1290 = vunpack.c.l.b16 %v1258
      %v1291 = vunpack.c.l.b16 %v1259
      %v1292 = vunpack.c.l.b16 %v1260
      %v1293 = vunpack.c.l.b16 %v1261
      %v1294 = vunpack.c.l.b16 %v1262
      %v1295 = vunpack.c.l.b16 %v1263
      %v1296 = vunpack.c.l.b16 %v1264
      %v1297 = vunpack.c.l.b16 %v1265
      %v1298 = vunpack.c.l.b16 %v1266
      %v1299 = vunpack.c.l.b16 %v1267
      %v1300 = vunpack.c.l.b16 %v1268
      %v1301 = vunpack.c.l.b16 %v1269
      %v1302 = vpack.c.b16 %v1287, %v1286
      %v1303 = vpack.c.b16 %v1289, %v1288
      %v1304 = vpack.c.b16 %v1291, %v1290
      %v1305 = vpack.c.b16 %v1293, %v1292
      %v1306 = vpack.c.b16 %v1295, %v1294
      %v1307 = vpack.c.b16 %v1297, %v1296
      %v1308 = vpack.c.b16 %v1299, %v1298
      %v1309 = vpack.c.b16 %v1301, %v1300
      %1318 = vst.msk [vmem:[%s450] sm:$0xff] %vm684, %v1302
      %1319 = vst.msk [vmem:[%s450 + $0x8] sm:$0xff] %vm684, %v1303
      %1320 = vst.msk [vmem:[%s450 + $0x10] sm:$0xff] %vm684, %v1304
      %1321 = vst.msk [vmem:[%s450 + $0x18] sm:$0xff] %vm684, %v1305
      %1322 = vst.msk [vmem:[%s450 + $0x20] sm:$0xff] %vm684, %v1306
      %1323 = vst.msk [vmem:[%s450 + $0x28] sm:$0xff] %vm684, %v1307
      %1324 = vst.msk [vmem:[%s450 + $0x30] sm:$0xff] %vm684, %v1308
      %1325 = vst.msk [vmem:[%s450 + $0x38] sm:$0xff] %vm684, %v1309
      %p1326 = scmp.lt.s32.totalorder %s24, 1
      %s1327 = scalar_select %p1326, %s24, 1
      %s1328 = smul.addr %s1327, 16
      %s1329 = smul.addr %s1328, 4
      %s1330 = scalar_lea.vmem %s9, %s1329
      %p1331 = scmp.lt.s32.totalorder %s24, 1
      %s1332 = scalar_select %p1331, %s24, 1
      %s1333 = smul.addr %s1332, 8
      %s1334 = smul.addr %s1333, 4
      %s1335 = scalar_lea.vmem %s10, %s1334
      %p1336 = scmp.lt.s32.totalorder %s24, 1
      %s1337 = scalar_select %p1336, %s24, 1
      %s1338 = smul.addr %s1337, 8
      %s1339 = smul.addr %s1338, 4
      %s1340 = scalar_lea.vmem %s11, %s1339
      %p1341 = scmp.lt.s32.totalorder %s24, 1
      %s1342 = scalar_select %p1341, %s24, 1
      %s1343 = smul.addr %s1342, 16
      %s1344 = smul.addr %s1343, 4
      %s1345 = scalar_lea.vmem %s12, %s1344
      // Predicated region
      $region57: #{inception_c_forward.6} parent=55 // pred_check
        %p1346 = pneg %p236
      $region58: #{inception_c_forward.6} parent=55 // pred_check_branch
        %1348 = sbr.rel (%p1346) target = $region60
      $region59: #{inception_c_forward.6} parent=55 // pred_region
        _
      $region60: #{inception_c_forward.6} parent=55 // pred_fallthru
        _
      // Predicated region
      $region61: #{inception_c_forward.6} parent=55 // pred_check
        %p1349 = pneg %p262
      $region62: #{inception_c_forward.6} parent=55 // pred_check_branch
        %1351 = sbr.rel (%p1349) target = $region64
      $region63: #{inception_c_forward.6} parent=55 // pred_region
        _
      $region64: #{inception_c_forward.6} parent=55 // pred_fallthru
        _
      // Predicated region
      $region65: #{inception_c_forward.6} parent=55 // pred_check
        %p1352 = pneg %p288
      $region66: #{inception_c_forward.6} parent=55 // pred_check_branch
        %1354 = sbr.rel (%p1352) target = $region68
      $region67: #{inception_c_forward.6} parent=55 // pred_region
        _
      $region68: #{inception_c_forward.6} parent=55 // pred_fallthru
        _
      // Predicated region
      $region69: #{inception_c_forward.6} parent=55 // pred_check
        %p1355 = pneg %p314
      $region70: #{inception_c_forward.6} parent=55 // pred_check_branch
        %1357 = sbr.rel (%p1355) target = $region72
      $region71: #{inception_c_forward.6} parent=55 // pred_region
        _
      $region72: #{inception_c_forward.6} parent=55 // pred_fallthru
        _
    $region56: #{inception_c_forward.6} parent=5 // pred_fallthru
      _
    %p1358 = scmp.le.s32.totalorder 2, %s19
    // Predicated region
    $region73: #{inception_c_forward.6} parent=5 // pred_check
      %p1359 = pneg %p1358
    $region74: #{inception_c_forward.6} parent=5 // pred_check_branch
      %1361 = sbr.rel (%p1359) target = $region76
    $region75: #{inception_c_forward.6} parent=5 // pred_region
      %s1362 = ssub.s32 %s19, 2
      // Predicated region
      $region77: #{inception_c_forward.6} parent=75 // pred_check
        %p1363 = pneg %p242
      $region78: #{inception_c_forward.6} parent=75 // pred_check_branch
        %1365 = sbr.rel (%p1363) target = $region80
      $region79: #{inception_c_forward.6} parent=75 // pred_region
        %p1366 = scmp.lt.s32.totalorder %s25, 1
        %s1367 = scalar_select %p1366, %s25, 1
        %s1368 = smul.addr %s1367, 16
        %s1369 = smul.addr %s1368, 4
        %s1370 = scalar_lea.vmem %s9, %s1369
      $region80: #{inception_c_forward.6} parent=75 // pred_fallthru
        _
      // Predicated region
      $region81: #{inception_c_forward.6} parent=75 // pred_check
        %p1371 = pneg %p268
      $region82: #{inception_c_forward.6} parent=75 // pred_check_branch
        %1373 = sbr.rel (%p1371) target = $region84
      $region83: #{inception_c_forward.6} parent=75 // pred_region
        %p1374 = scmp.lt.s32.totalorder %s25, 1
        %s1375 = scalar_select %p1374, %s25, 1
        %s1376 = smul.addr %s1375, 8
        %s1377 = smul.addr %s1376, 4
        %s1378 = scalar_lea.vmem %s10, %s1377
      $region84: #{inception_c_forward.6} parent=75 // pred_fallthru
        _
      // Predicated region
      $region85: #{inception_c_forward.6} parent=75 // pred_check
        %p1379 = pneg %p294
      $region86: #{inception_c_forward.6} parent=75 // pred_check_branch
        %1381 = sbr.rel (%p1379) target = $region88
      $region87: #{inception_c_forward.6} parent=75 // pred_region
        %p1382 = scmp.lt.s32.totalorder %s25, 1
        %s1383 = scalar_select %p1382, %s25, 1
        %s1384 = smul.addr %s1383, 8
        %s1385 = smul.addr %s1384, 4
        %s1386 = scalar_lea.vmem %s11, %s1385
      $region88: #{inception_c_forward.6} parent=75 // pred_fallthru
        _
      // Predicated region
      $region89: #{inception_c_forward.6} parent=75 // pred_check
        %p1387 = pneg %p320
      $region90: #{inception_c_forward.6} parent=75 // pred_check_branch
        %1389 = sbr.rel (%p1387) target = $region92
      $region91: #{inception_c_forward.6} parent=75 // pred_region
        %p1390 = scmp.lt.s32.totalorder %s25, 1
        %s1391 = scalar_select %p1390, %s25, 1
        %s1392 = smul.addr %s1391, 16
        %s1393 = smul.addr %s1392, 4
        %s1394 = scalar_lea.vmem %s12, %s1393
      $region92: #{inception_c_forward.6} parent=75 // pred_fallthru
        _
    $region76: #{inception_c_forward.6} parent=5 // pred_fallthru
      _
  $region6: #{inception_c_forward.6} parent=0 // loop_footer
    %s23 = sadd.s32 1, %s19
  $region7: #{inception_c_forward.6} parent=0 // loop_footer_branch
    %18 = sbr.rel target = $region3
  $region8: #{inception_c_forward.6} parent=0 // loop_exit
    _

// kernel: inception_c_forward.11
$region0: #{inception_c_forward.11}
  #allocation0 [shape = 'u32[]', space=smem, size = 0x4, offset = 0x4, fixed_abs, tag = 'smem constant byte address 0x4 - core index']
  #allocation1 [shape = 'u32[144,128]{1,0:T(1,128)}', space=vmem, size = 0x12000, scoped, tag = 'internal scratch']
  %s0 = inlined_call_operand.vmem [shape: bf16[2,8,8,16], index: 0, kind: input, shape index: {}]
  %s1 = inlined_call_operand.vmem [shape: bf16[2,8,8,16], index: 1, kind: input, shape index: {}]
  %s2 = inlined_call_operand.vmem [shape: bf16[2,8,8,192], index: 2, kind: input, shape index: {}]
  %s3 = inlined_call_operand.vmem [shape: bf16[2,8,8,192], index: 3, kind: input, shape index: {}]
  %s4 = inlined_call_operand.vmem [shape: bf16[112,192], index: 4, kind: input, shape index: {}]
  %s5 = inlined_call_operand.vmem [shape: bf16[112,192], index: 5, kind: input, shape index: {}]
  %s6 = inlined_call_operand.vmem [shape: f32[1,192], index: 6, kind: input, shape index: {}]
  %s7 = inlined_call_operand.vmem [shape: f32[1,192], index: 7, kind: input, shape index: {}]
  %s8 = inlined_call_operand.hbm [shape: f32[2,8,8,768], index: 8, kind: output, shape index: {}]
  %s9 = sld [smem:[#allocation0]]
  $region65: #{inception_c_forward.11} parent=0
    _
  %s11 = ssub.s32 1, %s9
  %s12 = scalar_select 0, %s11, %s9
  $region1: #{inception_c_forward.11} parent=0
    #allocation2 [shape = 'u8[393216]{0}', space=vmem, size = 0x60000, scoped, tag = 'output window, operand 0']
    #allocation3 [shape = 's32[2]{0}', space=sflag, size = 0x8, scoped, tag = 'scoped memory for inception_c_forward.11']
    %13 = vsyncpa [#allocation3], 0
    %s14 = scalar_lea.sflag [#allocation3], 1
    %15 = vsyncpa %s14, 0
    loop: start=0, step=1, limit=4
    $region2: #{inception_c_forward.11} parent=1 // loop_pre_header
      _
    $region3: #{inception_c_forward.11} parent=1 // loop_header
      %s17 = sphi 0, %s21
      %p18 = scmp.ge.s32.totalorder %s17, 4
      %s27 = sphi 0, %s29
      %s30 = sphi 0, %s27
      %s31 = sphi 0, %s30
      %s47 = sphi 0, %s31
      %s53 = sphi 0, %s55
      %s56 = sphi 0, %s53
      %s57 = sphi 0, %s56
      %s73 = sphi 0, %s57
      %s79 = sphi 0, %s81
      %s82 = sphi 0, %s79
      %s83 = sphi 0, %s82
      %s99 = sphi 0, %s83
      %s105 = sphi 0, %s107
      %s108 = sphi 0, %s105
      %s109 = sphi 0, %s108
      %s125 = sphi 0, %s109
      %s129 = sphi 0, %s129
      %s131 = sphi 0, %s129
      %s132 = sphi 0, %s131
      %s146 = sphi 0, %s132
      %s150 = sphi 0, %s150
      %s152 = sphi 0, %s150
      %s153 = sphi 0, %s152
      %s167 = sphi 0, %s153
      %s171 = sphi 0, %s171
      %s173 = sphi 0, %s171
      %s174 = sphi 0, %s173
      %s188 = sphi 0, %s174
      %s192 = sphi 0, %s192
      %s194 = sphi 0, %s192
      %s195 = sphi 0, %s194
      %s209 = sphi 0, %s195
      %s215 = sphi 0, %s217
      %s218 = sphi 0, %s215
      %s219 = sphi 0, %s218
      %s235 = sphi 0, %s219
    $region4: #{inception_c_forward.11} parent=1 // loop_header_branch
      %20 = sbr.rel (%p18) target = $region8
    $region5: #{inception_c_forward.11} parent=1 // loop_body
      %s22 = ssub.s32 %s17, 1
      %s23 = ssub.s32 %s17, 2
      %s24 = sadd.s32 %s17, 1
      %s25 = ssub.s32 %s17, %s24
      %p26 = scmp.eq.s32.totalorder %s25, 0
      %s28 = sadd.s32 %s27, 1
      %s29 = scalar_select %p26, %s27, %s28
      %p32 = pneg %p26
      %p33 = scmp.eq.s32.totalorder %s17, 1
      %p34 = por %p32, %p33
      %p35 = scmp.ne.s32.totalorder %s27, %s30
      %p36 = scmp.eq.s32.totalorder %s17, 0
      %p37 = por %p35, %p36
      %p38 = scmp.ne.s32.totalorder %s27, %s30
      %p39 = scmp.eq.s32.totalorder %s22, 1
      %p40 = por %p38, %p39
      %p41 = scmp.ne.s32.totalorder %s30, %s31
      %p42 = scmp.eq.s32.totalorder %s22, 0
      %p43 = por %p41, %p42
      %p44 = scmp.ne.s32.totalorder %s30, %s31
      %p45 = scmp.eq.s32.totalorder %s23, 1
      %p46 = por %p44, %p45
      %p48 = scmp.ne.s32.totalorder %s31, %s47
      %p49 = scmp.eq.s32.totalorder %s23, 0
      %p50 = por %p48, %p49
      %s51 = ssub.s32 %s17, %s24
      %p52 = scmp.eq.s32.totalorder %s51, 0
      %s54 = sadd.s32 %s53, 1
      %s55 = scalar_select %p52, %s53, %s54
      %p58 = pneg %p52
      %p59 = scmp.eq.s32.totalorder %s17, 1
      %p60 = por %p58, %p59
      %p61 = scmp.ne.s32.totalorder %s53, %s56
      %p62 = scmp.eq.s32.totalorder %s17, 0
      %p63 = por %p61, %p62
      %p64 = scmp.ne.s32.totalorder %s53, %s56
      %p65 = scmp.eq.s32.totalorder %s22, 1
      %p66 = por %p64, %p65
      %p67 = scmp.ne.s32.totalorder %s56, %s57
      %p68 = scmp.eq.s32.totalorder %s22, 0
      %p69 = por %p67, %p68
      %p70 = scmp.ne.s32.totalorder %s56, %s57
      %p71 = scmp.eq.s32.totalorder %s23, 1
      %p72 = por %p70, %p71
      %p74 = scmp.ne.s32.totalorder %s57, %s73
      %p75 = scmp.eq.s32.totalorder %s23, 0
      %p76 = por %p74, %p75
      %s77 = ssub.s32 %s17, %s24
      %p78 = scmp.eq.s32.totalorder %s77, 0
      %s80 = sadd.s32 %s79, 1
      %s81 = scalar_select %p78, %s79, %s80
      %p84 = pneg %p78
      %p85 = scmp.eq.s32.totalorder %s17, 1
      %p86 = por %p84, %p85
      %p87 = scmp.ne.s32.totalorder %s79, %s82
      %p88 = scmp.eq.s32.totalorder %s17, 0
      %p89 = por %p87, %p88
      %p90 = scmp.ne.s32.totalorder %s79, %s82
      %p91 = scmp.eq.s32.totalorder %s22, 1
      %p92 = por %p90, %p91
      %p93 = scmp.ne.s32.totalorder %s82, %s83
      %p94 = scmp.eq.s32.totalorder %s22, 0
      %p95 = por %p93, %p94
      %p96 = scmp.ne.s32.totalorder %s82, %s83
      %p97 = scmp.eq.s32.totalorder %s23, 1
      %p98 = por %p96, %p97
      %p100 = scmp.ne.s32.totalorder %s83, %s99
      %p101 = scmp.eq.s32.totalorder %s23, 0
      %p102 = por %p100, %p101
      %s103 = ssub.s32 %s17, %s24
      %p104 = scmp.eq.s32.totalorder %s103, 0
      %s106 = sadd.s32 %s105, 1
      %s107 = scalar_select %p104, %s105, %s106
      %p110 = pneg %p104
      %p111 = scmp.eq.s32.totalorder %s17, 1
      %p112 = por %p110, %p111
      %p113 = scmp.ne.s32.totalorder %s105, %s108
      %p114 = scmp.eq.s32.totalorder %s17, 0
      %p115 = por %p113, %p114
      %p116 = scmp.ne.s32.totalorder %s105, %s108
      %p117 = scmp.eq.s32.totalorder %s22, 1
      %p118 = por %p116, %p117
      %p119 = scmp.ne.s32.totalorder %s108, %s109
      %p120 = scmp.eq.s32.totalorder %s22, 0
      %p121 = por %p119, %p120
      %p122 = scmp.ne.s32.totalorder %s108, %s109
      %p123 = scmp.eq.s32.totalorder %s23, 1
      %p124 = por %p122, %p123
      %p126 = scmp.ne.s32.totalorder %s109, %s125
      %p127 = scmp.eq.s32.totalorder %s23, 0
      %p128 = por %p126, %p127
      %s130 = sadd.s32 %s129, 1
      %p133 = scmp.eq.s32.totalorder %s17, 1
      %p134 = scmp.ne.s32.totalorder %s129, %s131
      %p135 = scmp.eq.s32.totalorder %s17, 0
      %p136 = por %p134, %p135
      %p137 = scmp.ne.s32.totalorder %s129, %s131
      %p138 = scmp.eq.s32.totalorder %s22, 1
      %p139 = por %p137, %p138
      %p140 = scmp.ne.s32.totalorder %s131, %s132
      %p141 = scmp.eq.s32.totalorder %s22, 0
      %p142 = por %p140, %p141
      %p143 = scmp.ne.s32.totalorder %s131, %s132
      %p144 = scmp.eq.s32.totalorder %s23, 1
      %p145 = por %p143, %p144
      %p147 = scmp.ne.s32.totalorder %s132, %s146
      %p148 = scmp.eq.s32.totalorder %s23, 0
      %p149 = por %p147, %p148
      %s151 = sadd.s32 %s150, 1
      %p154 = scmp.eq.s32.totalorder %s17, 1
      %p155 = scmp.ne.s32.totalorder %s150, %s152
      %p156 = scmp.eq.s32.totalorder %s17, 0
      %p157 = por %p155, %p156
      %p158 = scmp.ne.s32.totalorder %s150, %s152
      %p159 = scmp.eq.s32.totalorder %s22, 1
      %p160 = por %p158, %p159
      %p161 = scmp.ne.s32.totalorder %s152, %s153
      %p162 = scmp.eq.s32.totalorder %s22, 0
      %p163 = por %p161, %p162
      %p164 = scmp.ne.s32.totalorder %s152, %s153
      %p165 = scmp.eq.s32.totalorder %s23, 1
      %p166 = por %p164, %p165
      %p168 = scmp.ne.s32.totalorder %s153, %s167
      %p169 = scmp.eq.s32.totalorder %s23, 0
      %p170 = por %p168, %p169
      %s172 = sadd.s32 %s171, 1
      %p175 = scmp.eq.s32.totalorder %s17, 1
      %p176 = scmp.ne.s32.totalorder %s171, %s173
      %p177 = scmp.eq.s32.totalorder %s17, 0
      %p178 = por %p176, %p177
      %p179 = scmp.ne.s32.totalorder %s171, %s173
      %p180 = scmp.eq.s32.totalorder %s22, 1
      %p181 = por %p179, %p180
      %p182 = scmp.ne.s32.totalorder %s173, %s174
      %p183 = scmp.eq.s32.totalorder %s22, 0
      %p184 = por %p182, %p183
      %p185 = scmp.ne.s32.totalorder %s173, %s174
      %p186 = scmp.eq.s32.totalorder %s23, 1
      %p187 = por %p185, %p186
      %p189 = scmp.ne.s32.totalorder %s174, %s188
      %p190 = scmp.eq.s32.totalorder %s23, 0
      %p191 = por %p189, %p190
      %s193 = sadd.s32 %s192, 1
      %p196 = scmp.eq.s32.totalorder %s17, 1
      %p197 = scmp.ne.s32.totalorder %s192, %s194
      %p198 = scmp.eq.s32.totalorder %s17, 0
      %p199 = por %p197, %p198
      %p200 = scmp.ne.s32.totalorder %s192, %s194
      %p201 = scmp.eq.s32.totalorder %s22, 1
      %p202 = por %p200, %p201
      %p203 = scmp.ne.s32.totalorder %s194, %s195
      %p204 = scmp.eq.s32.totalorder %s22, 0
      %p205 = por %p203, %p204
      %p206 = scmp.ne.s32.totalorder %s194, %s195
      %p207 = scmp.eq.s32.totalorder %s23, 1
      %p208 = por %p206, %p207
      %p210 = scmp.ne.s32.totalorder %s195, %s209
      %p211 = scmp.eq.s32.totalorder %s23, 0
      %p212 = por %p210, %p211
      %s213 = ssub.s32 %s17, %s24
      %p214 = scmp.eq.s32.totalorder %s213, 0
      %s216 = sadd.s32 %s215, 1
      %s217 = scalar_select %p214, %s215, %s216
      %p220 = pneg %p214
      %p221 = scmp.eq.s32.totalorder %s17, 1
      %p222 = por %p220, %p221
      %p223 = scmp.ne.s32.totalorder %s215, %s218
      %p224 = scmp.eq.s32.totalorder %s17, 0
      %p225 = por %p223, %p224
      %p226 = scmp.ne.s32.totalorder %s215, %s218
      %p227 = scmp.eq.s32.totalorder %s22, 1
      %p228 = por %p226, %p227
      %p229 = scmp.ne.s32.totalorder %s218, %s219
      %p230 = scmp.eq.s32.totalorder %s22, 0
      %p231 = por %p229, %p230
      %p232 = scmp.ne.s32.totalorder %s218, %s219
      %p233 = scmp.eq.s32.totalorder %s23, 1
      %p234 = por %p232, %p233
      %p236 = scmp.ne.s32.totalorder %s219, %s235
      %p237 = scmp.eq.s32.totalorder %s23, 0
      %p238 = por %p236, %p237
      %p239 = scmp.le.s32.totalorder 1, %s17
      %p240 = scmp.lt.s32.totalorder %s17, 3
      %p241 = pnand %p239, %p240
      %p242 = pneg %p241
      // Predicated region
      $region9: #{inception_c_forward.11} parent=5 // pred_check
        _
      $region10: #{inception_c_forward.11} parent=5 // pred_check_branch
        %244 = sbr.rel (%p241) target = $region12
      $region11: #{inception_c_forward.11} parent=5 // pred_region
        %s245 = ssub.s32 %s17, 1
        // Predicated region
        $region13: #{inception_c_forward.11} parent=11 // pred_check
          %p246 = pneg %p142
        $region14: #{inception_c_forward.11} parent=11 // pred_check_branch
          %248 = sbr.rel (%p246) target = $region16
        $region15: #{inception_c_forward.11} parent=11 // pred_region
          _
        $region16: #{inception_c_forward.11} parent=11 // pred_fallthru
          _
        // Predicated region
        $region17: #{inception_c_forward.11} parent=11 // pred_check
          %p249 = pneg %p163
        $region18: #{inception_c_forward.11} parent=11 // pred_check_branch
          %251 = sbr.rel (%p249) target = $region20
        $region19: #{inception_c_forward.11} parent=11 // pred_region
          _
        $region20: #{inception_c_forward.11} parent=11 // pred_fallthru
          _
        // Predicated region
        $region21: #{inception_c_forward.11} parent=11 // pred_check
          %p252 = pneg %p184
        $region22: #{inception_c_forward.11} parent=11 // pred_check_branch
          %254 = sbr.rel (%p252) target = $region24
        $region23: #{inception_c_forward.11} parent=11 // pred_region
          _
        $region24: #{inception_c_forward.11} parent=11 // pred_fallthru
          _
        // Predicated region
        $region25: #{inception_c_forward.11} parent=11 // pred_check
          %p255 = pneg %p205
        $region26: #{inception_c_forward.11} parent=11 // pred_check_branch
          %257 = sbr.rel (%p255) target = $region28
        $region27: #{inception_c_forward.11} parent=11 // pred_region
          _
        $region28: #{inception_c_forward.11} parent=11 // pred_fallthru
          _
      $region12: #{inception_c_forward.11} parent=5 // pred_fallthru
        _
      %p258 = scmp.lt.s32.totalorder %s17, 2
      // Predicated region
      $region29: #{inception_c_forward.11} parent=5 // pred_check
        %p259 = pneg %p258
      $region30: #{inception_c_forward.11} parent=5 // pred_check_branch
        %261 = sbr.rel (%p259) target = $region32
      $region31: #{inception_c_forward.11} parent=5 // pred_region
        // Predicated region
        $region33: #{inception_c_forward.11} parent=31 // pred_check
          %p262 = pneg %p37
        $region34: #{inception_c_forward.11} parent=31 // pred_check_branch
          %264 = sbr.rel (%p262) target = $region36
        $region35: #{inception_c_forward.11} parent=31 // pred_region
          %p265 = scmp.lt.s32.totalorder %s17, 1
          %s266 = scalar_select %p265, %s17, 1
          %s267 = smul.addr %s266, 8
          %s268 = smul.addr %s267, 4
          %s269 = scalar_lea.vmem %s0, %s268
        $region36: #{inception_c_forward.11} parent=31 // pred_fallthru
          _
        // Predicated region
        $region37: #{inception_c_forward.11} parent=31 // pred_check
          %p270 = pneg %p63
        $region38: #{inception_c_forward.11} parent=31 // pred_check_branch
          %272 = sbr.rel (%p270) target = $region40
        $region39: #{inception_c_forward.11} parent=31 // pred_region
          %p273 = scmp.lt.s32.totalorder %s17, 1
          %s274 = scalar_select %p273, %s17, 1
          %s275 = smul.addr %s274, 8
          %s276 = smul.addr %s275, 4
          %s277 = scalar_lea.vmem %s1, %s276
        $region40: #{inception_c_forward.11} parent=31 // pred_fallthru
          _
        // Predicated region
        $region41: #{inception_c_forward.11} parent=31 // pred_check
          %p278 = pneg %p89
        $region42: #{inception_c_forward.11} parent=31 // pred_check_branch
          %280 = sbr.rel (%p278) target = $region44
        $region43: #{inception_c_forward.11} parent=31 // pred_region
          %p281 = scmp.lt.s32.totalorder %s17, 1
          %s282 = scalar_select %p281, %s17, 1
          %s283 = smul.addr %s282, 16
          %s284 = smul.addr %s283, 4
          %s285 = scalar_lea.vmem %s2, %s284
        $region44: #{inception_c_forward.11} parent=31 // pred_fallthru
          _
        // Predicated region
        $region45: #{inception_c_forward.11} parent=31 // pred_check
          %p286 = pneg %p115
        $region46: #{inception_c_forward.11} parent=31 // pred_check_branch
          %288 = sbr.rel (%p286) target = $region48
        $region47: #{inception_c_forward.11} parent=31 // pred_region
          %p289 = scmp.lt.s32.totalorder %s17, 1
          %s290 = scalar_select %p289, %s17, 1
          %s291 = smul.addr %s290, 16
          %s292 = smul.addr %s291, 4
          %s293 = scalar_lea.vmem %s3, %s292
        $region48: #{inception_c_forward.11} parent=31 // pred_fallthru
          _
      $region32: #{inception_c_forward.11} parent=5 // pred_fallthru
        _
      %p294 = scmp.le.s32.totalorder 1, %s17
      %p295 = scmp.lt.s32.totalorder %s17, 3
      %p296 = pnand %p294, %p295
      %p297 = pneg %p296
      // Predicated region
      $region49: #{inception_c_forward.11} parent=5 // pred_check
        _
      $region50: #{inception_c_forward.11} parent=5 // pred_check_branch
        %299 = sbr.rel (%p296) target = $region52
      $region51: #{inception_c_forward.11} parent=5 // pred_region
        %s300 = ssub.s32 %s17, 1
        %p301 = scmp.lt.s32.totalorder %s22, 1
        %s302 = scalar_select %p301, %s22, 1
        %s303 = smul.addr %s302, 8
        %s304 = smul.addr %s303, 4
        %s305 = scalar_lea.vmem %s0, %s304
        %p306 = pneg %p43
        %p307 = pneg %p40
        %p308 = scmp.lt.s32.totalorder %s22, 1
        %s309 = scalar_select %p308, %s22, 1
        %s310 = smul.addr %s309, 8
        %s311 = smul.addr %s310, 4
        %s312 = scalar_lea.vmem %s1, %s311
        %p313 = pneg %p69
        %p314 = pneg %p66
        %p315 = scmp.lt.s32.totalorder %s22, 1
        %s316 = scalar_select %p315, %s22, 1
        %s317 = smul.addr %s316, 16
        %s318 = smul.addr %s317, 4
        %s319 = scalar_lea.vmem %s2, %s318
        %p320 = pneg %p95
        %p321 = pneg %p92
        %p322 = scmp.lt.s32.totalorder %s22, 1
        %s323 = scalar_select %p322, %s22, 1
        %s324 = smul.addr %s323, 16
        %s325 = smul.addr %s324, 4
        %s326 = scalar_lea.vmem %s3, %s325
        %p327 = pneg %p121
        %p328 = pneg %p118
        %p329 = pneg %p142
        %p330 = pneg %p139
        %p331 = pneg %p163
        %p332 = pneg %p160
        %p333 = pneg %p184
        %p334 = pneg %p181
        %p335 = pneg %p205
        %p336 = pneg %p202
        %p337 = pneg %p231
        %p338 = pneg %p228
        %s339 = sand.u32 %s218, 1
        %s340 = scalar_lea.sflag [#allocation3], %s339
        %s341 = sand.u32 %s218, 1
        %s342 = smul.addr %s341, 384
        %s343 = scalar_lea.vmem [#allocation2], %s342
        %p344 = scmp.lt.s32.totalorder %s22, 1
        %s345 = scalar_select %p344, %s22, 1
        %s346 = smul.addr %s345, 8
        %s347 = smul.addr %s346, 4
        %s348 = scalar_lea.vmem %s0, %s347
        %p349 = scmp.lt.s32.totalorder %s22, 1
        %s350 = scalar_select %p349, %s22, 1
        %s351 = smul.addr %s350, 8
        %s352 = smul.addr %s351, 4
        %s353 = scalar_lea.vmem %s1, %s352
        %p354 = scmp.lt.s32.totalorder %s22, 1
        %s355 = scalar_select %p354, %s22, 1
        %s356 = smul.addr %s355, 16
        %s357 = smul.addr %s356, 4
        %s358 = scalar_lea.vmem %s2, %s357
        %p359 = scmp.lt.s32.totalorder %s22, 1
        %s360 = scalar_select %p359, %s22, 1
        %s361 = smul.addr %s360, 16
        %s362 = smul.addr %s361, 4
        %s363 = scalar_lea.vmem %s3, %s362
        %v365 = vld [vmem:[%s348] sm:$0xf]
        %v366 = vld [vmem:[%s348 + $0x4] sm:$0xf]
        %v367 = vld [vmem:[%s348 + $0x8] sm:$0xf]
        %v368 = vld [vmem:[%s348 + $0xc] sm:$0xf]
        %v369 = vld [vmem:[%s348 + $0x10] sm:$0xf]
        %v370 = vld [vmem:[%s348 + $0x14] sm:$0xf]
        %v371 = vld [vmem:[%s348 + $0x18] sm:$0xf]
        %v372 = vld [vmem:[%s348 + $0x1c] sm:$0xf]
        %v373 = vld [vmem:[%s4] sm:$0xff]
        %v374 = vld [vmem:[%s4 + $0x8] sm:$0xff]
        %v375 = vld [vmem:[%s4 + $0x10] sm:$0xff]
        %v376 = vld [vmem:[%s4 + $0x18] sm:$0xff]
        %v377 = vld [vmem:[%s4 + $0x20] sm:$0xff]
        %v378 = vld [vmem:[%s4 + $0x28] sm:$0xff]
        %v379 = vld [vmem:[%s4 + $0x30] sm:$0xff]
        %v380 = vld [vmem:[%s4 + $0x38] sm:$0xff]
        %v381 = vld [vmem:[%s4 + $0x40] sm:$0xff]
        %v382 = vld [vmem:[%s4 + $0x48] sm:$0xff]
        %v383 = vld [vmem:[%s4 + $0x50] sm:$0xff]
        %v384 = vld [vmem:[%s4 + $0x58] sm:$0xff]
        %v385 = vld [vmem:[%s4 + $0x60] sm:$0xff]
        %v386 = vld [vmem:[%s4 + $0x68] sm:$0xff]
        %v387 = vld [vmem:[%s6] sm:$0x3]
        %395 = vrot.lane.b32.xlu0 0, 16
        %v396 = vpop.permute.xlu0 %395
        %397 = vrot.lane.b32.xlu0 %v365, 16
        %v398 = vpop.permute.xlu0 %397
        %399 = vrot.lane.b32.xlu0 %v366, 16
        %v400 = vpop.permute.xlu0 %399
        %401 = vrot.lane.b32.xlu0 %v367, 16
        %v402 = vpop.permute.xlu0 %401
        %403 = vrot.lane.b32.xlu0 %v368, 16
        %v404 = vpop.permute.xlu0 %403
        %405 = vrot.lane.b32.xlu0 %v369, 16
        %v406 = vpop.permute.xlu0 %405
        %407 = vrot.lane.b32.xlu0 %v370, 16
        %v408 = vpop.permute.xlu0 %407
        %410 = vrot.lane.b32.xlu0 0, 32
        %v411 = vpop.permute.xlu0 %410
        %412 = vrot.lane.b32.xlu0 %v365, 32
        %v413 = vpop.permute.xlu0 %412
        %414 = vrot.lane.b32.xlu0 %v366, 32
        %v415 = vpop.permute.xlu0 %414
        %416 = vrot.lane.b32.xlu0 %v367, 32
        %v417 = vpop.permute.xlu0 %416
        %418 = vrot.lane.b32.xlu0 %v368, 32
        %v419 = vpop.permute.xlu0 %418
        %420 = vrot.lane.b32.xlu0 %v369, 32
        %v421 = vpop.permute.xlu0 %420
        %422 = vrot.lane.b32.xlu0 %v370, 32
        %v423 = vpop.permute.xlu0 %422
        %424 = vrot.lane.b32.xlu0 %v371, 32
        %v425 = vpop.permute.xlu0 %424
        %427 = vrot.lane.b32.xlu0 %v365, 48
        %v428 = vpop.permute.xlu0 %427
        %429 = vrot.lane.b32.xlu0 %v366, 48
        %v430 = vpop.permute.xlu0 %429
        %431 = vrot.lane.b32.xlu0 %v367, 48
        %v432 = vpop.permute.xlu0 %431
        %433 = vrot.lane.b32.xlu0 %v368, 48
        %v434 = vpop.permute.xlu0 %433
        %435 = vrot.lane.b32.xlu0 %v369, 48
        %v436 = vpop.permute.xlu0 %435
        %437 = vrot.lane.b32.xlu0 %v370, 48
        %v438 = vpop.permute.xlu0 %437
        %439 = vrot.lane.b32.xlu0 %v371, 48
        %v440 = vpop.permute.xlu0 %439
        %441 = vrot.lane.b32.xlu0 %v372, 48
        %v442 = vpop.permute.xlu0 %441
        %443 = vrot.lane.b32.xlu0 %v366, 64
        %v444 = vpop.permute.xlu0 %443
        %445 = vrot.lane.b32.xlu0 %v367, 64
        %v446 = vpop.permute.xlu0 %445
        %447 = vrot.lane.b32.xlu0 %v368, 64
        %v448 = vpop.permute.xlu0 %447
        %449 = vrot.lane.b32.xlu0 %v369, 64
        %v450 = vpop.permute.xlu0 %449
        %451 = vrot.lane.b32.xlu0 %v370, 64
        %v452 = vpop.permute.xlu0 %451
        %453 = vrot.lane.b32.xlu0 %v371, 64
        %v454 = vpop.permute.xlu0 %453
        %455 = vrot.lane.b32.xlu0 %v372, 64
        %v456 = vpop.permute.xlu0 %455
        %457 = vrot.lane.b32.xlu0 0, 64
        %v458 = vpop.permute.xlu0 %457
        %459 = vrot.lane.b32.xlu0 %v367, 80
        %v460 = vpop.permute.xlu0 %459
        %461 = vrot.lane.b32.xlu0 %v368, 80
        %v462 = vpop.permute.xlu0 %461
        %463 = vrot.lane.b32.xlu0 %v369, 80
        %v464 = vpop.permute.xlu0 %463
        %465 = vrot.lane.b32.xlu0 %v370, 80
        %v466 = vpop.permute.xlu0 %465
        %467 = vrot.lane.b32.xlu0 %v371, 80
        %v468 = vpop.permute.xlu0 %467
        %469 = vrot.lane.b32.xlu0 %v372, 80
        %v470 = vpop.permute.xlu0 %469
        %471 = vrot.lane.b32.xlu0 0, 80
        %v472 = vpop.permute.xlu0 %471
        %473 = vrot.lane.b32.xlu0 %v368, 96
        %v474 = vpop.permute.xlu0 %473
        %475 = vrot.lane.b32.xlu0 %v369, 96
        %v476 = vpop.permute.xlu0 %475
        %477 = vrot.lane.b32.xlu0 %v370, 96
        %v478 = vpop.permute.xlu0 %477
        %479 = vrot.lane.b32.xlu0 %v371, 96
        %v480 = vpop.permute.xlu0 %479
        %481 = vrot.lane.b32.xlu0 %v372, 96
        %v482 = vpop.permute.xlu0 %481
        %483 = vrot.lane.b32.xlu0 0, 96
        %v484 = vpop.permute.xlu0 %483
        %vm485 = vcmask 130048
        %v488 = vsel %vm485, 0, %v396
        %v490 = vsel %vm485, 0, %v398
        %v493 = vsel %vm485, %v365, %v400
        %v496 = vsel %vm485, %v366, %v402
        %v499 = vsel %vm485, %v367, %v404
        %v502 = vsel %vm485, %v368, %v406
        %v505 = vsel %vm485, %v369, %v408
        %vm506 = vcmask 261120
        %v508 = vsel %vm506, %v488, %v411
        %v510 = vsel %vm506, %v488, %v413
        %v512 = vsel %vm506, %v490, %v415
        %v514 = vsel %vm506, %v493, %v417
        %v516 = vsel %vm506, %v496, %v419
        %v518 = vsel %vm506, %v499, %v421
        %v520 = vsel %vm506, %v502, %v423
        %v522 = vsel %vm506, %v505, %v425
        %vm523 = vcmask 392192
        %v525 = vsel %vm523, %v508, %v428
        %v527 = vsel %vm523, %v510, %v430
        %v529 = vsel %vm523, %v512, %v432
        %v531 = vsel %vm523, %v514, %v434
        %v533 = vsel %vm523, %v516, %v436
        %v535 = vsel %vm523, %v518, %v438
        %v537 = vsel %vm523, %v520, %v440
        %v539 = vsel %vm523, %v522, %v442
        %vm540 = vcmask 523264
        %v542 = vsel %vm540, %v525, %v444
        %v544 = vsel %vm540, %v527, %v446
        %v546 = vsel %vm540, %v529, %v448
        %v548 = vsel %vm540, %v531, %v450
        %v550 = vsel %vm540, %v533, %v452
        %v552 = vsel %vm540, %v535, %v454
        %v554 = vsel %vm540, %v537, %v456
        %v556 = vsel %vm540, %v539, %v458
        %vm557 = vcmask 654336
        %v559 = vsel %vm557, %v542, %v460
        %v561 = vsel %vm557, %v544, %v462
        %v563 = vsel %vm557, %v546, %v464
        %v565 = vsel %vm557, %v548, %v466
        %v567 = vsel %vm557, %v550, %v468
        %v569 = vsel %vm557, %v552, %v470
        %v571 = vsel %vm557, %v554, %v472
        %v572 = vsel %vm557, %v556, %v472
        %vm573 = vcmask 785408
        %v575 = vsel %vm573, %v559, %v474
        %v577 = vsel %vm573, %v561, %v476
        %v579 = vsel %vm573, %v563, %v478
        %v581 = vsel %vm573, %v565, %v480
        %v583 = vsel %vm573, %v567, %v482
        %v585 = vsel %vm573, %v569, %v484
        %v586 = vsel %vm573, %v571, %v484
        %v587 = vsel %vm573, %v572, %v484
        %v589 = vlaneseq
        %v590 = vshrl.u32 %v589, 7
        %v591 = vsub.s32 0, %v590
        %v592 = vrot.slane %v387, %v591
        %v593 = vlaneseq
        %v594 = vshrl.u32 %v593, 7
        %v595 = vsub.s32 1, %v594
        %v596 = vrot.slane %v387, %v595
        %v607 = vunpack.c.l.b16 %v575
        %v608 = vunpack.c.l.b16 %v577
        %v609 = vunpack.c.l.b16 %v579
        %v610 = vunpack.c.l.b16 %v581
        %v611 = vunpack.c.l.b16 %v583
        %v612 = vunpack.c.l.b16 %v585
        %v613 = vunpack.c.l.b16 %v586
        %v614 = vunpack.c.l.b16 %v587
        %v615 = vpack.c.b16 %v608, %v607
        %v616 = vpack.c.b16 %v610, %v609
        %v617 = vpack.c.b16 %v612, %v611
        %v618 = vpack.c.b16 %v614, %v613
        %v633 = vunpack.c.l.b16 %v373
        %v634 = vunpack.c.h.b16 %v373
        %v635 = vunpack.c.l.b16 %v374
        %v636 = vunpack.c.h.b16 %v374
        %v637 = vunpack.c.l.b16 %v375
        %v638 = vunpack.c.h.b16 %v375
        %v639 = vunpack.c.l.b16 %v376
        %v640 = vunpack.c.h.b16 %v376
        %v641 = vunpack.c.l.b16 %v377
        %v642 = vunpack.c.h.b16 %v377
        %v643 = vunpack.c.l.b16 %v378
        %v644 = vunpack.c.h.b16 %v378
        %v645 = vunpack.c.l.b16 %v379
        %v646 = vunpack.c.h.b16 %v379
        %v647 = vunpack.c.l.b16 %v380
        %v648 = vunpack.c.h.b16 %v380
        %v649 = vunpack.c.l.b16 %v381
        %v650 = vunpack.c.h.b16 %v381
        %v651 = vunpack.c.l.b16 %v382
        %v652 = vunpack.c.h.b16 %v382
        %v653 = vunpack.c.l.b16 %v383
        %v654 = vunpack.c.h.b16 %v383
        %v655 = vunpack.c.l.b16 %v384
        %v656 = vunpack.c.h.b16 %v384
        %v657 = vunpack.c.l.b16 %v385
        %v658 = vunpack.c.h.b16 %v385
        %v659 = vunpack.c.l.b16 %v386
        %v660 = vunpack.c.h.b16 %v386
        %v661 = vpack.c.b16 %v635, %v633
        %v662 = vpack.c.b16 %v636, %v634
        %v663 = vpack.c.b16 %v639, %v637
        %v664 = vpack.c.b16 %v640, %v638
        %v665 = vpack.c.b16 %v643, %v641
        %v666 = vpack.c.b16 %v644, %v642
        %v667 = vpack.c.b16 %v647, %v645
        %v668 = vpack.c.b16 %v648, %v646
        %v669 = vpack.c.b16 %v651, %v649
        %v670 = vpack.c.b16 %v652, %v650
        %v671 = vpack.c.b16 %v655, %v653
        %v672 = vpack.c.b16 %v656, %v654
        %v673 = vpack.c.b16 %v659, %v657
        %v674 = vpack.c.b16 %v660, %v658
        %vm689 = vcmask 916480
        %v691 = vsel %vm689, %v615, 0
        %v694 = vsel %vm689, %v616, 0
        %v697 = vsel %vm689, %v617, 0
        %v700 = vsel %vm689, %v618, 0
        %702 = vmatprep.subr.bf16.mxu0 %v662
        %703 = vmatpush1.bf16.msra.mxu0 %v661
        %704 = vmatprep.subr.bf16.mxu0 %v664
        %705 = vmatpush1.bf16.msra.mxu0 %v663
        %706 = vmatprep.subr.bf16.mxu0 %v666
        %707 = vmatpush1.bf16.msra.mxu0 %v665
        %708 = vmatprep.subr.bf16.mxu0 %v668
        %709 = vmatpush1.bf16.msra.mxu0 %v667
        %710 = vmatprep.subr.bf16.mxu0 %v670
        %711 = vmatpush1.bf16.msra.mxu0 %v669
        %712 = vmatprep.subr.bf16.mxu0 %v672
        %713 = vmatpush1.bf16.msra.mxu0 %v671
        %714 = vmatprep.subr.bf16.mxu0 %v674
        %715 = vmatpush1.bf16.msra.mxu0 %v673
        %716 = vmatprep.subr.bf16.mxu0 0
        %717 = vmatpush1.bf16.msra.mxu0 0
        %718 = vmatprep.subr.bf16.mxu0 0
        %719 = vmatpush1.bf16.msra.mxu0 0
        %720 = vmatprep.subr.bf16.mxu0 0
        %721 = vmatpush1.bf16.msra.mxu0 0
        %722 = vmatprep.subr.bf16.mxu0 0
        %723 = vmatpush1.bf16.msra.mxu0 0
        %724 = vmatprep.subr.bf16.mxu0 0
        %725 = vmatpush1.bf16.msra.mxu0 0
        %726 = vmatprep.subr.bf16.mxu0 0
        %727 = vmatpush1.bf16.msra.mxu0 0
        %728 = vmatprep.subr.bf16.mxu0 0
        %729 = vmatpush1.bf16.msra.mxu0 0
        %730 = vmatprep.subr.bf16.mxu0 0
        %731 = vmatpush1.bf16.msra.mxu0 0
        %732 = vmatprep.subr.bf16.mxu0 0
        %733 = vmatpush1.bf16.msra.mxu0 0
        %734 = vmatprep.mubr.bf16.mxu0 0
        %735 = vmatmul.mubr.bf16.gmra.mrb[0].mxu0 %v691
        %v736 = vpop.f32.mrb[0].mxu0
        %v737 = vadd.f32 %v592, %v736
        %v738 = vpop.f32.mrb[0].mxu0
        %v739 = vadd.f32 %v596, %v738
        %v740 = vpop.f32.mrb[0].mxu0
        %v741 = vadd.f32 %v592, %v740
        %v742 = vpop.f32.mrb[0].mxu0
        %v743 = vadd.f32 %v596, %v742
        %744 = vmatprep.mubr.bf16.mxu0 0
        %745 = vmatmul.mubr.bf16.gmra.mrb[0].mxu0 %v694
        %v746 = vpop.f32.mrb[0].mxu0
        %v747 = vadd.f32 %v592, %v746
        %v748 = vpop.f32.mrb[0].mxu0
        %v749 = vadd.f32 %v596, %v748
        %v750 = vpop.f32.mrb[0].mxu0
        %v751 = vadd.f32 %v592, %v750
        %v752 = vpop.f32.mrb[0].mxu0
        %v753 = vadd.f32 %v596, %v752
        %754 = vmatprep.mubr.bf16.mxu0 0
        %755 = vmatmul.mubr.bf16.gmra.mrb[0].mxu0 %v697
        %v756 = vpop.f32.mrb[0].mxu0
        %v757 = vadd.f32 %v592, %v756
        %v758 = vpop.f32.mrb[0].mxu0
        %v759 = vadd.f32 %v596, %v758
        %v760 = vpop.f32.mrb[0].mxu0
        %v761 = vadd.f32 %v592, %v760
        %v762 = vpop.f32.mrb[0].mxu0
        %v763 = vadd.f32 %v596, %v762
        %764 = vmatprep.mubr.bf16.mxu0 0
        %765 = vmatmul.mubr.bf16.gmra.mrb[0].mxu0 %v700
        %v766 = vpop.f32.mrb[0].mxu0
        %v767 = vadd.f32 %v592, %v766
        %v768 = vpop.f32.mrb[0].mxu0
        %v769 = vadd.f32 %v596, %v768
        %v770 = vpop.f32.mrb[0].mxu0
        %v771 = vadd.f32 %v592, %v770
        %v772 = vpop.f32.mrb[0].mxu0
        %v773 = vadd.f32 %v596, %v772
        %774 = vdwg.mxu0
        %v775 = vmax.f32 %v737, 0.0
        %v776 = vmax.f32 %v739, 0.0
        %v777 = vmax.f32 %v741, 0.0
        %v778 = vmax.f32 %v743, 0.0
        %v779 = vmax.f32 %v747, 0.0
        %v780 = vmax.f32 %v749, 0.0
        %v781 = vmax.f32 %v751, 0.0
        %v782 = vmax.f32 %v753, 0.0
        %v783 = vmax.f32 %v757, 0.0
        %v784 = vmax.f32 %v759, 0.0
        %v785 = vmax.f32 %v761, 0.0
        %v786 = vmax.f32 %v763, 0.0
        %v787 = vmax.f32 %v767, 0.0
        %v788 = vmax.f32 %v769, 0.0
        %v789 = vmax.f32 %v771, 0.0
        %v790 = vmax.f32 %v773, 0.0
        %v791 = vld [vmem:[%s353] sm:$0xf]
        %v792 = vld [vmem:[%s353 + $0x4] sm:$0xf]
        %v793 = vld [vmem:[%s353 + $0x8] sm:$0xf]
        %v794 = vld [vmem:[%s353 + $0xc] sm:$0xf]
        %v795 = vld [vmem:[%s353 + $0x10] sm:$0xf]
        %v796 = vld [vmem:[%s353 + $0x14] sm:$0xf]
        %v797 = vld [vmem:[%s353 + $0x18] sm:$0xf]
        %v798 = vld [vmem:[%s353 + $0x1c] sm:$0xf]
        %v799 = vld [vmem:[%s5] sm:$0xff]
        %v800 = vld [vmem:[%s5 + $0x8] sm:$0xff]
        %v801 = vld [vmem:[%s5 + $0x10] sm:$0xff]
        %v802 = vld [vmem:[%s5 + $0x18] sm:$0xff]
        %v803 = vld [vmem:[%s5 + $0x20] sm:$0xff]
        %v804 = vld [vmem:[%s5 + $0x28] sm:$0xff]
        %v805 = vld [vmem:[%s5 + $0x30] sm:$0xff]
        %v806 = vld [vmem:[%s5 + $0x38] sm:$0xff]
        %v807 = vld [vmem:[%s5 + $0x40] sm:$0xff]
        %v808 = vld [vmem:[%s5 + $0x48] sm:$0xff]
        %v809 = vld [vmem:[%s5 + $0x50] sm:$0xff]
        %v810 = vld [vmem:[%s5 + $0x58] sm:$0xff]
        %v811 = vld [vmem:[%s5 + $0x60] sm:$0xff]
        %v812 = vld [vmem:[%s5 + $0x68] sm:$0xff]
        %v813 = vld [vmem:[%s7] sm:$0x3]
        %v822 = vunpack.c.l.b16 %v791
        %v823 = vunpack.c.l.b16 %v792
        %v824 = vunpack.c.l.b16 %v793
        %v825 = vunpack.c.l.b16 %v794
        %v826 = vunpack.c.l.b16 %v795
        %v827 = vunpack.c.l.b16 %v796
        %v828 = vunpack.c.l.b16 %v797
        %v829 = vunpack.c.l.b16 %v798
        %v830 = vpack.c.b16 %v822, %v822
        %v831 = vpack.c.b16 %v823, %v823
        %v832 = vpack.c.b16 %v824, %v824
        %v833 = vpack.c.b16 %v825, %v825
        %v834 = vpack.c.b16 %v826, %v826
        %v835 = vpack.c.b16 %v827, %v827
        %v836 = vpack.c.b16 %v828, %v828
        %v837 = vpack.c.b16 %v829, %v829
        %v839 = vshrl.u32 %v830, 16
        %v841 = vrot.slane %v839, 6
        %v842 = vshll.u32 %v830, 16
        %v844 = vrot.slane %v842, 7
        %v845 = vor.u32 %v841, %v844
        %v847 = vshrl.u32 %v831, 16
        %v849 = vrot.slane %v847, 6
        %v850 = vshll.u32 %v831, 16
        %v852 = vrot.slane %v850, 7
        %v853 = vor.u32 %v849, %v852
        %v855 = vshrl.u32 %v832, 16
        %v857 = vrot.slane %v855, 6
        %v858 = vshll.u32 %v832, 16
        %v860 = vrot.slane %v858, 7
        %v861 = vor.u32 %v857, %v860
        %v863 = vshrl.u32 %v833, 16
        %v865 = vrot.slane %v863, 6
        %v866 = vshll.u32 %v833, 16
        %v868 = vrot.slane %v866, 7
        %v869 = vor.u32 %v865, %v868
        %v871 = vshrl.u32 %v834, 16
        %v873 = vrot.slane %v871, 6
        %v874 = vshll.u32 %v834, 16
        %v876 = vrot.slane %v874, 7
        %v877 = vor.u32 %v873, %v876
        %v879 = vshrl.u32 %v835, 16
        %v881 = vrot.slane %v879, 6
        %v882 = vshll.u32 %v835, 16
        %v884 = vrot.slane %v882, 7
        %v885 = vor.u32 %v881, %v884
        %v887 = vshrl.u32 %v836, 16
        %v889 = vrot.slane %v887, 6
        %v890 = vshll.u32 %v836, 16
        %v892 = vrot.slane %v890, 7
        %v893 = vor.u32 %v889, %v892
        %v895 = vshrl.u32 %v837, 16
        %v897 = vrot.slane %v895, 6
        %v898 = vshll.u32 %v837, 16
        %v900 = vrot.slane %v898, 7
        %v901 = vor.u32 %v897, %v900
        %vm910 = vcmask 1041408
        %vm911 = vsmask.f32 1280
        %vm912 = vmand %vm910, %vm911
        %v913 = vsel %vm912, 0, %v845
        %v914 = vsel %vm912, 0, %v853
        %v915 = vsel %vm912, 0, %v861
        %v916 = vsel %vm912, 0, %v869
        %v917 = vsel %vm912, 0, %v877
        %v918 = vsel %vm912, 0, %v885
        %v919 = vsel %vm912, 0, %v893
        %v920 = vsel %vm912, 0, %v901
        %vm921 = vcmask 1045504
        %vm922 = vsmask.f32 5376
        %vm923 = vmand %vm921, %vm922
        %v924 = vsel %vm923, %v913, 0
        %v925 = vsel %vm923, %v914, 0
        %v926 = vsel %vm923, %v915, 0
        %v927 = vsel %vm923, %v916, 0
        %v928 = vsel %vm923, %v917, 0
        %v929 = vsel %vm923, %v918, 0
        %v930 = vsel %vm923, %v919, 0
        %v931 = vsel %vm923, %v920, 0
        %v933 = vshrl.u32 %v924, 16
        %v935 = vshll.u32 %v924, 16
        %v937 = vrot.slane %v935, 1
        %v938 = vor.u32 %v933, %v937
        %v940 = vshrl.u32 %v925, 16
        %v942 = vshll.u32 %v925, 16
        %v944 = vrot.slane %v942, 1
        %v945 = vor.u32 %v940, %v944
        %v947 = vshrl.u32 %v926, 16
        %v949 = vshll.u32 %v926, 16
        %v951 = vrot.slane %v949, 1
        %v952 = vor.u32 %v947, %v951
        %v954 = vshrl.u32 %v927, 16
        %v956 = vshll.u32 %v927, 16
        %v958 = vrot.slane %v956, 1
        %v959 = vor.u32 %v954, %v958
        %v961 = vshrl.u32 %v928, 16
        %v963 = vshll.u32 %v928, 16
        %v965 = vrot.slane %v963, 1
        %v966 = vor.u32 %v961, %v965
        %v968 = vshrl.u32 %v929, 16
        %v970 = vshll.u32 %v929, 16
        %v972 = vrot.slane %v970, 1
        %v973 = vor.u32 %v968, %v972
        %v975 = vshrl.u32 %v930, 16
        %v977 = vshll.u32 %v930, 16
        %v979 = vrot.slane %v977, 1
        %v980 = vor.u32 %v975, %v979
        %v982 = vshrl.u32 %v931, 16
        %v984 = vshll.u32 %v931, 16
        %v986 = vrot.slane %v984, 1
        %v987 = vor.u32 %v982, %v986
        %988 = vrot.lane.b32.xlu0 %v938, 16
        %v989 = vpop.permute.xlu0 %988
        %990 = vrot.lane.b32.xlu0 %v945, 16
        %v991 = vpop.permute.xlu0 %990
        %992 = vrot.lane.b32.xlu0 %v952, 16
        %v993 = vpop.permute.xlu0 %992
        %994 = vrot.lane.b32.xlu0 %v959, 16
        %v995 = vpop.permute.xlu0 %994
        %996 = vrot.lane.b32.xlu0 %v966, 16
        %v997 = vpop.permute.xlu0 %996
        %998 = vrot.lane.b32.xlu0 %v973, 16
        %v999 = vpop.permute.xlu0 %998
        %1000 = vrot.lane.b32.xlu0 %v980, 16
        %v1001 = vpop.permute.xlu0 %1000
        %1002 = vrot.lane.b32.xlu0 %v987, 16
        %v1003 = vpop.permute.xlu0 %1002
        %v1012 = vrot.slane %v924, 1
        %v1013 = vrot.slane %v925, 1
        %v1014 = vrot.slane %v926, 1
        %v1015 = vrot.slane %v927, 1
        %v1016 = vrot.slane %v928, 1
        %v1017 = vrot.slane %v929, 1
        %v1018 = vrot.slane %v930, 1
        %v1019 = vrot.slane %v931, 1
        %1020 = vrot.lane.b32.xlu0 %v1012, 32
        %v1021 = vpop.permute.xlu0 %1020
        %1022 = vrot.lane.b32.xlu0 %v1013, 32
        %v1023 = vpop.permute.xlu0 %1022
        %1024 = vrot.lane.b32.xlu0 %v1014, 32
        %v1025 = vpop.permute.xlu0 %1024
        %1026 = vrot.lane.b32.xlu0 %v1015, 32
        %v1027 = vpop.permute.xlu0 %1026
        %1028 = vrot.lane.b32.xlu0 %v1016, 32
        %v1029 = vpop.permute.xlu0 %1028
        %1030 = vrot.lane.b32.xlu0 %v1017, 32
        %v1031 = vpop.permute.xlu0 %1030
        %1032 = vrot.lane.b32.xlu0 %v1018, 32
        %v1033 = vpop.permute.xlu0 %1032
        %1034 = vrot.lane.b32.xlu0 %v1019, 32
        %v1035 = vpop.permute.xlu0 %1034
        %v1036 = vrot.slane %v933, 1
        %v1037 = vrot.slane %v935, 2
        %v1038 = vor.u32 %v1036, %v1037
        %v1039 = vrot.slane %v940, 1
        %v1040 = vrot.slane %v942, 2
        %v1041 = vor.u32 %v1039, %v1040
        %v1042 = vrot.slane %v947, 1
        %v1043 = vrot.slane %v949, 2
        %v1044 = vor.u32 %v1042, %v1043
        %v1045 = vrot.slane %v954, 1
        %v1046 = vrot.slane %v956, 2
        %v1047 = vor.u32 %v1045, %v1046
        %v1048 = vrot.slane %v961, 1
        %v1049 = vrot.slane %v963, 2
        %v1050 = vor.u32 %v1048, %v1049
        %v1051 = vrot.slane %v968, 1
        %v1052 = vrot.slane %v970, 2
        %v1053 = vor.u32 %v1051, %v1052
        %v1054 = vrot.slane %v975, 1
        %v1055 = vrot.slane %v977, 2
        %v1056 = vor.u32 %v1054, %v1055
        %v1057 = vrot.slane %v982, 1
        %v1058 = vrot.slane %v984, 2
        %v1059 = vor.u32 %v1057, %v1058
        %1060 = vrot.lane.b32.xlu0 %v1038, 48
        %v1061 = vpop.permute.xlu0 %1060
        %1062 = vrot.lane.b32.xlu0 %v1041, 48
        %v1063 = vpop.permute.xlu0 %1062
        %1064 = vrot.lane.b32.xlu0 %v1044, 48
        %v1065 = vpop.permute.xlu0 %1064
        %1066 = vrot.lane.b32.xlu0 %v1047, 48
        %v1067 = vpop.permute.xlu0 %1066
        %1068 = vrot.lane.b32.xlu0 %v1050, 48
        %v1069 = vpop.permute.xlu0 %1068
        %1070 = vrot.lane.b32.xlu0 %v1053, 48
        %v1071 = vpop.permute.xlu0 %1070
        %1072 = vrot.lane.b32.xlu0 %v1056, 48
        %v1073 = vpop.permute.xlu0 %1072
        %1074 = vrot.lane.b32.xlu0 %v1059, 48
        %v1075 = vpop.permute.xlu0 %1074
        %v1076 = vrot.slane %v924, 2
        %v1077 = vrot.slane %v925, 2
        %v1078 = vrot.slane %v926, 2
        %v1079 = vrot.slane %v927, 2
        %v1080 = vrot.slane %v928, 2
        %v1081 = vrot.slane %v929, 2
        %v1082 = vrot.slane %v930, 2
        %v1083 = vrot.slane %v931, 2
        %1084 = vrot.lane.b32.xlu0 %v1076, 64
        %v1085 = vpop.permute.xlu0 %1084
        %1086 = vrot.lane.b32.xlu0 %v1077, 64
        %v1087 = vpop.permute.xlu0 %1086
        %1088 = vrot.lane.b32.xlu0 %v1078, 64
        %v1089 = vpop.permute.xlu0 %1088
        %1090 = vrot.lane.b32.xlu0 %v1079, 64
        %v1091 = vpop.permute.xlu0 %1090
        %1092 = vrot.lane.b32.xlu0 %v1080, 64
        %v1093 = vpop.permute.xlu0 %1092
        %1094 = vrot.lane.b32.xlu0 %v1081, 64
        %v1095 = vpop.permute.xlu0 %1094
        %1096 = vrot.lane.b32.xlu0 %v1082, 64
        %v1097 = vpop.permute.xlu0 %1096
        %1098 = vrot.lane.b32.xlu0 %v1083, 64
        %v1099 = vpop.permute.xlu0 %1098
        %v1100 = vrot.slane %v933, 2
        %v1101 = vrot.slane %v935, 3
        %v1102 = vor.u32 %v1100, %v1101
        %v1103 = vrot.slane %v940, 2
        %v1104 = vrot.slane %v942, 3
        %v1105 = vor.u32 %v1103, %v1104
        %v1106 = vrot.slane %v947, 2
        %v1107 = vrot.slane %v949, 3
        %v1108 = vor.u32 %v1106, %v1107
        %v1109 = vrot.slane %v954, 2
        %v1110 = vrot.slane %v956, 3
        %v1111 = vor.u32 %v1109, %v1110
        %v1112 = vrot.slane %v961, 2
        %v1113 = vrot.slane %v963, 3
        %v1114 = vor.u32 %v1112, %v1113
        %v1115 = vrot.slane %v968, 2
        %v1116 = vrot.slane %v970, 3
        %v1117 = vor.u32 %v1115, %v1116
        %v1118 = vrot.slane %v975, 2
        %v1119 = vrot.slane %v977, 3
        %v1120 = vor.u32 %v1118, %v1119
        %v1121 = vrot.slane %v982, 2
        %v1122 = vrot.slane %v984, 3
        %v1123 = vor.u32 %v1121, %v1122
        %1124 = vrot.lane.b32.xlu0 %v1102, 80
        %v1125 = vpop.permute.xlu0 %1124
        %1126 = vrot.lane.b32.xlu0 %v1105, 80
        %v1127 = vpop.permute.xlu0 %1126
        %1128 = vrot.lane.b32.xlu0 %v1108, 80
        %v1129 = vpop.permute.xlu0 %1128
        %1130 = vrot.lane.b32.xlu0 %v1111, 80
        %v1131 = vpop.permute.xlu0 %1130
        %1132 = vrot.lane.b32.xlu0 %v1114, 80
        %v1133 = vpop.permute.xlu0 %1132
        %1134 = vrot.lane.b32.xlu0 %v1117, 80
        %v1135 = vpop.permute.xlu0 %1134
        %1136 = vrot.lane.b32.xlu0 %v1120, 80
        %v1137 = vpop.permute.xlu0 %1136
        %1138 = vrot.lane.b32.xlu0 %v1123, 80
        %v1139 = vpop.permute.xlu0 %1138
        %v1140 = vrot.slane %v924, 3
        %v1141 = vrot.slane %v925, 3
        %v1142 = vrot.slane %v926, 3
        %v1143 = vrot.slane %v927, 3
        %v1144 = vrot.slane %v928, 3
        %v1145 = vrot.slane %v929, 3
        %v1146 = vrot.slane %v930, 3
        %v1147 = vrot.slane %v931, 3
        %1148 = vrot.lane.b32.xlu0 %v1140, 96
        %v1149 = vpop.permute.xlu0 %1148
        %1150 = vrot.lane.b32.xlu0 %v1141, 96
        %v1151 = vpop.permute.xlu0 %1150
        %1152 = vrot.lane.b32.xlu0 %v1142, 96
        %v1153 = vpop.permute.xlu0 %1152
        %1154 = vrot.lane.b32.xlu0 %v1143, 96
        %v1155 = vpop.permute.xlu0 %1154
        %1156 = vrot.lane.b32.xlu0 %v1144, 96
        %v1157 = vpop.permute.xlu0 %1156
        %1158 = vrot.lane.b32.xlu0 %v1145, 96
        %v1159 = vpop.permute.xlu0 %1158
        %1160 = vrot.lane.b32.xlu0 %v1146, 96
        %v1161 = vpop.permute.xlu0 %1160
        %1162 = vrot.lane.b32.xlu0 %v1147, 96
        %v1163 = vpop.permute.xlu0 %1162
        %v1165 = vsel %vm485, %v924, %v989
        %v1167 = vsel %vm485, %v925, %v991
        %v1169 = vsel %vm485, %v926, %v993
        %v1171 = vsel %vm485, %v927, %v995
        %v1173 = vsel %vm485, %v928, %v997
        %v1175 = vsel %vm485, %v929, %v999
        %v1177 = vsel %vm485, %v930, %v1001
        %v1179 = vsel %vm485, %v931, %v1003
        %v1181 = vsel %vm506, %v1165, %v1021
        %v1183 = vsel %vm506, %v1167, %v1023
        %v1185 = vsel %vm506, %v1169, %v1025
        %v1187 = vsel %vm506, %v1171, %v1027
        %v1189 = vsel %vm506, %v1173, %v1029
        %v1191 = vsel %vm506, %v1175, %v1031
        %v1193 = vsel %vm506, %v1177, %v1033
        %v1195 = vsel %vm506, %v1179, %v1035
        %v1197 = vsel %vm523, %v1181, %v1061
        %v1199 = vsel %vm523, %v1183, %v1063
        %v1201 = vsel %vm523, %v1185, %v1065
        %v1203 = vsel %vm523, %v1187, %v1067
        %v1205 = vsel %vm523, %v1189, %v1069
        %v1207 = vsel %vm523, %v1191, %v1071
        %v1209 = vsel %vm523, %v1193, %v1073
        %v1211 = vsel %vm523, %v1195, %v1075
        %v1213 = vsel %vm540, %v1197, %v1085
        %v1215 = vsel %vm540, %v1199, %v1087
        %v1217 = vsel %vm540, %v1201, %v1089
        %v1219 = vsel %vm540, %v1203, %v1091
        %v1221 = vsel %vm540, %v1205, %v1093
        %v1223 = vsel %vm540, %v1207, %v1095
        %v1225 = vsel %vm540, %v1209, %v1097
        %v1227 = vsel %vm540, %v1211, %v1099
        %v1229 = vsel %vm557, %v1213, %v1125
        %v1231 = vsel %vm557, %v1215, %v1127
        %v1233 = vsel %vm557, %v1217, %v1129
        %v1235 = vsel %vm557, %v1219, %v1131
        %v1237 = vsel %vm557, %v1221, %v1133
        %v1239 = vsel %vm557, %v1223, %v1135
        %v1241 = vsel %vm557, %v1225, %v1137
        %v1243 = vsel %vm557, %v1227, %v1139
        %v1245 = vsel %vm573, %v1229, %v1149
        %v1247 = vsel %vm573, %v1231, %v1151
        %v1249 = vsel %vm573, %v1233, %v1153
        %v1251 = vsel %vm573, %v1235, %v1155
        %v1253 = vsel %vm573, %v1237, %v1157
        %v1255 = vsel %vm573, %v1239, %v1159
        %v1257 = vsel %vm573, %v1241, %v1161
        %v1259 = vsel %vm573, %v1243, %v1163
        %v1261 = vlaneseq
        %v1262 = vshrl.u32 %v1261, 7
        %v1263 = vsub.s32 0, %v1262
        %v1264 = vrot.slane %v813, %v1263
        %v1265 = vlaneseq
        %v1266 = vshrl.u32 %v1265, 7
        %v1267 = vsub.s32 1, %v1266
        %v1268 = vrot.slane %v813, %v1267
        %v1279 = vunpack.c.l.b16 %v1245
        %v1280 = vunpack.c.l.b16 %v1247
        %v1281 = vunpack.c.l.b16 %v1249
        %v1282 = vunpack.c.l.b16 %v1251
        %v1283 = vunpack.c.l.b16 %v1253
        %v1284 = vunpack.c.l.b16 %v1255
        %v1285 = vunpack.c.l.b16 %v1257
        %v1286 = vunpack.c.l.b16 %v1259
        %v1287 = vpack.c.b16 %v1280, %v1279
        %v1288 = vpack.c.b16 %v1282, %v1281
        %v1289 = vpack.c.b16 %v1284, %v1283
        %v1290 = vpack.c.b16 %v1286, %v1285
        %v1305 = vunpack.c.l.b16 %v799
        %v1306 = vunpack.c.h.b16 %v799
        %v1307 = vunpack.c.l.b16 %v800
        %v1308 = vunpack.c.h.b16 %v800
        %v1309 = vunpack.c.l.b16 %v801
        %v1310 = vunpack.c.h.b16 %v801
        %v1311 = vunpack.c.l.b16 %v802
        %v1312 = vunpack.c.h.b16 %v802
        %v1313 = vunpack.c.l.b16 %v803
        %v1314 = vunpack.c.h.b16 %v803
        %v1315 = vunpack.c.l.b16 %v804
        %v1316 = vunpack.c.h.b16 %v804
        %v1317 = vunpack.c.l.b16 %v805
        %v1318 = vunpack.c.h.b16 %v805
        %v1319 = vunpack.c.l.b16 %v806
        %v1320 = vunpack.c.h.b16 %v806
        %v1321 = vunpack.c.l.b16 %v807
        %v1322 = vunpack.c.h.b16 %v807
        %v1323 = vunpack.c.l.b16 %v808
        %v1324 = vunpack.c.h.b16 %v808
        %v1325 = vunpack.c.l.b16 %v809
        %v1326 = vunpack.c.h.b16 %v809
        %v1327 = vunpack.c.l.b16 %v810
        %v1328 = vunpack.c.h.b16 %v810
        %v1329 = vunpack.c.l.b16 %v811
        %v1330 = vunpack.c.h.b16 %v811
        %v1331 = vunpack.c.l.b16 %v812
        %v1332 = vunpack.c.h.b16 %v812
        %v1333 = vpack.c.b16 %v1307, %v1305
        %v1334 = vpack.c.b16 %v1308, %v1306
        %v1335 = vpack.c.b16 %v1311, %v1309
        %v1336 = vpack.c.b16 %v1312, %v1310
        %v1337 = vpack.c.b16 %v1315, %v1313
        %v1338 = vpack.c.b16 %v1316, %v1314
        %v1339 = vpack.c.b16 %v1319, %v1317
        %v1340 = vpack.c.b16 %v1320, %v1318
        %v1341 = vpack.c.b16 %v1323, %v1321
        %v1342 = vpack.c.b16 %v1324, %v1322
        %v1343 = vpack.c.b16 %v1327, %v1325
        %v1344 = vpack.c.b16 %v1328, %v1326
        %v1345 = vpack.c.b16 %v1331, %v1329
        %v1346 = vpack.c.b16 %v1332, %v1330
        %v1362 = vsel %vm689, %v1287, 0
        %v1365 = vsel %vm689, %v1288, 0
        %v1368 = vsel %vm689, %v1289, 0
        %v1371 = vsel %vm689, %v1290, 0
        %1373 = vmatprep.subr.bf16.mxu0 %v1334
        %1374 = vmatpush1.bf16.msra.mxu0 %v1333
        %1375 = vmatprep.subr.bf16.mxu0 %v1336
        %1376 = vmatpush1.bf16.msra.mxu0 %v1335
        %1377 = vmatprep.subr.bf16.mxu0 %v1338
        %1378 = vmatpush1.bf16.msra.mxu0 %v1337
        %1379 = vmatprep.subr.bf16.mxu0 %v1340
        %1380 = vmatpush1.bf16.msra.mxu0 %v1339
        %1381 = vmatprep.subr.bf16.mxu0 %v1342
        %1382 = vmatpush1.bf16.msra.mxu0 %v1341
        %1383 = vmatprep.subr.bf16.mxu0 %v1344
        %1384 = vmatpush1.bf16.msra.mxu0 %v1343
        %1385 = vmatprep.subr.bf16.mxu0 %v1346
        %1386 = vmatpush1.bf16.msra.mxu0 %v1345
        %1387 = vmatprep.subr.bf16.mxu0 0
        %1388 = vmatpush1.bf16.msra.mxu0 0
        %1389 = vmatprep.subr.bf16.mxu0 0
        %1390 = vmatpush1.bf16.msra.mxu0 0
        %1391 = vmatprep.subr.bf16.mxu0 0
        %1392 = vmatpush1.bf16.msra.mxu0 0
        %1393 = vmatprep.subr.bf16.mxu0 0
        %1394 = vmatpush1.bf16.msra.mxu0 0
        %1395 = vmatprep.subr.bf16.mxu0 0
        %1396 = vmatpush1.bf16.msra.mxu0 0
        %1397 = vmatprep.subr.bf16.mxu0 0
        %1398 = vmatpush1.bf16.msra.mxu0 0
        %1399 = vmatprep.subr.bf16.mxu0 0
        %1400 = vmatpush1.bf16.msra.mxu0 0
        %1401 = vmatprep.subr.bf16.mxu0 0
        %1402 = vmatpush1.bf16.msra.mxu0 0
        %1403 = vmatprep.subr.bf16.mxu0 0
        %1404 = vmatpush1.bf16.msra.mxu0 0
        %1405 = vmatprep.mubr.bf16.mxu0 0
        %1406 = vmatmul.mubr.bf16.gmra.mrb[0].mxu0 %v1362
        %v1407 = vpop.f32.mrb[0].mxu0
        %v1408 = vadd.f32 %v1264, %v1407
        %v1409 = vpop.f32.mrb[0].mxu0
        %v1410 = vadd.f32 %v1268, %v1409
        %v1411 = vpop.f32.mrb[0].mxu0
        %v1412 = vadd.f32 %v1264, %v1411
        %v1413 = vpop.f32.mrb[0].mxu0
        %v1414 = vadd.f32 %v1268, %v1413
        %1415 = vmatprep.mubr.bf16.mxu0 0
        %1416 = vmatmul.mubr.bf16.gmra.mrb[0].mxu0 %v1365
        %v1417 = vpop.f32.mrb[0].mxu0
        %v1418 = vadd.f32 %v1264, %v1417
        %v1419 = vpop.f32.mrb[0].mxu0
        %v1420 = vadd.f32 %v1268, %v1419
        %v1421 = vpop.f32.mrb[0].mxu0
        %v1422 = vadd.f32 %v1264, %v1421
        %v1423 = vpop.f32.mrb[0].mxu0
        %v1424 = vadd.f32 %v1268, %v1423
        %1425 = vmatprep.mubr.bf16.mxu0 0
        %1426 = vmatmul.mubr.bf16.gmra.mrb[0].mxu0 %v1368
        %v1427 = vpop.f32.mrb[0].mxu0
        %v1428 = vadd.f32 %v1264, %v1427
        %v1429 = vpop.f32.mrb[0].mxu0
        %v1430 = vadd.f32 %v1268, %v1429
        %v1431 = vpop.f32.mrb[0].mxu0
        %v1432 = vadd.f32 %v1264, %v1431
        %v1433 = vpop.f32.mrb[0].mxu0
        %v1434 = vadd.f32 %v1268, %v1433
        %1435 = vmatprep.mubr.bf16.mxu0 0
        %1436 = vmatmul.mubr.bf16.gmra.mrb[0].mxu0 %v1371
        %v1437 = vpop.f32.mrb[0].mxu0
        %v1438 = vadd.f32 %v1264, %v1437
        %v1439 = vpop.f32.mrb[0].mxu0
        %v1440 = vadd.f32 %v1268, %v1439
        %v1441 = vpop.f32.mrb[0].mxu0
        %v1442 = vadd.f32 %v1264, %v1441
        %v1443 = vpop.f32.mrb[0].mxu0
        %v1444 = vadd.f32 %v1268, %v1443
        %1445 = vdwg.mxu0
        %v1446 = vmax.f32 %v1408, 0.0
        %v1447 = vmax.f32 %v1410, 0.0
        %v1448 = vmax.f32 %v1412, 0.0
        %v1449 = vmax.f32 %v1414, 0.0
        %v1450 = vmax.f32 %v1418, 0.0
        %v1451 = vmax.f32 %v1420, 0.0
        %v1452 = vmax.f32 %v1422, 0.0
        %v1453 = vmax.f32 %v1424, 0.0
        %v1454 = vmax.f32 %v1428, 0.0
        %v1455 = vmax.f32 %v1430, 0.0
        %v1456 = vmax.f32 %v1432, 0.0
        %v1457 = vmax.f32 %v1434, 0.0
        %v1458 = vmax.f32 %v1438, 0.0
        %v1459 = vmax.f32 %v1440, 0.0
        %v1460 = vmax.f32 %v1442, 0.0
        %v1461 = vmax.f32 %v1444, 0.0
        %v1462 = vld [vmem:[%s358] sm:$0xff]
        %v1463 = vld [vmem:[%s358 + $0x8] sm:$0xff]
        %v1464 = vld [vmem:[%s358 + $0x10] sm:$0xff]
        %v1465 = vld [vmem:[%s358 + $0x18] sm:$0xff]
        %v1466 = vld [vmem:[%s358 + $0x20] sm:$0xff]
        %v1467 = vld [vmem:[%s358 + $0x28] sm:$0xff]
        %v1468 = vld [vmem:[%s358 + $0x30] sm:$0xff]
        %v1469 = vld [vmem:[%s358 + $0x38] sm:$0xff]
        %v1470 = vunpack.c.l.bf16 %v1462
        %v1471 = vunpack.c.h.bf16 %v1462
        %v1472 = vunpack.c.l.bf16 %v1463
        %v1473 = vunpack.c.h.bf16 %v1463
        %v1474 = vunpack.c.l.bf16 %v1464
        %v1475 = vunpack.c.h.bf16 %v1464
        %v1476 = vunpack.c.l.bf16 %v1465
        %v1477 = vunpack.c.h.bf16 %v1465
        %v1478 = vunpack.c.l.bf16 %v1466
        %v1479 = vunpack.c.h.bf16 %v1466
        %v1480 = vunpack.c.l.bf16 %v1467
        %v1481 = vunpack.c.h.bf16 %v1467
        %v1482 = vunpack.c.l.bf16 %v1468
        %v1483 = vunpack.c.h.bf16 %v1468
        %v1484 = vunpack.c.l.bf16 %v1469
        %v1485 = vunpack.c.h.bf16 %v1469
        %v1486 = vld [vmem:[%s363] sm:$0xff]
        %v1487 = vld [vmem:[%s363 + $0x8] sm:$0xff]
        %v1488 = vld [vmem:[%s363 + $0x10] sm:$0xff]
        %v1489 = vld [vmem:[%s363 + $0x18] sm:$0xff]
        %v1490 = vld [vmem:[%s363 + $0x20] sm:$0xff]
        %v1491 = vld [vmem:[%s363 + $0x28] sm:$0xff]
        %v1492 = vld [vmem:[%s363 + $0x30] sm:$0xff]
        %v1493 = vld [vmem:[%s363 + $0x38] sm:$0xff]
        %v1494 = vunpack.c.l.bf16 %v1486
        %v1495 = vunpack.c.h.bf16 %v1486
        %v1496 = vunpack.c.l.bf16 %v1487
        %v1497 = vunpack.c.h.bf16 %v1487
        %v1498 = vunpack.c.l.bf16 %v1488
        %v1499 = vunpack.c.h.bf16 %v1488
        %v1500 = vunpack.c.l.bf16 %v1489
        %v1501 = vunpack.c.h.bf16 %v1489
        %v1502 = vunpack.c.l.bf16 %v1490
        %v1503 = vunpack.c.h.bf16 %v1490
        %v1504 = vunpack.c.l.bf16 %v1491
        %v1505 = vunpack.c.h.bf16 %v1491
        %v1506 = vunpack.c.l.bf16 %v1492
        %v1507 = vunpack.c.h.bf16 %v1492
        %v1508 = vunpack.c.l.bf16 %v1493
        %v1509 = vunpack.c.h.bf16 %v1493
        %1526 = vrot.lane.b32.xlu0 %v775, 64
        %v1527 = vpop.permute.xlu0 %1526
        %1528 = vrot.lane.b32.xlu0 %v776, 64
        %v1529 = vpop.permute.xlu0 %1528
        %1530 = vrot.lane.b32.xlu0 %v777, 64
        %v1531 = vpop.permute.xlu0 %1530
        %1532 = vrot.lane.b32.xlu0 %v778, 64
        %v1533 = vpop.permute.xlu0 %1532
        %1534 = vrot.lane.b32.xlu0 %v779, 64
        %v1535 = vpop.permute.xlu0 %1534
        %1536 = vrot.lane.b32.xlu0 %v780, 64
        %v1537 = vpop.permute.xlu0 %1536
        %1538 = vrot.lane.b32.xlu0 %v781, 64
        %v1539 = vpop.permute.xlu0 %1538
        %1540 = vrot.lane.b32.xlu0 %v782, 64
        %v1541 = vpop.permute.xlu0 %1540
        %1542 = vrot.lane.b32.xlu0 %v783, 64
        %v1543 = vpop.permute.xlu0 %1542
        %1544 = vrot.lane.b32.xlu0 %v784, 64
        %v1545 = vpop.permute.xlu0 %1544
        %1546 = vrot.lane.b32.xlu0 %v785, 64
        %v1547 = vpop.permute.xlu0 %1546
        %1548 = vrot.lane.b32.xlu0 %v786, 64
        %v1549 = vpop.permute.xlu0 %1548
        %1550 = vrot.lane.b32.xlu0 %v787, 64
        %v1551 = vpop.permute.xlu0 %1550
        %1552 = vrot.lane.b32.xlu0 %v788, 64
        %v1553 = vpop.permute.xlu0 %1552
        %1554 = vrot.lane.b32.xlu0 %v789, 64
        %v1555 = vpop.permute.xlu0 %1554
        %1556 = vrot.lane.b32.xlu0 %v790, 64
        %v1557 = vpop.permute.xlu0 %1556
        %v1558 = vsel %vm540, %v1527, %v1529
        %v1559 = vsel %vm540, %v1531, %v1533
        %v1560 = vsel %vm540, %v1535, %v1537
        %v1561 = vsel %vm540, %v1539, %v1541
        %v1562 = vsel %vm540, %v1543, %v1545
        %v1563 = vsel %vm540, %v1547, %v1549
        %v1564 = vsel %vm540, %v1551, %v1553
        %v1565 = vsel %vm540, %v1555, %v1557
        %1598 = vrot.lane.b32.xlu0 %v1494, 64
        %v1599 = vpop.permute.xlu0 %1598
        %1600 = vrot.lane.b32.xlu0 %v1495, 64
        %v1601 = vpop.permute.xlu0 %1600
        %1602 = vrot.lane.b32.xlu0 %v1496, 64
        %v1603 = vpop.permute.xlu0 %1602
        %1604 = vrot.lane.b32.xlu0 %v1497, 64
        %v1605 = vpop.permute.xlu0 %1604
        %1606 = vrot.lane.b32.xlu0 %v1498, 64
        %v1607 = vpop.permute.xlu0 %1606
        %1608 = vrot.lane.b32.xlu0 %v1499, 64
        %v1609 = vpop.permute.xlu0 %1608
        %1610 = vrot.lane.b32.xlu0 %v1500, 64
        %v1611 = vpop.permute.xlu0 %1610
        %1612 = vrot.lane.b32.xlu0 %v1501, 64
        %v1613 = vpop.permute.xlu0 %1612
        %1614 = vrot.lane.b32.xlu0 %v1502, 64
        %v1615 = vpop.permute.xlu0 %1614
        %1616 = vrot.lane.b32.xlu0 %v1503, 64
        %v1617 = vpop.permute.xlu0 %1616
        %1618 = vrot.lane.b32.xlu0 %v1504, 64
        %v1619 = vpop.permute.xlu0 %1618
        %1620 = vrot.lane.b32.xlu0 %v1505, 64
        %v1621 = vpop.permute.xlu0 %1620
        %1622 = vrot.lane.b32.xlu0 %v1506, 64
        %v1623 = vpop.permute.xlu0 %1622
        %1624 = vrot.lane.b32.xlu0 %v1507, 64
        %v1625 = vpop.permute.xlu0 %1624
        %1626 = vrot.lane.b32.xlu0 %v1508, 64
        %v1627 = vpop.permute.xlu0 %1626
        %1628 = vrot.lane.b32.xlu0 %v1509, 64
        %v1629 = vpop.permute.xlu0 %1628
        %v1630 = vsel %vm540, %v1599, %v1601
        %v1631 = vsel %vm540, %v1603, %v1605
        %v1632 = vsel %vm540, %v1607, %v1609
        %v1633 = vsel %vm540, %v1611, %v1613
        %v1634 = vsel %vm540, %v1615, %v1617
        %v1635 = vsel %vm540, %v1619, %v1621
        %v1636 = vsel %vm540, %v1623, %v1625
        %v1637 = vsel %vm540, %v1627, %v1629
        %v1654 = vsel %vm540, %v1471, %v1527
        %v1655 = vsel %vm540, %v1473, %v1531
        %v1656 = vsel %vm540, %v1475, %v1535
        %v1657 = vsel %vm540, %v1477, %v1539
        %v1658 = vsel %vm540, %v1479, %v1543
        %v1659 = vsel %vm540, %v1481, %v1547
        %v1660 = vsel %vm540, %v1483, %v1551
        %v1661 = vsel %vm540, %v1485, %v1555
        %v1662 = vsel %vm540, %v1447, %v1599
        %v1663 = vsel %vm540, %v1449, %v1603
        %v1664 = vsel %vm540, %v1451, %v1607
        %v1665 = vsel %vm540, %v1453, %v1611
        %v1666 = vsel %vm540, %v1455, %v1615
        %v1667 = vsel %vm540, %v1457, %v1619
        %v1668 = vsel %vm540, %v1459, %v1623
        %v1669 = vsel %vm540, %v1461, %v1627
        %1670 = vst [vmem:[%s343] sm:$0xff] %v1470
        %1671 = vst [vmem:[%s343 + $0x8] sm:$0xff] %v1654
        %1672 = vst [vmem:[%s343 + $0x10] sm:$0xff] %v1558
        %1673 = vst [vmem:[%s343 + $0x18] sm:$0xff] %v1446
        %1674 = vst [vmem:[%s343 + $0x20] sm:$0xff] %v1662
        %1675 = vst [vmem:[%s343 + $0x28] sm:$0xff] %v1630
        %1676 = vst [vmem:[%s343 + $0x30] sm:$0xff] %v1472
        %1677 = vst [vmem:[%s343 + $0x38] sm:$0xff] %v1655
        %1678 = vst [vmem:[%s343 + $0x40] sm:$0xff] %v1559
        %1679 = vst [vmem:[%s343 + $0x48] sm:$0xff] %v1448
        %1680 = vst [vmem:[%s343 + $0x50] sm:$0xff] %v1663
        %1681 = vst [vmem:[%s343 + $0x58] sm:$0xff] %v1631
        %1682 = vst [vmem:[%s343 + $0x60] sm:$0xff] %v1474
        %1683 = vst [vmem:[%s343 + $0x68] sm:$0xff] %v1656
        %1684 = vst [vmem:[%s343 + $0x70] sm:$0xff] %v1560
        %1685 = vst [vmem:[%s343 + $0x78] sm:$0xff] %v1450
        %1686 = vst [vmem:[%s343 + $0x80] sm:$0xff] %v1664
        %1687 = vst [vmem:[%s343 + $0x88] sm:$0xff] %v1632
        %1688 = vst [vmem:[%s343 + $0x90] sm:$0xff] %v1476
        %1689 = vst [vmem:[%s343 + $0x98] sm:$0xff] %v1657
        %1690 = vst [vmem:[%s343 + $0xa0] sm:$0xff] %v1561
        %1691 = vst [vmem:[%s343 + $0xa8] sm:$0xff] %v1452
        %1692 = vst [vmem:[%s343 + $0xb0] sm:$0xff] %v1665
        %1693 = vst [vmem:[%s343 + $0xb8] sm:$0xff] %v1633
        %1694 = vst [vmem:[%s343 + $0xc0] sm:$0xff] %v1478
        %1695 = vst [vmem:[%s343 + $0xc8] sm:$0xff] %v1658
        %1696 = vst [vmem:[%s343 + $0xd0] sm:$0xff] %v1562
        %1697 = vst [vmem:[%s343 + $0xd8] sm:$0xff] %v1454
        %1698 = vst [vmem:[%s343 + $0xe0] sm:$0xff] %v1666
        %1699 = vst [vmem:[%s343 + $0xe8] sm:$0xff] %v1634
        %1700 = vst [vmem:[%s343 + $0xf0] sm:$0xff] %v1480
        %1701 = vst [vmem:[%s343 + $0xf8] sm:$0xff] %v1659
        %1702 = vst [vmem:[%s343 + $0x100] sm:$0xff] %v1563
        %1703 = vst [vmem:[%s343 + $0x108] sm:$0xff] %v1456
        %1704 = vst [vmem:[%s343 + $0x110] sm:$0xff] %v1667
        %1705 = vst [vmem:[%s343 + $0x118] sm:$0xff] %v1635
        %1706 = vst [vmem:[%s343 + $0x120] sm:$0xff] %v1482
        %1707 = vst [vmem:[%s343 + $0x128] sm:$0xff] %v1660
        %1708 = vst [vmem:[%s343 + $0x130] sm:$0xff] %v1564
        %1709 = vst [vmem:[%s343 + $0x138] sm:$0xff] %v1458
        %1710 = vst [vmem:[%s343 + $0x140] sm:$0xff] %v1668
        %1711 = vst [vmem:[%s343 + $0x148] sm:$0xff] %v1636
        %1712 = vst [vmem:[%s343 + $0x150] sm:$0xff] %v1484
        %1713 = vst [vmem:[%s343 + $0x158] sm:$0xff] %v1661
        %1714 = vst [vmem:[%s343 + $0x160] sm:$0xff] %v1565
        %1715 = vst [vmem:[%s343 + $0x168] sm:$0xff] %v1460
        %1716 = vst [vmem:[%s343 + $0x170] sm:$0xff] %v1669
        %1717 = vst [vmem:[%s343 + $0x178] sm:$0xff] %v1637
        %s1718 = sand.u32 %s218, 1
        %s1719 = scalar_lea.sflag [#allocation3], %s1718
        %s1720 = sand.u32 %s218, 1
        %s1721 = smul.addr %s1720, 384
        %s1722 = scalar_lea.vmem [#allocation2], %s1721
        // Predicated region
        $region53: #{inception_c_forward.11} parent=51 // pred_check
          %p1723 = pneg %p228
        $region54: #{inception_c_forward.11} parent=51 // pred_check_branch
          %1725 = sbr.rel (%p1723) target = $region56
        $region55: #{inception_c_forward.11} parent=51 // pred_region
          %s1727 = ssub.s32 6144, 6144
          %1728 = vsyncadd %s1719, %s1727
          %s1729 = smul.addr %s22, 48
          %s1730 = smul.addr %s1729, 128
          %s1731 = scalar_lea.hbm %s8, %s1730
          %s1732 = sshll.u32 %s1722, 4
          %s1733 = int_to_ptr.vmem [resolvable:$true] %s1732
          %1738 = dma.vmem_to_hbm [thread:$0]  %s1733, 6144, %s1731, %s1719, 768, 768, 48
        $region56: #{inception_c_forward.11} parent=51 // pred_fallthru
          _
      $region52: #{inception_c_forward.11} parent=5 // pred_fallthru
        _
      %p1739 = scmp.le.s32.totalorder 2, %s17
      // Predicated region
      $region57: #{inception_c_forward.11} parent=5 // pred_check
        %p1740 = pneg %p1739
      $region58: #{inception_c_forward.11} parent=5 // pred_check_branch
        %1742 = sbr.rel (%p1740) target = $region60
      $region59: #{inception_c_forward.11} parent=5 // pred_region
        %s1743 = ssub.s32 %s17, 2
        // Predicated region
        $region61: #{inception_c_forward.11} parent=59 // pred_check
          %p1744 = pneg %p234
        $region62: #{inception_c_forward.11} parent=59 // pred_check_branch
          %1746 = sbr.rel (%p1744) target = $region64
        $region63: #{inception_c_forward.11} parent=59 // pred_region
          %s1747 = sand.u32 %s219, 1
          %s1748 = scalar_lea.sflag [#allocation3], %s1747
          %s1749 = sand.u32 %s219, 1
          %s1750 = smul.addr %s1749, 384
          %s1751 = scalar_lea.vmem [#allocation2], %s1750
          %1752 = dma.done %s1748, 6144
        $region64: #{inception_c_forward.11} parent=59 // pred_fallthru
          _
      $region60: #{inception_c_forward.11} parent=5 // pred_fallthru
        _
    $region6: #{inception_c_forward.11} parent=1 // loop_footer
      %s21 = sadd.s32 1, %s17
    $region7: #{inception_c_forward.11} parent=1 // loop_footer_branch
      %16 = sbr.rel target = $region3
    $region8: #{inception_c_forward.11} parent=1 // loop_exit
      _
    %1753 = vsyncpa [#allocation3], 1
    %s1754 = scalar_lea.sflag [#allocation3], 1
    %1755 = vsyncpa %s1754, 1

</llo_original>
